<compile_context>
chip_gen: v7x
topology: tpu7x:2x2x1
jax: 0.10.0
libtpu: 0.0.40
codegen_flags: <defaults>
</compile_context>

<pallas_src>
import functools

import jax
import jax.numpy as jnp
import numpy as np
from jax.experimental import pallas as pl

BN_EPS = 1e-5
NEG_BIG = -9e15


def _leaky(x, slope):
    return jnp.where(x >= 0, x, slope * x)


def _elu(x):
    return jnp.where(x > 0, x, jnp.exp(x) - 1.0)


# ---------------------------------------------------------------------------
# The single fused Pallas kernel (no grid: everything is one VMEM-resident block)
# ---------------------------------------------------------------------------
def _af2gnn1_fused_kernel(
    # pixel / graph data
    x_pix_ref, q_ref, inv_col_ref, adj_ref,
    # pooling-BN and residual-entry-BN affines
    pool_aff_ref, res1_aff_ref,
    # Res_GCN: 4 GCN convolutions, each (weight, input affine, output affine)
    g1w1_ref, g1i1_ref, g1o1_ref,
    g1w2_ref, g1i2_ref, g1o2_ref,
    g2w1_ref, g2i1_ref, g2o1_ref,
    g2w2_ref, g2i2_ref, g2o2_ref,
    # GAT: per-head W / attention vectors, output layer W / a, fused BN affine
    gat_wh_ref, gat_ah_ref, gat_wo_ref, gat_ao_ref, gat_post_ref,
    # combine coefficients (min/max/avg fusion + 1x1 conv + BN folded to 5 rows)
    coef_ref,
    # output (HW, C)
    out_ref,
    *, nheads, comb_slope):

    adj = adj_ref[...]                                            # (N, N)
    q = q_ref[...]                                                # (HW, N)

    def affine(x, aff_ref):
        aff = aff_ref[...]                                        # (2, C): [scale; shift]
        return x * aff[0:1, :] + aff[1:2, :]

    # --- superpixel pooling: (Q^T @ x_pix) / colsum(Q), fused with first BN ---
    # Contract the pixel dim of both operands (no transposed Q materialised).
    pooled = jax.lax.dot_general(
        q, x_pix_ref[...], (((0,), (0,)), ((), ())),
        preferred_element_type=jnp.float32)                       # (N, Cin)
    x_bn = affine(pooled * inv_col_ref[...], pool_aff_ref)        # (N, Cin)

    # ------------------------------ Res_GCN ------------------------------
    def gcn_conv(x, w_ref, iaff_ref, oaff_ref):
        xn = affine(x, iaff_ref)                                  # fused preceding BN
        s = jnp.dot(xn, w_ref[...], preferred_element_type=jnp.float32)
        o = jnp.dot(adj, s, preferred_element_type=jnp.float32)
        return _leaky(affine(o, oaff_ref), 0.01)                  # fused bias/BN + leaky

    x_res = affine(x_bn, res1_aff_ref)
    h1 = gcn_conv(x_res, g1w1_ref, g1i1_ref, g1o1_ref)
    y = gcn_conv(h1, g1w2_ref, g1i2_ref, g1o2_ref)
    x2 = x_res + y                                                # residual add
    h2 = gcn_conv(x2, g2w1_ref, g2i1_ref, g2o1_ref)
    gcn_x = gcn_conv(h2, g2w2_ref, g2i2_ref, g2o2_ref)            # (N, C)

    # -------------------------------- GAT --------------------------------
    def gat_attention(wh, a1, a2):
        # e[i, j] = leakyrelu_0.2(Wh[i].a1 + Wh[j].a2) — never build (N,N,2F).
        f1 = jnp.sum(wh * a1, axis=1, keepdims=True)              # (N, 1) column (VPU)
        f2 = jax.lax.dot_general(a2, wh, (((1,), (1,)), ((), ())),
                                 preferred_element_type=jnp.float32)  # (1, N) row
        e = _leaky(f1 + f2, 0.2)
        masked = jnp.where(adj > 0, e, jnp.float32(NEG_BIG))
        m = jnp.max(masked, axis=1, keepdims=True)
        p = jnp.exp(masked - m)
        inv = pl.reciprocal(jnp.sum(p, axis=1, keepdims=True), approx=True)
        return jnp.dot(p * inv, wh, preferred_element_type=jnp.float32)

    # Heads are statically unrolled.  Each head's ELU output is multiplied by
    # its slice of W_out and accumulated, so the concatenated (N, nheads*nhid)
    # tensor is never materialised (wh_out == h_cat @ W_out).
    wh_out = None
    for i in range(nheads):
        wh = jnp.dot(x_bn, gat_wh_ref[i],
                     preferred_element_type=jnp.float32)          # (N, nhid)
        a_i = gat_ah_ref[i]                                       # (2, nhid)
        hp = _elu(gat_attention(wh, a_i[0:1, :], a_i[1:2, :]))    # (N, nhid)
        contrib = jnp.dot(hp, gat_wo_ref[i],
                          preferred_element_type=jnp.float32)     # (N, C)
        wh_out = contrib if wh_out is None else wh_out + contrib

    a_out = gat_ao_ref[...]                                       # (2, C)
    hp_out = _elu(gat_attention(wh_out, a_out[0:1, :], a_out[1:2, :]))
    gat_x = _leaky(affine(hp_out, gat_post_ref), 0.01)            # (N, C)

    # ----- min/max/avg fusion + 1x1 conv + BN + LeakyReLU + Q projection -----
    c = coef_ref[...]                                             # (5, C)
    mn = jnp.minimum(gcn_x, gat_x)
    mx = jnp.maximum(gcn_x, gat_x)
    xc = (mn * c[0:1, :] + mx * c[1:2, :] + gcn_x * c[2:3, :]
          + gat_x * c[3:4, :] + c[4:5, :])
    xc = _leaky(xc, comb_slope)
    out_ref[...] = jnp.dot(q, xc,
                           preferred_element_type=jnp.float32).astype(out_ref.dtype)


# ---------------------------------------------------------------------------
# Forward pass (eval mode): fold params into affines, launch the fused kernel
# ---------------------------------------------------------------------------
def _bn_affine(bn):
    scale = bn['gamma'] / jnp.sqrt(bn['var'] + BN_EPS)
    shift = bn['beta'] - bn['mean'] * scale
    return scale, shift


def _aff(scale, shift):
    return jnp.stack([scale, shift], axis=0).astype(jnp.float32)


def af2gnn1_forward(x_img, adj, params, *, alpha):
    hh, ww, bands = x_img.shape
    x_pix = x_img.reshape(hh * ww, bands).astype(jnp.float32)
    q = params['Q'].astype(jnp.float32)

    # ---- parameter-only folding (tiny vectors; the heavy work is one kernel) ----
    inv_col = (1.0 / jnp.sum(q, axis=0))[:, None]                 # (N, 1)
    pool_aff = _aff(*_bn_affine(params['bn']))

    res = params['res']
    res1_aff = _aff(*_bn_affine(res['bn1']))
    g1, g2 = res['gcn1'], res['gcn2']
    s2, t2 = _bn_affine(res['bn2'])
    s3, t3 = _bn_affine(res['bn3'])
    g1i1 = _aff(*_bn_affine(g1['bn']))
    g1o1 = _aff(jnp.ones_like(g1['gc1_b']), g1['gc1_b'])
    g1i2 = _aff(*_bn_affine(g1['bn1']))
    g1o2 = _aff(s2, g1['gc2_b'] * s2 + t2)
    g2i1 = _aff(*_bn_affine(g2['bn']))
    g2o1 = _aff(jnp.ones_like(g2['gc1_b']), g2['gc1_b'])
    g2i2 = _aff(*_bn_affine(g2['bn1']))
    g2o2 = _aff(s3, g2['gc2_b'] * s3 + t3)

    gat = params['gat']
    nheads, _, nhid = gat['heads_w'].shape
    out_c = gat['out_w'].shape[1]
    gat_wh = gat['heads_w'].astype(jnp.float32)                   # (nheads, Cin, nhid)
    gat_ah = gat['heads_a'].reshape(nheads, 2, nhid).astype(jnp.float32)
    gat_wo = gat['out_w'].reshape(nheads, nhid, out_c).astype(jnp.float32)
    gat_ao = gat['out_a'].reshape(2, out_c).astype(jnp.float32)
    gat_post = _aff(*_bn_affine(gat['bn1']))

    c = params['conv_w'].astype(jnp.float32)                      # (3,)
    cb = params['conv_b'].astype(jnp.float32)                     # ()
    w0, w1 = params['W'][0], params['W'][1]
    b0, b1 = params['b'][0], params['b'][1]
    s1, t1 = _bn_affine(params['bn1'])
    csum = c[0] + c[1] + c[2]
    coef = jnp.stack([
        c[0] * s1,
        c[1] * s1,
        (c[2] * w0 + csum) * s1,
        (c[2] * w1 + csum) * s1,
        (c[2] * (b0 + b1) + cb) * s1 + t1,
    ], axis=0).astype(jnp.float32)                                # (5, C)

    kern = functools.partial(_af2gnn1_fused_kernel,
                             nheads=nheads, comb_slope=alpha)
    return pl.pallas_call(
        kern,
        out_shape=jax.ShapeDtypeStruct((hh * ww, out_c), jnp.float32),
    )(x_pix, q, inv_col.astype(jnp.float32), adj.astype(jnp.float32),
      pool_aff, res1_aff,
      g1['gc1_w'].astype(jnp.float32), g1i1, g1o1,
      g1['gc2_w'].astype(jnp.float32), g1i2, g1o2,
      g2['gc1_w'].astype(jnp.float32), g2i1, g2o1,
      g2['gc2_w'].astype(jnp.float32), g2i2, g2o2,
      gat_wh, gat_ah, gat_wo, gat_ao, gat_post,
      coef)


# ---------------------------------------------------------------------------
# Pure-JAX reference (mirrors the PyTorch module in eval mode)
# ---------------------------------------------------------------------------
def _bn_ref(x, bn):
    return (x - bn['mean']) / jnp.sqrt(bn['var'] + BN_EPS) * bn['gamma'] + bn['beta']


def _gcn_ref(x, adj, gp):
    x = _bn_ref(x, gp['bn'])
    x = adj @ (x @ gp['gc1_w']) + gp['gc1_b']
    x = _leaky(x, 0.01)
    x = _bn_ref(x, gp['bn1'])
    x = adj @ (x @ gp['gc2_w']) + gp['gc2_b']
    return x


def _res_gcn_ref(x, adj, rp):
    x = _bn_ref(x, rp['bn1'])
    y = _leaky(_bn_ref(_gcn_ref(x, adj, rp['gcn1']), rp['bn2']), 0.01)
    x = x + y
    return _leaky(_bn_ref(_gcn_ref(x, adj, rp['gcn2']), rp['bn3']), 0.01)


def _gat_layer_ref(h, adj, w, a, neg_slope, concat):
    wh = h @ w
    f = wh.shape[1]
    f1 = wh @ a[:f].reshape(f, 1)
    f2 = wh @ a[f:].reshape(f, 1)
    e = _leaky(f1 + f2.T, neg_slope)
    att = jnp.where(adj > 0, e, -9e15)
    att = jax.nn.softmax(att, axis=1)
    hp = att @ wh
    return _elu(hp) if concat else hp


def _gat_ref(x, adj, gp):
    nheads = gp['heads_w'].shape[0]
    outs = [_gat_layer_ref(x, adj, gp['heads_w'][i], gp['heads_a'][i], 0.2, True)
            for i in range(nheads)]
    h = jnp.concatenate(outs, axis=1)
    o = _gat_layer_ref(h, adj, gp['out_w'], gp['out_a'], 0.2, False)
    o = _elu(o)
    o = _bn_ref(o, gp['bn1'])
    return _leaky(o, 0.01)


def af2gnn1_reference(x_img, adj, params, *, alpha):
    hh, ww, bands = x_img.shape
    x = x_img.reshape(hh * ww, bands)
    q = params['Q']
    norm_q = q / jnp.sum(q, axis=0, keepdims=True)
    x = _bn_ref(norm_q.T @ x, params['bn'])
    gcn_x = _res_gcn_ref(x, adj, params['res'])
    gat_x = _gat_ref(x, adj, params['gat'])
    min_x = jnp.where(gcn_x > gat_x, gat_x, gcn_x)
    max_x = jnp.where(gcn_x > gat_x, gcn_x, gat_x)
    avg_x = (gcn_x * params['W'][0] + params['b'][0]) + \
            (gat_x * params['W'][1] + params['b'][1])
    stack = jnp.stack([min_x, max_x, avg_x], axis=0)        # (3, N, C)
    inp = stack + gat_x + gcn_x                             # broadcast like torch
    conv = jnp.tensordot(params['conv_w'], inp, axes=([0], [0])) + params['conv_b']
    xx = _leaky(_bn_ref(conv, params['bn1']), alpha)
    return q @ xx


# ---------------------------------------------------------------------------
# Deterministic parameter construction
# ---------------------------------------------------------------------------
def init_params(key, *, in_channels, nhid, out_channels, nheads, filter_num,
                hw, n_nodes):
    keys = iter(jax.random.split(key, 64))

    def nrm(shape, scale):
        return jax.random.normal(next(keys), shape, jnp.float32) * scale

    def bn(n):
        return dict(
            gamma=jax.random.uniform(next(keys), (n,), jnp.float32, 0.5, 1.5),
            beta=nrm((n,), 0.1),
            mean=nrm((n,), 0.1),
            var=jax.random.uniform(next(keys), (n,), jnp.float32, 0.5, 1.5),
        )

    def gcn_block(cin, chid, cout):
        return dict(
            bn=bn(cin), bn1=bn(chid),
            gc1_w=nrm((cin, chid), 1.0 / np.sqrt(cin)),
            gc1_b=nrm((chid,), 0.1),
            gc2_w=nrm((chid, cout), 1.0 / np.sqrt(chid)),
            gc2_b=nrm((cout,), 0.1),
        )

    return dict(
        conv_w=nrm((3,), 0.5),
        conv_b=nrm((), 0.1),
        W=nrm((filter_num, out_channels), 0.3),
        b=nrm((filter_num, out_channels), 0.1),
        Q=jax.random.uniform(next(keys), (hw, n_nodes), jnp.float32, 0.05, 1.0),
        bn=bn(in_channels),
        bn1=bn(out_channels),
        res=dict(
            bn1=bn(in_channels), bn2=bn(in_channels), bn3=bn(out_channels),
            gcn1=gcn_block(in_channels, nhid, in_channels),
            gcn2=gcn_block(in_channels, nhid, out_channels),
        ),
        gat=dict(
            heads_w=nrm((nheads, in_channels, nhid), 1.0 / np.sqrt(in_channels)),
            heads_a=nrm((nheads, 2 * nhid), 0.3),
            out_w=nrm((nheads * nhid, out_channels), 1.0 / np.sqrt(nheads * nhid)),
            out_a=nrm((2 * out_channels,), 0.3),
            bn1=bn(out_channels),
        ),
    )


if __name__ == "__main__":
    key = jax.random.PRNGKey(0)
    k_x, k_adj, k_par = jax.random.split(key, 3)

    # Small shapes implied by the forward: image (H, W, bands), N superpixels,
    # Q:(H*W, N) pixel->superpixel assignment, graph adjacency over superpixels.
    H_IMG, W_IMG = 16, 16
    IN_CHANNELS = 16          # spectral bands
    NHID = 16
    OUT_CHANNELS = 16
    NHEADS = 2
    FILTER_NUM = 2
    N_NODES = 32              # superpixels
    ALPHA = 0.2

    x_img = jax.random.normal(k_x, (H_IMG, W_IMG, IN_CHANNELS), jnp.float32)

    a_rand = jax.random.uniform(k_adj, (N_NODES, N_NODES), jnp.float32)
    adj = ((a_rand + a_rand.T) > 1.0).astype(jnp.float32)
    adj = jnp.maximum(adj, jnp.eye(N_NODES, dtype=jnp.float32))   # self-loops

    params = init_params(k_par, in_channels=IN_CHANNELS, nhid=NHID,
                         out_channels=OUT_CHANNELS, nheads=NHEADS,
                         filter_num=FILTER_NUM, hw=H_IMG * W_IMG,
                         n_nodes=N_NODES)

    fwd = jax.jit(functools.partial(af2gnn1_forward, alpha=ALPHA))
    out = jax.block_until_ready(fwd(x_img, adj, params))

    ref = jax.block_until_ready(
        af2gnn1_reference(x_img, adj, params, alpha=ALPHA))
    np.testing.assert_allclose(np.asarray(out), np.asarray(ref),
                               rtol=2e-3, atol=2e-3)

    print("KERNEL_OK")
</pallas_src>

<mosaic_0001>
module attributes {stable_mosaic.version = 11 : i64} {
  func.func @_af2gnn1_fused_kernel(%arg0: memref<256x16xf32, #tpu.memory_space<vmem>>, %arg1: memref<256x32xf32, #tpu.memory_space<vmem>>, %arg2: memref<32x1xf32, #tpu.memory_space<vmem>>, %arg3: memref<32x32xf32, #tpu.memory_space<vmem>>, %arg4: memref<2x16xf32, #tpu.memory_space<vmem>>, %arg5: memref<2x16xf32, #tpu.memory_space<vmem>>, %arg6: memref<16x16xf32, #tpu.memory_space<vmem>>, %arg7: memref<2x16xf32, #tpu.memory_space<vmem>>, %arg8: memref<2x16xf32, #tpu.memory_space<vmem>>, %arg9: memref<16x16xf32, #tpu.memory_space<vmem>>, %arg10: memref<2x16xf32, #tpu.memory_space<vmem>>, %arg11: memref<2x16xf32, #tpu.memory_space<vmem>>, %arg12: memref<16x16xf32, #tpu.memory_space<vmem>>, %arg13: memref<2x16xf32, #tpu.memory_space<vmem>>, %arg14: memref<2x16xf32, #tpu.memory_space<vmem>>, %arg15: memref<16x16xf32, #tpu.memory_space<vmem>>, %arg16: memref<2x16xf32, #tpu.memory_space<vmem>>, %arg17: memref<2x16xf32, #tpu.memory_space<vmem>>, %arg18: memref<2x16x16xf32, #tpu.memory_space<vmem>>, %arg19: memref<2x2x16xf32, #tpu.memory_space<vmem>>, %arg20: memref<2x16x16xf32, #tpu.memory_space<vmem>>, %arg21: memref<2x16xf32, #tpu.memory_space<vmem>>, %arg22: memref<2x16xf32, #tpu.memory_space<vmem>>, %arg23: memref<5x16xf32, #tpu.memory_space<vmem>>, %arg24: memref<256x16xf32, #tpu.memory_space<vmem>>) attributes {dimension_semantics = [], scalar_prefetch = 0 : i64, scratch_operands = 0 : i64, tpu.core_type = #tpu.core_type<tc>} {
    %c0 = arith.constant 0 : index
    %c0_0 = arith.constant 0 : index
    %0 = vector.load %arg3[%c0, %c0_0] : memref<32x32xf32, #tpu.memory_space<vmem>>, vector<32x32xf32>
    %c0_1 = arith.constant 0 : index
    %c0_2 = arith.constant 0 : index
    %1 = vector.load %arg1[%c0_1, %c0_2] : memref<256x32xf32, #tpu.memory_space<vmem>>, vector<256x32xf32>
    %c0_3 = arith.constant 0 : index
    %c0_4 = arith.constant 0 : index
    %2 = vector.load %arg0[%c0_3, %c0_4] : memref<256x16xf32, #tpu.memory_space<vmem>>, vector<256x16xf32>
    %cst = arith.constant dense<0.000000e+00> : vector<32x16xf32>
    %3 = tpu.matmul %1, %2, %cst {dimension_numbers = #tpu.dot_dimension_numbers<[0], [0], [1], [1], [0, 1, 1, 1], [], []>} : vector<256x32xf32>, vector<256x16xf32>, vector<32x16xf32> -> vector<32x16xf32>
    %c0_5 = arith.constant 0 : index
    %c0_6 = arith.constant 0 : index
    %4 = vector.load %arg2[%c0_5, %c0_6] : memref<32x1xf32, #tpu.memory_space<vmem>>, vector<32x1xf32>
    %5 = vector.broadcast %4 : vector<32x1xf32> to vector<32x16xf32>
    %6 = arith.mulf %3, %5 : vector<32x16xf32>
    %c0_7 = arith.constant 0 : index
    %c0_8 = arith.constant 0 : index
    %7 = vector.load %arg4[%c0_7, %c0_8] : memref<2x16xf32, #tpu.memory_space<vmem>>, vector<2x16xf32>
    %8 = vector.extract_strided_slice %7 {offsets = [0, 0], sizes = [1, 16], strides = [1, 1]} : vector<2x16xf32> to vector<1x16xf32>
    %9 = vector.broadcast %8 : vector<1x16xf32> to vector<32x16xf32>
    %10 = arith.mulf %6, %9 : vector<32x16xf32>
    %11 = vector.extract_strided_slice %7 {offsets = [1, 0], sizes = [1, 16], strides = [1, 1]} : vector<2x16xf32> to vector<1x16xf32>
    %12 = vector.broadcast %11 : vector<1x16xf32> to vector<32x16xf32>
    %13 = arith.addf %10, %12 : vector<32x16xf32>
    %c0_9 = arith.constant 0 : index
    %c0_10 = arith.constant 0 : index
    %14 = vector.load %arg5[%c0_9, %c0_10] : memref<2x16xf32, #tpu.memory_space<vmem>>, vector<2x16xf32>
    %15 = vector.extract_strided_slice %14 {offsets = [0, 0], sizes = [1, 16], strides = [1, 1]} : vector<2x16xf32> to vector<1x16xf32>
    %16 = vector.broadcast %15 : vector<1x16xf32> to vector<32x16xf32>
    %17 = arith.mulf %13, %16 : vector<32x16xf32>
    %18 = vector.extract_strided_slice %14 {offsets = [1, 0], sizes = [1, 16], strides = [1, 1]} : vector<2x16xf32> to vector<1x16xf32>
    %19 = vector.broadcast %18 : vector<1x16xf32> to vector<32x16xf32>
    %20 = arith.addf %17, %19 : vector<32x16xf32>
    %c0_11 = arith.constant 0 : index
    %c0_12 = arith.constant 0 : index
    %21 = vector.load %arg7[%c0_11, %c0_12] : memref<2x16xf32, #tpu.memory_space<vmem>>, vector<2x16xf32>
    %22 = vector.extract_strided_slice %21 {offsets = [0, 0], sizes = [1, 16], strides = [1, 1]} : vector<2x16xf32> to vector<1x16xf32>
    %23 = vector.broadcast %22 : vector<1x16xf32> to vector<32x16xf32>
    %24 = arith.mulf %20, %23 : vector<32x16xf32>
    %25 = vector.extract_strided_slice %21 {offsets = [1, 0], sizes = [1, 16], strides = [1, 1]} : vector<2x16xf32> to vector<1x16xf32>
    %26 = vector.broadcast %25 : vector<1x16xf32> to vector<32x16xf32>
    %27 = arith.addf %24, %26 : vector<32x16xf32>
    %c0_13 = arith.constant 0 : index
    %c0_14 = arith.constant 0 : index
    %28 = vector.load %arg6[%c0_13, %c0_14] : memref<16x16xf32, #tpu.memory_space<vmem>>, vector<16x16xf32>
    %cst_15 = arith.constant dense<0.000000e+00> : vector<32x16xf32>
    %29 = tpu.matmul %27, %28, %cst_15 {dimension_numbers = #tpu.dot_dimension_numbers<[1], [0], [0], [1], [0, 0, 1, 1], [], []>} : vector<32x16xf32>, vector<16x16xf32>, vector<32x16xf32> -> vector<32x16xf32>
    %cst_16 = arith.constant dense<0.000000e+00> : vector<32x16xf32>
    %30 = tpu.matmul %0, %29, %cst_16 {dimension_numbers = #tpu.dot_dimension_numbers<[1], [0], [0], [1], [0, 0, 1, 1], [], []>} : vector<32x32xf32>, vector<32x16xf32>, vector<32x16xf32> -> vector<32x16xf32>
    %c0_17 = arith.constant 0 : index
    %c0_18 = arith.constant 0 : index
    %31 = vector.load %arg8[%c0_17, %c0_18] : memref<2x16xf32, #tpu.memory_space<vmem>>, vector<2x16xf32>
    %32 = vector.extract_strided_slice %31 {offsets = [0, 0], sizes = [1, 16], strides = [1, 1]} : vector<2x16xf32> to vector<1x16xf32>
    %33 = vector.broadcast %32 : vector<1x16xf32> to vector<32x16xf32>
    %34 = arith.mulf %30, %33 : vector<32x16xf32>
    %35 = vector.extract_strided_slice %31 {offsets = [1, 0], sizes = [1, 16], strides = [1, 1]} : vector<2x16xf32> to vector<1x16xf32>
    %36 = vector.broadcast %35 : vector<1x16xf32> to vector<32x16xf32>
    %37 = arith.addf %34, %36 : vector<32x16xf32>
    %cst_19 = arith.constant 0.000000e+00 : f32
    %38 = vector.broadcast %cst_19 : f32 to vector<32x16xf32>
    %39 = arith.cmpf oge, %37, %38 : vector<32x16xf32>
    %cst_20 = arith.constant 0.00999999977 : f32
    %40 = vector.broadcast %cst_20 : f32 to vector<32x16xf32>
    %41 = arith.mulf %40, %37 : vector<32x16xf32>
    %42 = arith.select %39, %37, %41 : vector<32x16xi1>, vector<32x16xf32>
    %c0_21 = arith.constant 0 : index
    %c0_22 = arith.constant 0 : index
    %43 = vector.load %arg10[%c0_21, %c0_22] : memref<2x16xf32, #tpu.memory_space<vmem>>, vector<2x16xf32>
    %44 = vector.extract_strided_slice %43 {offsets = [0, 0], sizes = [1, 16], strides = [1, 1]} : vector<2x16xf32> to vector<1x16xf32>
    %45 = vector.broadcast %44 : vector<1x16xf32> to vector<32x16xf32>
    %46 = arith.mulf %42, %45 : vector<32x16xf32>
    %47 = vector.extract_strided_slice %43 {offsets = [1, 0], sizes = [1, 16], strides = [1, 1]} : vector<2x16xf32> to vector<1x16xf32>
    %48 = vector.broadcast %47 : vector<1x16xf32> to vector<32x16xf32>
    %49 = arith.addf %46, %48 : vector<32x16xf32>
    %c0_23 = arith.constant 0 : index
    %c0_24 = arith.constant 0 : index
    %50 = vector.load %arg9[%c0_23, %c0_24] : memref<16x16xf32, #tpu.memory_space<vmem>>, vector<16x16xf32>
    %cst_25 = arith.constant dense<0.000000e+00> : vector<32x16xf32>
    %51 = tpu.matmul %49, %50, %cst_25 {dimension_numbers = #tpu.dot_dimension_numbers<[1], [0], [0], [1], [0, 0, 1, 1], [], []>} : vector<32x16xf32>, vector<16x16xf32>, vector<32x16xf32> -> vector<32x16xf32>
    %cst_26 = arith.constant dense<0.000000e+00> : vector<32x16xf32>
    %52 = tpu.matmul %0, %51, %cst_26 {dimension_numbers = #tpu.dot_dimension_numbers<[1], [0], [0], [1], [0, 0, 1, 1], [], []>} : vector<32x32xf32>, vector<32x16xf32>, vector<32x16xf32> -> vector<32x16xf32>
    %c0_27 = arith.constant 0 : index
    %c0_28 = arith.constant 0 : index
    %53 = vector.load %arg11[%c0_27, %c0_28] : memref<2x16xf32, #tpu.memory_space<vmem>>, vector<2x16xf32>
    %54 = vector.extract_strided_slice %53 {offsets = [0, 0], sizes = [1, 16], strides = [1, 1]} : vector<2x16xf32> to vector<1x16xf32>
    %55 = vector.broadcast %54 : vector<1x16xf32> to vector<32x16xf32>
    %56 = arith.mulf %52, %55 : vector<32x16xf32>
    %57 = vector.extract_strided_slice %53 {offsets = [1, 0], sizes = [1, 16], strides = [1, 1]} : vector<2x16xf32> to vector<1x16xf32>
    %58 = vector.broadcast %57 : vector<1x16xf32> to vector<32x16xf32>
    %59 = arith.addf %56, %58 : vector<32x16xf32>
    %cst_29 = arith.constant 0.000000e+00 : f32
    %60 = vector.broadcast %cst_29 : f32 to vector<32x16xf32>
    %61 = arith.cmpf oge, %59, %60 : vector<32x16xf32>
    %cst_30 = arith.constant 0.00999999977 : f32
    %62 = vector.broadcast %cst_30 : f32 to vector<32x16xf32>
    %63 = arith.mulf %62, %59 : vector<32x16xf32>
    %64 = arith.select %61, %59, %63 : vector<32x16xi1>, vector<32x16xf32>
    %65 = arith.addf %20, %64 : vector<32x16xf32>
    %c0_31 = arith.constant 0 : index
    %c0_32 = arith.constant 0 : index
    %66 = vector.load %arg13[%c0_31, %c0_32] : memref<2x16xf32, #tpu.memory_space<vmem>>, vector<2x16xf32>
    %67 = vector.extract_strided_slice %66 {offsets = [0, 0], sizes = [1, 16], strides = [1, 1]} : vector<2x16xf32> to vector<1x16xf32>
    %68 = vector.broadcast %67 : vector<1x16xf32> to vector<32x16xf32>
    %69 = arith.mulf %65, %68 : vector<32x16xf32>
    %70 = vector.extract_strided_slice %66 {offsets = [1, 0], sizes = [1, 16], strides = [1, 1]} : vector<2x16xf32> to vector<1x16xf32>
    %71 = vector.broadcast %70 : vector<1x16xf32> to vector<32x16xf32>
    %72 = arith.addf %69, %71 : vector<32x16xf32>
    %c0_33 = arith.constant 0 : index
    %c0_34 = arith.constant 0 : index
    %73 = vector.load %arg12[%c0_33, %c0_34] : memref<16x16xf32, #tpu.memory_space<vmem>>, vector<16x16xf32>
    %cst_35 = arith.constant dense<0.000000e+00> : vector<32x16xf32>
    %74 = tpu.matmul %72, %73, %cst_35 {dimension_numbers = #tpu.dot_dimension_numbers<[1], [0], [0], [1], [0, 0, 1, 1], [], []>} : vector<32x16xf32>, vector<16x16xf32>, vector<32x16xf32> -> vector<32x16xf32>
    %cst_36 = arith.constant dense<0.000000e+00> : vector<32x16xf32>
    %75 = tpu.matmul %0, %74, %cst_36 {dimension_numbers = #tpu.dot_dimension_numbers<[1], [0], [0], [1], [0, 0, 1, 1], [], []>} : vector<32x32xf32>, vector<32x16xf32>, vector<32x16xf32> -> vector<32x16xf32>
    %c0_37 = arith.constant 0 : index
    %c0_38 = arith.constant 0 : index
    %76 = vector.load %arg14[%c0_37, %c0_38] : memref<2x16xf32, #tpu.memory_space<vmem>>, vector<2x16xf32>
    %77 = vector.extract_strided_slice %76 {offsets = [0, 0], sizes = [1, 16], strides = [1, 1]} : vector<2x16xf32> to vector<1x16xf32>
    %78 = vector.broadcast %77 : vector<1x16xf32> to vector<32x16xf32>
    %79 = arith.mulf %75, %78 : vector<32x16xf32>
    %80 = vector.extract_strided_slice %76 {offsets = [1, 0], sizes = [1, 16], strides = [1, 1]} : vector<2x16xf32> to vector<1x16xf32>
    %81 = vector.broadcast %80 : vector<1x16xf32> to vector<32x16xf32>
    %82 = arith.addf %79, %81 : vector<32x16xf32>
    %cst_39 = arith.constant 0.000000e+00 : f32
    %83 = vector.broadcast %cst_39 : f32 to vector<32x16xf32>
    %84 = arith.cmpf oge, %82, %83 : vector<32x16xf32>
    %cst_40 = arith.constant 0.00999999977 : f32
    %85 = vector.broadcast %cst_40 : f32 to vector<32x16xf32>
    %86 = arith.mulf %85, %82 : vector<32x16xf32>
    %87 = arith.select %84, %82, %86 : vector<32x16xi1>, vector<32x16xf32>
    %c0_41 = arith.constant 0 : index
    %c0_42 = arith.constant 0 : index
    %88 = vector.load %arg16[%c0_41, %c0_42] : memref<2x16xf32, #tpu.memory_space<vmem>>, vector<2x16xf32>
    %89 = vector.extract_strided_slice %88 {offsets = [0, 0], sizes = [1, 16], strides = [1, 1]} : vector<2x16xf32> to vector<1x16xf32>
    %90 = vector.broadcast %89 : vector<1x16xf32> to vector<32x16xf32>
    %91 = arith.mulf %87, %90 : vector<32x16xf32>
    %92 = vector.extract_strided_slice %88 {offsets = [1, 0], sizes = [1, 16], strides = [1, 1]} : vector<2x16xf32> to vector<1x16xf32>
    %93 = vector.broadcast %92 : vector<1x16xf32> to vector<32x16xf32>
    %94 = arith.addf %91, %93 : vector<32x16xf32>
    %c0_43 = arith.constant 0 : index
    %c0_44 = arith.constant 0 : index
    %95 = vector.load %arg15[%c0_43, %c0_44] : memref<16x16xf32, #tpu.memory_space<vmem>>, vector<16x16xf32>
    %cst_45 = arith.constant dense<0.000000e+00> : vector<32x16xf32>
    %96 = tpu.matmul %94, %95, %cst_45 {dimension_numbers = #tpu.dot_dimension_numbers<[1], [0], [0], [1], [0, 0, 1, 1], [], []>} : vector<32x16xf32>, vector<16x16xf32>, vector<32x16xf32> -> vector<32x16xf32>
    %cst_46 = arith.constant dense<0.000000e+00> : vector<32x16xf32>
    %97 = tpu.matmul %0, %96, %cst_46 {dimension_numbers = #tpu.dot_dimension_numbers<[1], [0], [0], [1], [0, 0, 1, 1], [], []>} : vector<32x32xf32>, vector<32x16xf32>, vector<32x16xf32> -> vector<32x16xf32>
    %c0_47 = arith.constant 0 : index
    %c0_48 = arith.constant 0 : index
    %98 = vector.load %arg17[%c0_47, %c0_48] : memref<2x16xf32, #tpu.memory_space<vmem>>, vector<2x16xf32>
    %99 = vector.extract_strided_slice %98 {offsets = [0, 0], sizes = [1, 16], strides = [1, 1]} : vector<2x16xf32> to vector<1x16xf32>
    %100 = vector.broadcast %99 : vector<1x16xf32> to vector<32x16xf32>
    %101 = arith.mulf %97, %100 : vector<32x16xf32>
    %102 = vector.extract_strided_slice %98 {offsets = [1, 0], sizes = [1, 16], strides = [1, 1]} : vector<2x16xf32> to vector<1x16xf32>
    %103 = vector.broadcast %102 : vector<1x16xf32> to vector<32x16xf32>
    %104 = arith.addf %101, %103 : vector<32x16xf32>
    %cst_49 = arith.constant 0.000000e+00 : f32
    %105 = vector.broadcast %cst_49 : f32 to vector<32x16xf32>
    %106 = arith.cmpf oge, %104, %105 : vector<32x16xf32>
    %cst_50 = arith.constant 0.00999999977 : f32
    %107 = vector.broadcast %cst_50 : f32 to vector<32x16xf32>
    %108 = arith.mulf %107, %104 : vector<32x16xf32>
    %109 = arith.select %106, %104, %108 : vector<32x16xi1>, vector<32x16xf32>
    %c0_51 = arith.constant 0 : index
    %c0_52 = arith.constant 0 : index
    %c0_53 = arith.constant 0 : index
    %110 = vector.load %arg18[%c0_51, %c0_52, %c0_53] : memref<2x16x16xf32, #tpu.memory_space<vmem>>, vector<1x16x16xf32>
    %111 = vector.shape_cast %110 : vector<1x16x16xf32> to vector<16x16xf32>
    %cst_54 = arith.constant dense<0.000000e+00> : vector<32x16xf32>
    %112 = tpu.matmul %13, %111, %cst_54 {dimension_numbers = #tpu.dot_dimension_numbers<[1], [0], [0], [1], [0, 0, 1, 1], [], []>} : vector<32x16xf32>, vector<16x16xf32>, vector<32x16xf32> -> vector<32x16xf32>
    %c0_55 = arith.constant 0 : index
    %c0_56 = arith.constant 0 : index
    %c0_57 = arith.constant 0 : index
    %113 = vector.load %arg19[%c0_55, %c0_56, %c0_57] : memref<2x2x16xf32, #tpu.memory_space<vmem>>, vector<1x2x16xf32>
    %114 = vector.shape_cast %113 : vector<1x2x16xf32> to vector<2x16xf32>
    %115 = vector.extract_strided_slice %114 {offsets = [0, 0], sizes = [1, 16], strides = [1, 1]} : vector<2x16xf32> to vector<1x16xf32>
    %116 = vector.extract_strided_slice %114 {offsets = [1, 0], sizes = [1, 16], strides = [1, 1]} : vector<2x16xf32> to vector<1x16xf32>
    %117 = vector.broadcast %115 : vector<1x16xf32> to vector<32x16xf32>
    %118 = arith.mulf %112, %117 : vector<32x16xf32>
    %cst_58 = arith.constant dense<0.000000e+00> : vector<32xf32>
    %119 = vector.multi_reduction <add>, %118, %cst_58 [1] : vector<32x16xf32> to vector<32xf32>
    %120 = vector.shape_cast %119 : vector<32xf32> to vector<32x1xf32>
    %cst_59 = arith.constant dense<0.000000e+00> : vector<1x32xf32>
    %121 = tpu.matmul %116, %112, %cst_59 {dimension_numbers = #tpu.dot_dimension_numbers<[1], [1], [0], [0], [0, 0, 1, 0], [], []>} : vector<1x16xf32>, vector<32x16xf32>, vector<1x32xf32> -> vector<1x32xf32>
    %122 = vector.broadcast %120 : vector<32x1xf32> to vector<32x32xf32>
    %123 = vector.broadcast %121 : vector<1x32xf32> to vector<32x32xf32>
    %124 = arith.addf %122, %123 : vector<32x32xf32>
    %cst_60 = arith.constant 0.000000e+00 : f32
    %125 = vector.broadcast %cst_60 : f32 to vector<32x32xf32>
    %126 = arith.cmpf oge, %124, %125 : vector<32x32xf32>
    %cst_61 = arith.constant 2.000000e-01 : f32
    %127 = vector.broadcast %cst_61 : f32 to vector<32x32xf32>
    %128 = arith.mulf %127, %124 : vector<32x32xf32>
    %129 = arith.select %126, %124, %128 : vector<32x32xi1>, vector<32x32xf32>
    %cst_62 = arith.constant 0.000000e+00 : f32
    %130 = vector.broadcast %cst_62 : f32 to vector<32x32xf32>
    %131 = arith.cmpf ogt, %0, %130 : vector<32x32xf32>
    %cst_63 = arith.constant -9.000000e+15 : f32
    %132 = vector.broadcast %cst_63 : f32 to vector<32x32xf32>
    %133 = arith.select %131, %129, %132 : vector<32x32xi1>, vector<32x32xf32>
    %cst_64 = arith.constant dense<0xFF800000> : vector<32xf32>
    %134 = vector.multi_reduction <maximumf>, %133, %cst_64 [1] : vector<32x32xf32> to vector<32xf32>
    %135 = vector.shape_cast %134 : vector<32xf32> to vector<32x1xf32>
    %136 = vector.broadcast %135 : vector<32x1xf32> to vector<32x32xf32>
    %137 = arith.subf %133, %136 : vector<32x32xf32>
    %138 = math.exp %137 : vector<32x32xf32>
    %cst_65 = arith.constant dense<0.000000e+00> : vector<32xf32>
    %139 = vector.multi_reduction <add>, %138, %cst_65 [1] : vector<32x32xf32> to vector<32xf32>
    %140 = vector.shape_cast %139 : vector<32xf32> to vector<32x1xf32>
    %141 = tpu.reciprocal %140 {approx = true} : vector<32x1xf32> -> vector<32x1xf32>
    %142 = vector.broadcast %141 : vector<32x1xf32> to vector<32x32xf32>
    %143 = arith.mulf %138, %142 : vector<32x32xf32>
    %cst_66 = arith.constant dense<0.000000e+00> : vector<32x16xf32>
    %144 = tpu.matmul %143, %112, %cst_66 {dimension_numbers = #tpu.dot_dimension_numbers<[1], [0], [0], [1], [0, 0, 1, 1], [], []>} : vector<32x32xf32>, vector<32x16xf32>, vector<32x16xf32> -> vector<32x16xf32>
    %cst_67 = arith.constant 0.000000e+00 : f32
    %145 = vector.broadcast %cst_67 : f32 to vector<32x16xf32>
    %146 = arith.cmpf ogt, %144, %145 : vector<32x16xf32>
    %147 = math.exp %144 : vector<32x16xf32>
    %cst_68 = arith.constant 1.000000e+00 : f32
    %148 = vector.broadcast %cst_68 : f32 to vector<32x16xf32>
    %149 = arith.subf %147, %148 : vector<32x16xf32>
    %150 = arith.select %146, %144, %149 : vector<32x16xi1>, vector<32x16xf32>
    %c0_69 = arith.constant 0 : index
    %c0_70 = arith.constant 0 : index
    %c0_71 = arith.constant 0 : index
    %151 = vector.load %arg20[%c0_69, %c0_70, %c0_71] : memref<2x16x16xf32, #tpu.memory_space<vmem>>, vector<1x16x16xf32>
    %152 = vector.shape_cast %151 : vector<1x16x16xf32> to vector<16x16xf32>
    %cst_72 = arith.constant dense<0.000000e+00> : vector<32x16xf32>
    %153 = tpu.matmul %150, %152, %cst_72 {dimension_numbers = #tpu.dot_dimension_numbers<[1], [0], [0], [1], [0, 0, 1, 1], [], []>} : vector<32x16xf32>, vector<16x16xf32>, vector<32x16xf32> -> vector<32x16xf32>
    %c1 = arith.constant 1 : index
    %c0_73 = arith.constant 0 : index
    %c0_74 = arith.constant 0 : index
    %154 = vector.load %arg18[%c1, %c0_73, %c0_74] : memref<2x16x16xf32, #tpu.memory_space<vmem>>, vector<1x16x16xf32>
    %155 = vector.shape_cast %154 : vector<1x16x16xf32> to vector<16x16xf32>
    %cst_75 = arith.constant dense<0.000000e+00> : vector<32x16xf32>
    %156 = tpu.matmul %13, %155, %cst_75 {dimension_numbers = #tpu.dot_dimension_numbers<[1], [0], [0], [1], [0, 0, 1, 1], [], []>} : vector<32x16xf32>, vector<16x16xf32>, vector<32x16xf32> -> vector<32x16xf32>
    %c1_76 = arith.constant 1 : index
    %c0_77 = arith.constant 0 : index
    %c0_78 = arith.constant 0 : index
    %157 = vector.load %arg19[%c1_76, %c0_77, %c0_78] : memref<2x2x16xf32, #tpu.memory_space<vmem>>, vector<1x2x16xf32>
    %158 = vector.shape_cast %157 : vector<1x2x16xf32> to vector<2x16xf32>
    %159 = vector.extract_strided_slice %158 {offsets = [0, 0], sizes = [1, 16], strides = [1, 1]} : vector<2x16xf32> to vector<1x16xf32>
    %160 = vector.extract_strided_slice %158 {offsets = [1, 0], sizes = [1, 16], strides = [1, 1]} : vector<2x16xf32> to vector<1x16xf32>
    %161 = vector.broadcast %159 : vector<1x16xf32> to vector<32x16xf32>
    %162 = arith.mulf %156, %161 : vector<32x16xf32>
    %cst_79 = arith.constant dense<0.000000e+00> : vector<32xf32>
    %163 = vector.multi_reduction <add>, %162, %cst_79 [1] : vector<32x16xf32> to vector<32xf32>
    %164 = vector.shape_cast %163 : vector<32xf32> to vector<32x1xf32>
    %cst_80 = arith.constant dense<0.000000e+00> : vector<1x32xf32>
    %165 = tpu.matmul %160, %156, %cst_80 {dimension_numbers = #tpu.dot_dimension_numbers<[1], [1], [0], [0], [0, 0, 1, 0], [], []>} : vector<1x16xf32>, vector<32x16xf32>, vector<1x32xf32> -> vector<1x32xf32>
    %166 = vector.broadcast %164 : vector<32x1xf32> to vector<32x32xf32>
    %167 = vector.broadcast %165 : vector<1x32xf32> to vector<32x32xf32>
    %168 = arith.addf %166, %167 : vector<32x32xf32>
    %cst_81 = arith.constant 0.000000e+00 : f32
    %169 = vector.broadcast %cst_81 : f32 to vector<32x32xf32>
    %170 = arith.cmpf oge, %168, %169 : vector<32x32xf32>
    %cst_82 = arith.constant 2.000000e-01 : f32
    %171 = vector.broadcast %cst_82 : f32 to vector<32x32xf32>
    %172 = arith.mulf %171, %168 : vector<32x32xf32>
    %173 = arith.select %170, %168, %172 : vector<32x32xi1>, vector<32x32xf32>
    %cst_83 = arith.constant 0.000000e+00 : f32
    %174 = vector.broadcast %cst_83 : f32 to vector<32x32xf32>
    %175 = arith.cmpf ogt, %0, %174 : vector<32x32xf32>
    %cst_84 = arith.constant -9.000000e+15 : f32
    %176 = vector.broadcast %cst_84 : f32 to vector<32x32xf32>
    %177 = arith.select %175, %173, %176 : vector<32x32xi1>, vector<32x32xf32>
    %cst_85 = arith.constant dense<0xFF800000> : vector<32xf32>
    %178 = vector.multi_reduction <maximumf>, %177, %cst_85 [1] : vector<32x32xf32> to vector<32xf32>
    %179 = vector.shape_cast %178 : vector<32xf32> to vector<32x1xf32>
    %180 = vector.broadcast %179 : vector<32x1xf32> to vector<32x32xf32>
    %181 = arith.subf %177, %180 : vector<32x32xf32>
    %182 = math.exp %181 : vector<32x32xf32>
    %cst_86 = arith.constant dense<0.000000e+00> : vector<32xf32>
    %183 = vector.multi_reduction <add>, %182, %cst_86 [1] : vector<32x32xf32> to vector<32xf32>
    %184 = vector.shape_cast %183 : vector<32xf32> to vector<32x1xf32>
    %185 = tpu.reciprocal %184 {approx = true} : vector<32x1xf32> -> vector<32x1xf32>
    %186 = vector.broadcast %185 : vector<32x1xf32> to vector<32x32xf32>
    %187 = arith.mulf %182, %186 : vector<32x32xf32>
    %cst_87 = arith.constant dense<0.000000e+00> : vector<32x16xf32>
    %188 = tpu.matmul %187, %156, %cst_87 {dimension_numbers = #tpu.dot_dimension_numbers<[1], [0], [0], [1], [0, 0, 1, 1], [], []>} : vector<32x32xf32>, vector<32x16xf32>, vector<32x16xf32> -> vector<32x16xf32>
    %cst_88 = arith.constant 0.000000e+00 : f32
    %189 = vector.broadcast %cst_88 : f32 to vector<32x16xf32>
    %190 = arith.cmpf ogt, %188, %189 : vector<32x16xf32>
    %191 = math.exp %188 : vector<32x16xf32>
    %cst_89 = arith.constant 1.000000e+00 : f32
    %192 = vector.broadcast %cst_89 : f32 to vector<32x16xf32>
    %193 = arith.subf %191, %192 : vector<32x16xf32>
    %194 = arith.select %190, %188, %193 : vector<32x16xi1>, vector<32x16xf32>
    %c1_90 = arith.constant 1 : index
    %c0_91 = arith.constant 0 : index
    %c0_92 = arith.constant 0 : index
    %195 = vector.load %arg20[%c1_90, %c0_91, %c0_92] : memref<2x16x16xf32, #tpu.memory_space<vmem>>, vector<1x16x16xf32>
    %196 = vector.shape_cast %195 : vector<1x16x16xf32> to vector<16x16xf32>
    %cst_93 = arith.constant dense<0.000000e+00> : vector<32x16xf32>
    %197 = tpu.matmul %194, %196, %cst_93 {dimension_numbers = #tpu.dot_dimension_numbers<[1], [0], [0], [1], [0, 0, 1, 1], [], []>} : vector<32x16xf32>, vector<16x16xf32>, vector<32x16xf32> -> vector<32x16xf32>
    %198 = arith.addf %153, %197 : vector<32x16xf32>
    %c0_94 = arith.constant 0 : index
    %c0_95 = arith.constant 0 : index
    %199 = vector.load %arg21[%c0_94, %c0_95] : memref<2x16xf32, #tpu.memory_space<vmem>>, vector<2x16xf32>
    %200 = vector.extract_strided_slice %199 {offsets = [0, 0], sizes = [1, 16], strides = [1, 1]} : vector<2x16xf32> to vector<1x16xf32>
    %201 = vector.extract_strided_slice %199 {offsets = [1, 0], sizes = [1, 16], strides = [1, 1]} : vector<2x16xf32> to vector<1x16xf32>
    %202 = vector.broadcast %200 : vector<1x16xf32> to vector<32x16xf32>
    %203 = arith.mulf %198, %202 : vector<32x16xf32>
    %cst_96 = arith.constant dense<0.000000e+00> : vector<32xf32>
    %204 = vector.multi_reduction <add>, %203, %cst_96 [1] : vector<32x16xf32> to vector<32xf32>
    %205 = vector.shape_cast %204 : vector<32xf32> to vector<32x1xf32>
    %cst_97 = arith.constant dense<0.000000e+00> : vector<1x32xf32>
    %206 = tpu.matmul %201, %198, %cst_97 {dimension_numbers = #tpu.dot_dimension_numbers<[1], [1], [0], [0], [0, 0, 1, 0], [], []>} : vector<1x16xf32>, vector<32x16xf32>, vector<1x32xf32> -> vector<1x32xf32>
    %207 = vector.broadcast %205 : vector<32x1xf32> to vector<32x32xf32>
    %208 = vector.broadcast %206 : vector<1x32xf32> to vector<32x32xf32>
    %209 = arith.addf %207, %208 : vector<32x32xf32>
    %cst_98 = arith.constant 0.000000e+00 : f32
    %210 = vector.broadcast %cst_98 : f32 to vector<32x32xf32>
    %211 = arith.cmpf oge, %209, %210 : vector<32x32xf32>
    %cst_99 = arith.constant 2.000000e-01 : f32
    %212 = vector.broadcast %cst_99 : f32 to vector<32x32xf32>
    %213 = arith.mulf %212, %209 : vector<32x32xf32>
    %214 = arith.select %211, %209, %213 : vector<32x32xi1>, vector<32x32xf32>
    %cst_100 = arith.constant 0.000000e+00 : f32
    %215 = vector.broadcast %cst_100 : f32 to vector<32x32xf32>
    %216 = arith.cmpf ogt, %0, %215 : vector<32x32xf32>
    %cst_101 = arith.constant -9.000000e+15 : f32
    %217 = vector.broadcast %cst_101 : f32 to vector<32x32xf32>
    %218 = arith.select %216, %214, %217 : vector<32x32xi1>, vector<32x32xf32>
    %cst_102 = arith.constant dense<0xFF800000> : vector<32xf32>
    %219 = vector.multi_reduction <maximumf>, %218, %cst_102 [1] : vector<32x32xf32> to vector<32xf32>
    %220 = vector.shape_cast %219 : vector<32xf32> to vector<32x1xf32>
    %221 = vector.broadcast %220 : vector<32x1xf32> to vector<32x32xf32>
    %222 = arith.subf %218, %221 : vector<32x32xf32>
    %223 = math.exp %222 : vector<32x32xf32>
    %cst_103 = arith.constant dense<0.000000e+00> : vector<32xf32>
    %224 = vector.multi_reduction <add>, %223, %cst_103 [1] : vector<32x32xf32> to vector<32xf32>
    %225 = vector.shape_cast %224 : vector<32xf32> to vector<32x1xf32>
    %226 = tpu.reciprocal %225 {approx = true} : vector<32x1xf32> -> vector<32x1xf32>
    %227 = vector.broadcast %226 : vector<32x1xf32> to vector<32x32xf32>
    %228 = arith.mulf %223, %227 : vector<32x32xf32>
    %cst_104 = arith.constant dense<0.000000e+00> : vector<32x16xf32>
    %229 = tpu.matmul %228, %198, %cst_104 {dimension_numbers = #tpu.dot_dimension_numbers<[1], [0], [0], [1], [0, 0, 1, 1], [], []>} : vector<32x32xf32>, vector<32x16xf32>, vector<32x16xf32> -> vector<32x16xf32>
    %cst_105 = arith.constant 0.000000e+00 : f32
    %230 = vector.broadcast %cst_105 : f32 to vector<32x16xf32>
    %231 = arith.cmpf ogt, %229, %230 : vector<32x16xf32>
    %232 = math.exp %229 : vector<32x16xf32>
    %cst_106 = arith.constant 1.000000e+00 : f32
    %233 = vector.broadcast %cst_106 : f32 to vector<32x16xf32>
    %234 = arith.subf %232, %233 : vector<32x16xf32>
    %235 = arith.select %231, %229, %234 : vector<32x16xi1>, vector<32x16xf32>
    %c0_107 = arith.constant 0 : index
    %c0_108 = arith.constant 0 : index
    %236 = vector.load %arg22[%c0_107, %c0_108] : memref<2x16xf32, #tpu.memory_space<vmem>>, vector<2x16xf32>
    %237 = vector.extract_strided_slice %236 {offsets = [0, 0], sizes = [1, 16], strides = [1, 1]} : vector<2x16xf32> to vector<1x16xf32>
    %238 = vector.broadcast %237 : vector<1x16xf32> to vector<32x16xf32>
    %239 = arith.mulf %235, %238 : vector<32x16xf32>
    %240 = vector.extract_strided_slice %236 {offsets = [1, 0], sizes = [1, 16], strides = [1, 1]} : vector<2x16xf32> to vector<1x16xf32>
    %241 = vector.broadcast %240 : vector<1x16xf32> to vector<32x16xf32>
    %242 = arith.addf %239, %241 : vector<32x16xf32>
    %cst_109 = arith.constant 0.000000e+00 : f32
    %243 = vector.broadcast %cst_109 : f32 to vector<32x16xf32>
    %244 = arith.cmpf oge, %242, %243 : vector<32x16xf32>
    %cst_110 = arith.constant 0.00999999977 : f32
    %245 = vector.broadcast %cst_110 : f32 to vector<32x16xf32>
    %246 = arith.mulf %245, %242 : vector<32x16xf32>
    %247 = arith.select %244, %242, %246 : vector<32x16xi1>, vector<32x16xf32>
    %c0_111 = arith.constant 0 : index
    %c0_112 = arith.constant 0 : index
    %248 = vector.load %arg23[%c0_111, %c0_112] : memref<5x16xf32, #tpu.memory_space<vmem>>, vector<5x16xf32>
    %249 = arith.minimumf %109, %247 : vector<32x16xf32>
    %250 = arith.maximumf %109, %247 : vector<32x16xf32>
    %251 = vector.extract_strided_slice %248 {offsets = [0, 0], sizes = [1, 16], strides = [1, 1]} : vector<5x16xf32> to vector<1x16xf32>
    %252 = vector.broadcast %251 : vector<1x16xf32> to vector<32x16xf32>
    %253 = arith.mulf %249, %252 : vector<32x16xf32>
    %254 = vector.extract_strided_slice %248 {offsets = [1, 0], sizes = [1, 16], strides = [1, 1]} : vector<5x16xf32> to vector<1x16xf32>
    %255 = vector.broadcast %254 : vector<1x16xf32> to vector<32x16xf32>
    %256 = arith.mulf %250, %255 : vector<32x16xf32>
    %257 = arith.addf %253, %256 : vector<32x16xf32>
    %258 = vector.extract_strided_slice %248 {offsets = [2, 0], sizes = [1, 16], strides = [1, 1]} : vector<5x16xf32> to vector<1x16xf32>
    %259 = vector.broadcast %258 : vector<1x16xf32> to vector<32x16xf32>
    %260 = arith.mulf %109, %259 : vector<32x16xf32>
    %261 = arith.addf %257, %260 : vector<32x16xf32>
    %262 = vector.extract_strided_slice %248 {offsets = [3, 0], sizes = [1, 16], strides = [1, 1]} : vector<5x16xf32> to vector<1x16xf32>
    %263 = vector.broadcast %262 : vector<1x16xf32> to vector<32x16xf32>
    %264 = arith.mulf %247, %263 : vector<32x16xf32>
    %265 = arith.addf %261, %264 : vector<32x16xf32>
    %266 = vector.extract_strided_slice %248 {offsets = [4, 0], sizes = [1, 16], strides = [1, 1]} : vector<5x16xf32> to vector<1x16xf32>
    %267 = vector.broadcast %266 : vector<1x16xf32> to vector<32x16xf32>
    %268 = arith.addf %265, %267 : vector<32x16xf32>
    %cst_113 = arith.constant 0.000000e+00 : f32
    %269 = vector.broadcast %cst_113 : f32 to vector<32x16xf32>
    %270 = arith.cmpf oge, %268, %269 : vector<32x16xf32>
    %cst_114 = arith.constant 2.000000e-01 : f32
    %271 = vector.broadcast %cst_114 : f32 to vector<32x16xf32>
    %272 = arith.mulf %271, %268 : vector<32x16xf32>
    %273 = arith.select %270, %268, %272 : vector<32x16xi1>, vector<32x16xf32>
    %cst_115 = arith.constant dense<0.000000e+00> : vector<256x16xf32>
    %274 = tpu.matmul %1, %273, %cst_115 {dimension_numbers = #tpu.dot_dimension_numbers<[1], [0], [0], [1], [0, 0, 1, 1], [], []>} : vector<256x32xf32>, vector<32x16xf32>, vector<256x16xf32> -> vector<256x16xf32>
    %c0_116 = arith.constant 0 : index
    %c0_117 = arith.constant 0 : index
    %275 = vector.load %arg24[%c0_116, %c0_117] : memref<256x16xf32, #tpu.memory_space<vmem>>, vector<256x16xf32>
    tpu.vector_store %arg24[%c0_116, %c0_117], %274 {strides = array<i32>} : memref<256x16xf32, #tpu.memory_space<vmem>>, vector<256x16xf32>,
    return
  }
}

</mosaic_0001>

<llo_original>
// kernel: af2gnn1_forward.1
$region0: #{af2gnn1_forward.1}
  #allocation0 [shape = 'u32[]', space=smem, size = 0x4, offset = 0x4, fixed_abs, tag = 'smem constant byte address 0x4 - core index']
  #allocation1 [shape = 'u32[144,128]{1,0:T(1,128)}', space=vmem, size = 0x12000, scoped, tag = 'internal scratch']
  %s0 = inlined_call_operand.vmem [shape: f32[256,16], index: 0, kind: input, shape index: {}]
  %s1 = inlined_call_operand.vmem [shape: f32[256,32], index: 1, kind: input, shape index: {}]
  %s2 = inlined_call_operand.vmem [shape: f32[32,1], index: 2, kind: input, shape index: {}]
  %s3 = inlined_call_operand.vmem [shape: f32[32,32], index: 3, kind: input, shape index: {}]
  %s4 = inlined_call_operand.vmem [shape: f32[2,16], index: 4, kind: input, shape index: {}]
  %s5 = inlined_call_operand.vmem [shape: f32[2,16], index: 5, kind: input, shape index: {}]
  %s6 = inlined_call_operand.vmem [shape: f32[16,16], index: 6, kind: input, shape index: {}]
  %s7 = inlined_call_operand.vmem [shape: f32[2,16], index: 7, kind: input, shape index: {}]
  %s8 = inlined_call_operand.vmem [shape: f32[2,16], index: 8, kind: input, shape index: {}]
  %s9 = inlined_call_operand.vmem [shape: f32[16,16], index: 9, kind: input, shape index: {}]
  %s10 = inlined_call_operand.vmem [shape: f32[2,16], index: 10, kind: input, shape index: {}]
  %s11 = inlined_call_operand.vmem [shape: f32[2,16], index: 11, kind: input, shape index: {}]
  %s12 = inlined_call_operand.vmem [shape: f32[16,16], index: 12, kind: input, shape index: {}]
  %s13 = inlined_call_operand.vmem [shape: f32[2,16], index: 13, kind: input, shape index: {}]
  %s14 = inlined_call_operand.vmem [shape: f32[2,16], index: 14, kind: input, shape index: {}]
  %s15 = inlined_call_operand.vmem [shape: f32[16,16], index: 15, kind: input, shape index: {}]
  %s16 = inlined_call_operand.vmem [shape: f32[2,16], index: 16, kind: input, shape index: {}]
  %s17 = inlined_call_operand.vmem [shape: f32[2,16], index: 17, kind: input, shape index: {}]
  %s18 = inlined_call_operand.vmem [shape: f32[2,16,16], index: 18, kind: input, shape index: {}]
  %s19 = inlined_call_operand.vmem [shape: f32[2,2,16], index: 19, kind: input, shape index: {}]
  %s20 = inlined_call_operand.vmem [shape: f32[2,16,16], index: 20, kind: input, shape index: {}]
  %s21 = inlined_call_operand.vmem [shape: f32[2,16], index: 21, kind: input, shape index: {}]
  %s22 = inlined_call_operand.vmem [shape: f32[2,16], index: 22, kind: input, shape index: {}]
  %s23 = inlined_call_operand.vmem [shape: f32[5,16], index: 23, kind: input, shape index: {}]
  %s24 = inlined_call_operand.vmem [shape: f32[256,16], index: 24, kind: output, shape index: {}]
  %s25 = sld [smem:[#allocation0]]
  $region106: #{af2gnn1_forward.1} parent=0
    _
  %s27 = ssub.s32 1, %s25
  %s28 = scalar_select 0, %s27, %s25
  // Predicated region
  $region2: #{af2gnn1_forward.1} parent=0 // pred_check
    _
  $region3: #{af2gnn1_forward.1} parent=0 // pred_check_branch
    %30 = sbr.rel (0) target = $region5
  $region4: #{af2gnn1_forward.1} parent=0 // pred_region
    _
  $region5: #{af2gnn1_forward.1} parent=0 // pred_fallthru
    _
  // Predicated region
  $region6: #{af2gnn1_forward.1} parent=0 // pred_check
    _
  $region7: #{af2gnn1_forward.1} parent=0 // pred_check_branch
    %32 = sbr.rel (0) target = $region9
  $region8: #{af2gnn1_forward.1} parent=0 // pred_region
    _
  $region9: #{af2gnn1_forward.1} parent=0 // pred_fallthru
    _
  // Predicated region
  $region10: #{af2gnn1_forward.1} parent=0 // pred_check
    _
  $region11: #{af2gnn1_forward.1} parent=0 // pred_check_branch
    %34 = sbr.rel (0) target = $region13
  $region12: #{af2gnn1_forward.1} parent=0 // pred_region
    _
  $region13: #{af2gnn1_forward.1} parent=0 // pred_fallthru
    _
  // Predicated region
  $region14: #{af2gnn1_forward.1} parent=0 // pred_check
    _
  $region15: #{af2gnn1_forward.1} parent=0 // pred_check_branch
    %36 = sbr.rel (0) target = $region17
  $region16: #{af2gnn1_forward.1} parent=0 // pred_region
    _
  $region17: #{af2gnn1_forward.1} parent=0 // pred_fallthru
    _
  // Predicated region
  $region18: #{af2gnn1_forward.1} parent=0 // pred_check
    _
  $region19: #{af2gnn1_forward.1} parent=0 // pred_check_branch
    %38 = sbr.rel (0) target = $region21
  $region20: #{af2gnn1_forward.1} parent=0 // pred_region
    _
  $region21: #{af2gnn1_forward.1} parent=0 // pred_fallthru
    _
  // Predicated region
  $region22: #{af2gnn1_forward.1} parent=0 // pred_check
    _
  $region23: #{af2gnn1_forward.1} parent=0 // pred_check_branch
    %40 = sbr.rel (0) target = $region25
  $region24: #{af2gnn1_forward.1} parent=0 // pred_region
    _
  $region25: #{af2gnn1_forward.1} parent=0 // pred_fallthru
    _
  // Predicated region
  $region26: #{af2gnn1_forward.1} parent=0 // pred_check
    _
  $region27: #{af2gnn1_forward.1} parent=0 // pred_check_branch
    %42 = sbr.rel (0) target = $region29
  $region28: #{af2gnn1_forward.1} parent=0 // pred_region
    _
  $region29: #{af2gnn1_forward.1} parent=0 // pred_fallthru
    _
  // Predicated region
  $region30: #{af2gnn1_forward.1} parent=0 // pred_check
    _
  $region31: #{af2gnn1_forward.1} parent=0 // pred_check_branch
    %44 = sbr.rel (0) target = $region33
  $region32: #{af2gnn1_forward.1} parent=0 // pred_region
    _
  $region33: #{af2gnn1_forward.1} parent=0 // pred_fallthru
    _
  // Predicated region
  $region34: #{af2gnn1_forward.1} parent=0 // pred_check
    _
  $region35: #{af2gnn1_forward.1} parent=0 // pred_check_branch
    %46 = sbr.rel (0) target = $region37
  $region36: #{af2gnn1_forward.1} parent=0 // pred_region
    _
  $region37: #{af2gnn1_forward.1} parent=0 // pred_fallthru
    _
  // Predicated region
  $region38: #{af2gnn1_forward.1} parent=0 // pred_check
    _
  $region39: #{af2gnn1_forward.1} parent=0 // pred_check_branch
    %48 = sbr.rel (0) target = $region41
  $region40: #{af2gnn1_forward.1} parent=0 // pred_region
    _
  $region41: #{af2gnn1_forward.1} parent=0 // pred_fallthru
    _
  // Predicated region
  $region42: #{af2gnn1_forward.1} parent=0 // pred_check
    _
  $region43: #{af2gnn1_forward.1} parent=0 // pred_check_branch
    %50 = sbr.rel (0) target = $region45
  $region44: #{af2gnn1_forward.1} parent=0 // pred_region
    _
  $region45: #{af2gnn1_forward.1} parent=0 // pred_fallthru
    _
  // Predicated region
  $region46: #{af2gnn1_forward.1} parent=0 // pred_check
    _
  $region47: #{af2gnn1_forward.1} parent=0 // pred_check_branch
    %52 = sbr.rel (0) target = $region49
  $region48: #{af2gnn1_forward.1} parent=0 // pred_region
    _
  $region49: #{af2gnn1_forward.1} parent=0 // pred_fallthru
    _
  // Predicated region
  $region50: #{af2gnn1_forward.1} parent=0 // pred_check
    _
  $region51: #{af2gnn1_forward.1} parent=0 // pred_check_branch
    %54 = sbr.rel (0) target = $region53
  $region52: #{af2gnn1_forward.1} parent=0 // pred_region
    _
  $region53: #{af2gnn1_forward.1} parent=0 // pred_fallthru
    _
  // Predicated region
  $region54: #{af2gnn1_forward.1} parent=0 // pred_check
    _
  $region55: #{af2gnn1_forward.1} parent=0 // pred_check_branch
    %56 = sbr.rel (0) target = $region57
  $region56: #{af2gnn1_forward.1} parent=0 // pred_region
    _
  $region57: #{af2gnn1_forward.1} parent=0 // pred_fallthru
    _
  // Predicated region
  $region58: #{af2gnn1_forward.1} parent=0 // pred_check
    _
  $region59: #{af2gnn1_forward.1} parent=0 // pred_check_branch
    %58 = sbr.rel (0) target = $region61
  $region60: #{af2gnn1_forward.1} parent=0 // pred_region
    _
  $region61: #{af2gnn1_forward.1} parent=0 // pred_fallthru
    _
  // Predicated region
  $region62: #{af2gnn1_forward.1} parent=0 // pred_check
    _
  $region63: #{af2gnn1_forward.1} parent=0 // pred_check_branch
    %60 = sbr.rel (0) target = $region65
  $region64: #{af2gnn1_forward.1} parent=0 // pred_region
    _
  $region65: #{af2gnn1_forward.1} parent=0 // pred_fallthru
    _
  // Predicated region
  $region66: #{af2gnn1_forward.1} parent=0 // pred_check
    _
  $region67: #{af2gnn1_forward.1} parent=0 // pred_check_branch
    %62 = sbr.rel (0) target = $region69
  $region68: #{af2gnn1_forward.1} parent=0 // pred_region
    _
  $region69: #{af2gnn1_forward.1} parent=0 // pred_fallthru
    _
  // Predicated region
  $region70: #{af2gnn1_forward.1} parent=0 // pred_check
    _
  $region71: #{af2gnn1_forward.1} parent=0 // pred_check_branch
    %64 = sbr.rel (0) target = $region73
  $region72: #{af2gnn1_forward.1} parent=0 // pred_region
    _
  $region73: #{af2gnn1_forward.1} parent=0 // pred_fallthru
    _
  // Predicated region
  $region74: #{af2gnn1_forward.1} parent=0 // pred_check
    _
  $region75: #{af2gnn1_forward.1} parent=0 // pred_check_branch
    %66 = sbr.rel (0) target = $region77
  $region76: #{af2gnn1_forward.1} parent=0 // pred_region
    _
  $region77: #{af2gnn1_forward.1} parent=0 // pred_fallthru
    _
  // Predicated region
  $region78: #{af2gnn1_forward.1} parent=0 // pred_check
    _
  $region79: #{af2gnn1_forward.1} parent=0 // pred_check_branch
    %68 = sbr.rel (0) target = $region81
  $region80: #{af2gnn1_forward.1} parent=0 // pred_region
    _
  $region81: #{af2gnn1_forward.1} parent=0 // pred_fallthru
    _
  // Predicated region
  $region82: #{af2gnn1_forward.1} parent=0 // pred_check
    _
  $region83: #{af2gnn1_forward.1} parent=0 // pred_check_branch
    %70 = sbr.rel (0) target = $region85
  $region84: #{af2gnn1_forward.1} parent=0 // pred_region
    _
  $region85: #{af2gnn1_forward.1} parent=0 // pred_fallthru
    _
  // Predicated region
  $region86: #{af2gnn1_forward.1} parent=0 // pred_check
    _
  $region87: #{af2gnn1_forward.1} parent=0 // pred_check_branch
    %72 = sbr.rel (0) target = $region89
  $region88: #{af2gnn1_forward.1} parent=0 // pred_region
    _
  $region89: #{af2gnn1_forward.1} parent=0 // pred_fallthru
    _
  // Predicated region
  $region90: #{af2gnn1_forward.1} parent=0 // pred_check
    _
  $region91: #{af2gnn1_forward.1} parent=0 // pred_check_branch
    %74 = sbr.rel (0) target = $region93
  $region92: #{af2gnn1_forward.1} parent=0 // pred_region
    _
  $region93: #{af2gnn1_forward.1} parent=0 // pred_fallthru
    _
  // Predicated region
  $region94: #{af2gnn1_forward.1} parent=0 // pred_check
    _
  $region95: #{af2gnn1_forward.1} parent=0 // pred_check_branch
    %76 = sbr.rel (0) target = $region97
  $region96: #{af2gnn1_forward.1} parent=0 // pred_region
    _
  $region97: #{af2gnn1_forward.1} parent=0 // pred_fallthru
    _
  %v77 = vld [vmem:[%s3] sm:$0xff]
  %v78 = vld [vmem:[%s3 + $0x8] sm:$0xff]
  %v79 = vld [vmem:[%s3 + $0x10] sm:$0xff]
  %v80 = vld [vmem:[%s3 + $0x18] sm:$0xff]
  %v81 = vld [vmem:[%s1] sm:$0xff]
  %v82 = vld [vmem:[%s1 + $0x8] sm:$0xff]
  %v83 = vld [vmem:[%s1 + $0x10] sm:$0xff]
  %v84 = vld [vmem:[%s1 + $0x18] sm:$0xff]
  %v85 = vld [vmem:[%s1 + $0x20] sm:$0xff]
  %v86 = vld [vmem:[%s1 + $0x28] sm:$0xff]
  %v87 = vld [vmem:[%s1 + $0x30] sm:$0xff]
  %v88 = vld [vmem:[%s1 + $0x38] sm:$0xff]
  %v89 = vld [vmem:[%s1 + $0x40] sm:$0xff]
  %v90 = vld [vmem:[%s1 + $0x48] sm:$0xff]
  %v91 = vld [vmem:[%s1 + $0x50] sm:$0xff]
  %v92 = vld [vmem:[%s1 + $0x58] sm:$0xff]
  %v93 = vld [vmem:[%s1 + $0x60] sm:$0xff]
  %v94 = vld [vmem:[%s1 + $0x68] sm:$0xff]
  %v95 = vld [vmem:[%s1 + $0x70] sm:$0xff]
  %v96 = vld [vmem:[%s1 + $0x78] sm:$0xff]
  %v97 = vld [vmem:[%s1 + $0x80] sm:$0xff]
  %v98 = vld [vmem:[%s1 + $0x88] sm:$0xff]
  %v99 = vld [vmem:[%s1 + $0x90] sm:$0xff]
  %v100 = vld [vmem:[%s1 + $0x98] sm:$0xff]
  %v101 = vld [vmem:[%s1 + $0xa0] sm:$0xff]
  %v102 = vld [vmem:[%s1 + $0xa8] sm:$0xff]
  %v103 = vld [vmem:[%s1 + $0xb0] sm:$0xff]
  %v104 = vld [vmem:[%s1 + $0xb8] sm:$0xff]
  %v105 = vld [vmem:[%s1 + $0xc0] sm:$0xff]
  %v106 = vld [vmem:[%s1 + $0xc8] sm:$0xff]
  %v107 = vld [vmem:[%s1 + $0xd0] sm:$0xff]
  %v108 = vld [vmem:[%s1 + $0xd8] sm:$0xff]
  %v109 = vld [vmem:[%s1 + $0xe0] sm:$0xff]
  %v110 = vld [vmem:[%s1 + $0xe8] sm:$0xff]
  %v111 = vld [vmem:[%s1 + $0xf0] sm:$0xff]
  %v112 = vld [vmem:[%s1 + $0xf8] sm:$0xff]
  %v113 = vld [vmem:[%s0] sm:$0xff]
  %v114 = vld [vmem:[%s0 + $0x8] sm:$0xff]
  %v115 = vld [vmem:[%s0 + $0x10] sm:$0xff]
  %v116 = vld [vmem:[%s0 + $0x18] sm:$0xff]
  %v117 = vld [vmem:[%s0 + $0x20] sm:$0xff]
  %v118 = vld [vmem:[%s0 + $0x28] sm:$0xff]
  %v119 = vld [vmem:[%s0 + $0x30] sm:$0xff]
  %v120 = vld [vmem:[%s0 + $0x38] sm:$0xff]
  %v121 = vld [vmem:[%s0 + $0x40] sm:$0xff]
  %v122 = vld [vmem:[%s0 + $0x48] sm:$0xff]
  %v123 = vld [vmem:[%s0 + $0x50] sm:$0xff]
  %v124 = vld [vmem:[%s0 + $0x58] sm:$0xff]
  %v125 = vld [vmem:[%s0 + $0x60] sm:$0xff]
  %v126 = vld [vmem:[%s0 + $0x68] sm:$0xff]
  %v127 = vld [vmem:[%s0 + $0x70] sm:$0xff]
  %v128 = vld [vmem:[%s0 + $0x78] sm:$0xff]
  %v129 = vld [vmem:[%s0 + $0x80] sm:$0xff]
  %v130 = vld [vmem:[%s0 + $0x88] sm:$0xff]
  %v131 = vld [vmem:[%s0 + $0x90] sm:$0xff]
  %v132 = vld [vmem:[%s0 + $0x98] sm:$0xff]
  %v133 = vld [vmem:[%s0 + $0xa0] sm:$0xff]
  %v134 = vld [vmem:[%s0 + $0xa8] sm:$0xff]
  %v135 = vld [vmem:[%s0 + $0xb0] sm:$0xff]
  %v136 = vld [vmem:[%s0 + $0xb8] sm:$0xff]
  %v137 = vld [vmem:[%s0 + $0xc0] sm:$0xff]
  %v138 = vld [vmem:[%s0 + $0xc8] sm:$0xff]
  %v139 = vld [vmem:[%s0 + $0xd0] sm:$0xff]
  %v140 = vld [vmem:[%s0 + $0xd8] sm:$0xff]
  %v141 = vld [vmem:[%s0 + $0xe0] sm:$0xff]
  %v142 = vld [vmem:[%s0 + $0xe8] sm:$0xff]
  %v143 = vld [vmem:[%s0 + $0xf0] sm:$0xff]
  %v144 = vld [vmem:[%s0 + $0xf8] sm:$0xff]
  %145 = vxpose.xlu0.b32.start [1/16] %v81, 128
  %146 = vxpose.xlu0.b32.cont [2/16] %v82, 128
  %147 = vxpose.xlu0.b32.cont [3/16] %v83, 128
  %148 = vxpose.xlu0.b32.cont [4/16] %v84, 128
  %149 = vxpose.xlu0.b32.cont [5/16] %v85, 128
  %150 = vxpose.xlu0.b32.cont [6/16] %v86, 128
  %151 = vxpose.xlu0.b32.cont [7/16] %v87, 128
  %152 = vxpose.xlu0.b32.cont [8/16] %v88, 128
  %153 = vxpose.xlu0.b32.cont [9/16] %v89, 128
  %154 = vxpose.xlu0.b32.cont [10/16] %v90, 128
  %155 = vxpose.xlu0.b32.cont [11/16] %v91, 128
  %156 = vxpose.xlu0.b32.cont [12/16] %v92, 128
  %157 = vxpose.xlu0.b32.cont [13/16] %v93, 128
  %158 = vxpose.xlu0.b32.cont [14/16] %v94, 128
  %159 = vxpose.xlu0.b32.cont [15/16] %v95, 128
  %160 = vxpose.xlu0.b32.end [16/16] %v96, 128
  %v161 = vpop.trf.xlu0
  %v162 = vpop.trf.xlu0
  %v163 = vpop.trf.xlu0
  %v164 = vpop.trf.xlu0
  %v165 = vpop.trf.xlu0
  %v166 = vpop.trf.xlu0
  %v167 = vpop.trf.xlu0
  %v168 = vpop.trf.xlu0
  %v169 = vpop.trf.xlu0
  %v170 = vpop.trf.xlu0
  %v171 = vpop.trf.xlu0
  %v172 = vpop.trf.xlu0
  %v173 = vpop.trf.xlu0
  %v174 = vpop.trf.xlu0
  %v175 = vpop.trf.xlu0
  %v176 = vpop.trf.xlu0
  %177 = vxpose.xlu0.b32.start [1/16] %v97, 128
  %178 = vxpose.xlu0.b32.cont [2/16] %v98, 128
  %179 = vxpose.xlu0.b32.cont [3/16] %v99, 128
  %180 = vxpose.xlu0.b32.cont [4/16] %v100, 128
  %181 = vxpose.xlu0.b32.cont [5/16] %v101, 128
  %182 = vxpose.xlu0.b32.cont [6/16] %v102, 128
  %183 = vxpose.xlu0.b32.cont [7/16] %v103, 128
  %184 = vxpose.xlu0.b32.cont [8/16] %v104, 128
  %185 = vxpose.xlu0.b32.cont [9/16] %v105, 128
  %186 = vxpose.xlu0.b32.cont [10/16] %v106, 128
  %187 = vxpose.xlu0.b32.cont [11/16] %v107, 128
  %188 = vxpose.xlu0.b32.cont [12/16] %v108, 128
  %189 = vxpose.xlu0.b32.cont [13/16] %v109, 128
  %190 = vxpose.xlu0.b32.cont [14/16] %v110, 128
  %191 = vxpose.xlu0.b32.cont [15/16] %v111, 128
  %192 = vxpose.xlu0.b32.end [16/16] %v112, 128
  %v193 = vpop.trf.xlu0
  %v194 = vpop.trf.xlu0
  %v195 = vpop.trf.xlu0
  %v196 = vpop.trf.xlu0
  %v197 = vpop.trf.xlu0
  %v198 = vpop.trf.xlu0
  %v199 = vpop.trf.xlu0
  %v200 = vpop.trf.xlu0
  %v201 = vpop.trf.xlu0
  %v202 = vpop.trf.xlu0
  %v203 = vpop.trf.xlu0
  %v204 = vpop.trf.xlu0
  %v205 = vpop.trf.xlu0
  %v206 = vpop.trf.xlu0
  %v207 = vpop.trf.xlu0
  %v208 = vpop.trf.xlu0
  %209 = vmatprep.subr.mxu0 0.0
  %210 = vmatpush1.msra.mxu0 %v113
  %211 = vmatprep.subr.mxu0 0.0
  %212 = vmatpush1.msra.mxu0 %v114
  %213 = vmatprep.subr.mxu0 0.0
  %214 = vmatpush1.msra.mxu0 %v115
  %215 = vmatprep.subr.mxu0 0.0
  %216 = vmatpush1.msra.mxu0 %v116
  %217 = vmatprep.subr.mxu0 0.0
  %218 = vmatpush1.msra.mxu0 %v117
  %219 = vmatprep.subr.mxu0 0.0
  %220 = vmatpush1.msra.mxu0 %v118
  %221 = vmatprep.subr.mxu0 0.0
  %222 = vmatpush1.msra.mxu0 %v119
  %223 = vmatprep.subr.mxu0 0.0
  %224 = vmatpush1.msra.mxu0 %v120
  %225 = vmatprep.subr.mxu0 0.0
  %226 = vmatpush1.msra.mxu0 %v121
  %227 = vmatprep.subr.mxu0 0.0
  %228 = vmatpush1.msra.mxu0 %v122
  %229 = vmatprep.subr.mxu0 0.0
  %230 = vmatpush1.msra.mxu0 %v123
  %231 = vmatprep.subr.mxu0 0.0
  %232 = vmatpush1.msra.mxu0 %v124
  %233 = vmatprep.subr.mxu0 0.0
  %234 = vmatpush1.msra.mxu0 %v125
  %235 = vmatprep.subr.mxu0 0.0
  %236 = vmatpush1.msra.mxu0 %v126
  %237 = vmatprep.subr.mxu0 0.0
  %238 = vmatpush1.msra.mxu0 %v127
  %239 = vmatprep.subr.mxu0 0.0
  %240 = vmatpush1.msra.mxu0 %v128
  %241 = vmatprep.subr.mxu0 0.0
  %242 = vmatpush1.msra.mxu0 %v129
  %243 = vmatprep.subr.mxu0 0.0
  %244 = vmatpush1.msra.mxu0 %v130
  %245 = vmatprep.subr.mxu0 0.0
  %246 = vmatpush1.msra.mxu0 %v131
  %247 = vmatprep.subr.mxu0 0.0
  %248 = vmatpush1.msra.mxu0 %v132
  %249 = vmatprep.subr.mxu0 0.0
  %250 = vmatpush1.msra.mxu0 %v133
  %251 = vmatprep.subr.mxu0 0.0
  %252 = vmatpush1.msra.mxu0 %v134
  %253 = vmatprep.subr.mxu0 0.0
  %254 = vmatpush1.msra.mxu0 %v135
  %255 = vmatprep.subr.mxu0 0.0
  %256 = vmatpush1.msra.mxu0 %v136
  %257 = vmatprep.subr.mxu0 0.0
  %258 = vmatpush1.msra.mxu0 %v137
  %259 = vmatprep.subr.mxu0 0.0
  %260 = vmatpush1.msra.mxu0 %v138
  %261 = vmatprep.subr.mxu0 0.0
  %262 = vmatpush1.msra.mxu0 %v139
  %263 = vmatprep.subr.mxu0 0.0
  %264 = vmatpush1.msra.mxu0 %v140
  %265 = vmatprep.subr.mxu0 0.0
  %266 = vmatpush1.msra.mxu0 %v141
  %267 = vmatprep.subr.mxu0 0.0
  %268 = vmatpush1.msra.mxu0 %v142
  %269 = vmatprep.subr.mxu0 0.0
  %270 = vmatpush1.msra.mxu0 %v143
  %271 = vmatprep.subr.mxu0 0.0
  %272 = vmatpush1.msra.mxu0 %v144
  %273 = vmatprep.mubr.f32.mxu0 %v193
  %274 = vmatmul.mubr.f32.gmra.mrb[0].mxu0 %v161
  %v275 = vpop.f32.mrb[0].mxu0
  %v276 = vadd.f32 0.0, %v275
  %v277 = vpop.f32.mrb[0].mxu0
  %278 = vmatprep.mubr.f32.mxu0 %v194
  %279 = vmatmul.mubr.f32.gmra.mrb[0].mxu0 %v162
  %v280 = vpop.f32.mrb[0].mxu0
  %v281 = vadd.f32 0.0, %v280
  %v282 = vpop.f32.mrb[0].mxu0
  %283 = vmatprep.mubr.f32.mxu0 %v195
  %284 = vmatmul.mubr.f32.gmra.mrb[0].mxu0 %v163
  %v285 = vpop.f32.mrb[0].mxu0
  %v286 = vadd.f32 0.0, %v285
  %v287 = vpop.f32.mrb[0].mxu0
  %288 = vmatprep.mubr.f32.mxu0 %v196
  %289 = vmatmul.mubr.f32.gmra.mrb[0].mxu0 %v164
  %v290 = vpop.f32.mrb[0].mxu0
  %v291 = vadd.f32 0.0, %v290
  %v292 = vpop.f32.mrb[0].mxu0
  %293 = vdwg.mxu0
  %v294 = vld [vmem:[%s2] sm:$0xff]
  %v295 = vld [vmem:[%s2 + $0x8] sm:$0xff]
  %v296 = vld [vmem:[%s2 + $0x10] sm:$0xff]
  %v297 = vld [vmem:[%s2 + $0x18] sm:$0xff]
  %299 = vset.pattern.permute.xlu0 0
  %300 = vperm.xlu0 %299, %v294
  %v301 = vpop.permute.xlu0 %300
  %304 = vset.pattern.permute.xlu0 0
  %305 = vperm.xlu0 %304, %v295
  %v306 = vpop.permute.xlu0 %305
  %309 = vset.pattern.permute.xlu0 0
  %310 = vperm.xlu0 %309, %v296
  %v311 = vpop.permute.xlu0 %310
  %314 = vset.pattern.permute.xlu0 0
  %315 = vperm.xlu0 %314, %v297
  %v316 = vpop.permute.xlu0 %315
  %v318 = vmul.f32 %v276, %v301
  %v319 = vmul.f32 %v281, %v306
  %v320 = vmul.f32 %v286, %v311
  %v321 = vmul.f32 %v291, %v316
  %v322 = vld [vmem:[%s4] sm:$0x3]
  %v323 = vlaneseq
  %v324 = vshrl.u32 %v323, 7
  %v325 = vsub.s32 0, %v324
  %v326 = vrot.slane %v322, %v325
  %v327 = vmul.f32 %v318, %v326
  %v328 = vmul.f32 %v319, %v326
  %v329 = vmul.f32 %v320, %v326
  %v330 = vmul.f32 %v321, %v326
  %v331 = vlaneseq
  %v332 = vshrl.u32 %v331, 7
  %v333 = vsub.s32 1, %v332
  %v334 = vrot.slane %v322, %v333
  %v335 = vadd.f32 %v327, %v334
  %v336 = vadd.f32 %v328, %v334
  %v337 = vadd.f32 %v329, %v334
  %v338 = vadd.f32 %v330, %v334
  %v339 = vld [vmem:[%s5] sm:$0x3]
  %v340 = vlaneseq
  %v341 = vshrl.u32 %v340, 7
  %v342 = vsub.s32 0, %v341
  %v343 = vrot.slane %v339, %v342
  %v344 = vmul.f32 %v335, %v343
  %v345 = vmul.f32 %v336, %v343
  %v346 = vmul.f32 %v337, %v343
  %v347 = vmul.f32 %v338, %v343
  %v348 = vlaneseq
  %v349 = vshrl.u32 %v348, 7
  %v350 = vsub.s32 1, %v349
  %v351 = vrot.slane %v339, %v350
  %v352 = vadd.f32 %v344, %v351
  %v353 = vadd.f32 %v345, %v351
  %v354 = vadd.f32 %v346, %v351
  %v355 = vadd.f32 %v347, %v351
  %v356 = vld [vmem:[%s7] sm:$0x3]
  %v357 = vlaneseq
  %v358 = vshrl.u32 %v357, 7
  %v359 = vsub.s32 0, %v358
  %v360 = vrot.slane %v356, %v359
  %v361 = vmul.f32 %v352, %v360
  %v362 = vmul.f32 %v353, %v360
  %v363 = vmul.f32 %v354, %v360
  %v364 = vmul.f32 %v355, %v360
  %v365 = vlaneseq
  %v366 = vshrl.u32 %v365, 7
  %v367 = vsub.s32 1, %v366
  %v368 = vrot.slane %v356, %v367
  %v369 = vadd.f32 %v361, %v368
  %v370 = vadd.f32 %v362, %v368
  %v371 = vadd.f32 %v363, %v368
  %v372 = vadd.f32 %v364, %v368
  %v373 = vld [vmem:[%s6] sm:$0xff]
  %v374 = vld [vmem:[%s6 + $0x8] sm:$0xff]
  %vm375 = vcmask 130048
  %v377 = vsel %vm375, %v369, 0
  %v380 = vsel %vm375, %v370, 0
  %v383 = vsel %vm375, %v371, 0
  %v386 = vsel %vm375, %v372, 0
  %388 = vmatprep.subr.mxu0 0.0
  %389 = vmatpush1.msra.mxu0 %v373
  %390 = vmatprep.subr.mxu0 0.0
  %391 = vmatpush1.msra.mxu0 %v374
  %392 = vmatprep.subr.mxu0 0.0
  %393 = vmatpush1.msra.mxu0 0.0
  %394 = vmatprep.subr.mxu0 0.0
  %395 = vmatpush1.msra.mxu0 0.0
  %396 = vmatprep.subr.mxu0 0.0
  %397 = vmatpush1.msra.mxu0 0.0
  %398 = vmatprep.subr.mxu0 0.0
  %399 = vmatpush1.msra.mxu0 0.0
  %400 = vmatprep.subr.mxu0 0.0
  %401 = vmatpush1.msra.mxu0 0.0
  %402 = vmatprep.subr.mxu0 0.0
  %403 = vmatpush1.msra.mxu0 0.0
  %404 = vmatprep.subr.mxu0 0.0
  %405 = vmatpush1.msra.mxu0 0.0
  %406 = vmatprep.subr.mxu0 0.0
  %407 = vmatpush1.msra.mxu0 0.0
  %408 = vmatprep.subr.mxu0 0.0
  %409 = vmatpush1.msra.mxu0 0.0
  %410 = vmatprep.subr.mxu0 0.0
  %411 = vmatpush1.msra.mxu0 0.0
  %412 = vmatprep.subr.mxu0 0.0
  %413 = vmatpush1.msra.mxu0 0.0
  %414 = vmatprep.subr.mxu0 0.0
  %415 = vmatpush1.msra.mxu0 0.0
  %416 = vmatprep.subr.mxu0 0.0
  %417 = vmatpush1.msra.mxu0 0.0
  %418 = vmatprep.subr.mxu0 0.0
  %419 = vmatpush1.msra.mxu0 0.0
  %420 = vmatprep.subr.mxu0 0.0
  %421 = vmatpush1.msra.mxu0 0.0
  %422 = vmatprep.subr.mxu0 0.0
  %423 = vmatpush1.msra.mxu0 0.0
  %424 = vmatprep.subr.mxu0 0.0
  %425 = vmatpush1.msra.mxu0 0.0
  %426 = vmatprep.subr.mxu0 0.0
  %427 = vmatpush1.msra.mxu0 0.0
  %428 = vmatprep.subr.mxu0 0.0
  %429 = vmatpush1.msra.mxu0 0.0
  %430 = vmatprep.subr.mxu0 0.0
  %431 = vmatpush1.msra.mxu0 0.0
  %432 = vmatprep.subr.mxu0 0.0
  %433 = vmatpush1.msra.mxu0 0.0
  %434 = vmatprep.subr.mxu0 0.0
  %435 = vmatpush1.msra.mxu0 0.0
  %436 = vmatprep.subr.mxu0 0.0
  %437 = vmatpush1.msra.mxu0 0.0
  %438 = vmatprep.subr.mxu0 0.0
  %439 = vmatpush1.msra.mxu0 0.0
  %440 = vmatprep.subr.mxu0 0.0
  %441 = vmatpush1.msra.mxu0 0.0
  %442 = vmatprep.subr.mxu0 0.0
  %443 = vmatpush1.msra.mxu0 0.0
  %444 = vmatprep.subr.mxu0 0.0
  %445 = vmatpush1.msra.mxu0 0.0
  %446 = vmatprep.subr.mxu0 0.0
  %447 = vmatpush1.msra.mxu0 0.0
  %448 = vmatprep.subr.mxu0 0.0
  %449 = vmatpush1.msra.mxu0 0.0
  %450 = vmatprep.subr.mxu0 0.0
  %451 = vmatpush1.msra.mxu0 0.0
  %452 = vmatprep.mubr.f32.mxu0 0.0
  %453 = vmatmul.mubr.f32.gmra.mrb[0].mxu0 %v377
  %v454 = vpop.f32.mrb[0].mxu0
  %v455 = vadd.f32 0.0, %v454
  %v456 = vpop.f32.mrb[0].mxu0
  %457 = vmatprep.mubr.f32.mxu0 0.0
  %458 = vmatmul.mubr.f32.gmra.mrb[0].mxu0 %v380
  %v459 = vpop.f32.mrb[0].mxu0
  %v460 = vadd.f32 0.0, %v459
  %v461 = vpop.f32.mrb[0].mxu0
  %462 = vmatprep.mubr.f32.mxu0 0.0
  %463 = vmatmul.mubr.f32.gmra.mrb[0].mxu0 %v383
  %v464 = vpop.f32.mrb[0].mxu0
  %v465 = vadd.f32 0.0, %v464
  %v466 = vpop.f32.mrb[0].mxu0
  %467 = vmatprep.mubr.f32.mxu0 0.0
  %468 = vmatmul.mubr.f32.gmra.mrb[0].mxu0 %v386
  %v469 = vpop.f32.mrb[0].mxu0
  %v470 = vadd.f32 0.0, %v469
  %v471 = vpop.f32.mrb[0].mxu0
  %472 = vdwg.mxu0
  %vm473 = vcmask 261120
  %v475 = vsel %vm473, %v77, 0
  %v478 = vsel %vm473, %v78, 0
  %v481 = vsel %vm473, %v79, 0
  %v484 = vsel %vm473, %v80, 0
  %486 = vmatprep.subr.mxu0 0.0
  %487 = vmatpush1.msra.mxu0 %v455
  %488 = vmatprep.subr.mxu0 0.0
  %489 = vmatpush1.msra.mxu0 %v460
  %490 = vmatprep.subr.mxu0 0.0
  %491 = vmatpush1.msra.mxu0 %v465
  %492 = vmatprep.subr.mxu0 0.0
  %493 = vmatpush1.msra.mxu0 %v470
  %494 = vmatprep.subr.mxu0 0.0
  %495 = vmatpush1.msra.mxu0 0.0
  %496 = vmatprep.subr.mxu0 0.0
  %497 = vmatpush1.msra.mxu0 0.0
  %498 = vmatprep.subr.mxu0 0.0
  %499 = vmatpush1.msra.mxu0 0.0
  %500 = vmatprep.subr.mxu0 0.0
  %501 = vmatpush1.msra.mxu0 0.0
  %502 = vmatprep.subr.mxu0 0.0
  %503 = vmatpush1.msra.mxu0 0.0
  %504 = vmatprep.subr.mxu0 0.0
  %505 = vmatpush1.msra.mxu0 0.0
  %506 = vmatprep.subr.mxu0 0.0
  %507 = vmatpush1.msra.mxu0 0.0
  %508 = vmatprep.subr.mxu0 0.0
  %509 = vmatpush1.msra.mxu0 0.0
  %510 = vmatprep.subr.mxu0 0.0
  %511 = vmatpush1.msra.mxu0 0.0
  %512 = vmatprep.subr.mxu0 0.0
  %513 = vmatpush1.msra.mxu0 0.0
  %514 = vmatprep.subr.mxu0 0.0
  %515 = vmatpush1.msra.mxu0 0.0
  %516 = vmatprep.subr.mxu0 0.0
  %517 = vmatpush1.msra.mxu0 0.0
  %518 = vmatprep.subr.mxu0 0.0
  %519 = vmatpush1.msra.mxu0 0.0
  %520 = vmatprep.subr.mxu0 0.0
  %521 = vmatpush1.msra.mxu0 0.0
  %522 = vmatprep.subr.mxu0 0.0
  %523 = vmatpush1.msra.mxu0 0.0
  %524 = vmatprep.subr.mxu0 0.0
  %525 = vmatpush1.msra.mxu0 0.0
  %526 = vmatprep.subr.mxu0 0.0
  %527 = vmatpush1.msra.mxu0 0.0
  %528 = vmatprep.subr.mxu0 0.0
  %529 = vmatpush1.msra.mxu0 0.0
  %530 = vmatprep.subr.mxu0 0.0
  %531 = vmatpush1.msra.mxu0 0.0
  %532 = vmatprep.subr.mxu0 0.0
  %533 = vmatpush1.msra.mxu0 0.0
  %534 = vmatprep.subr.mxu0 0.0
  %535 = vmatpush1.msra.mxu0 0.0
  %536 = vmatprep.subr.mxu0 0.0
  %537 = vmatpush1.msra.mxu0 0.0
  %538 = vmatprep.subr.mxu0 0.0
  %539 = vmatpush1.msra.mxu0 0.0
  %540 = vmatprep.subr.mxu0 0.0
  %541 = vmatpush1.msra.mxu0 0.0
  %542 = vmatprep.subr.mxu0 0.0
  %543 = vmatpush1.msra.mxu0 0.0
  %544 = vmatprep.subr.mxu0 0.0
  %545 = vmatpush1.msra.mxu0 0.0
  %546 = vmatprep.subr.mxu0 0.0
  %547 = vmatpush1.msra.mxu0 0.0
  %548 = vmatprep.subr.mxu0 0.0
  %549 = vmatpush1.msra.mxu0 0.0
  %550 = vmatprep.mubr.f32.mxu0 0.0
  %551 = vmatmul.mubr.f32.gmra.mrb[0].mxu0 %v475
  %v552 = vpop.f32.mrb[0].mxu0
  %v553 = vadd.f32 0.0, %v552
  %v554 = vpop.f32.mrb[0].mxu0
  %555 = vmatprep.mubr.f32.mxu0 0.0
  %556 = vmatmul.mubr.f32.gmra.mrb[0].mxu0 %v478
  %v557 = vpop.f32.mrb[0].mxu0
  %v558 = vadd.f32 0.0, %v557
  %v559 = vpop.f32.mrb[0].mxu0
  %560 = vmatprep.mubr.f32.mxu0 0.0
  %561 = vmatmul.mubr.f32.gmra.mrb[0].mxu0 %v481
  %v562 = vpop.f32.mrb[0].mxu0
  %v563 = vadd.f32 0.0, %v562
  %v564 = vpop.f32.mrb[0].mxu0
  %565 = vmatprep.mubr.f32.mxu0 0.0
  %566 = vmatmul.mubr.f32.gmra.mrb[0].mxu0 %v484
  %v567 = vpop.f32.mrb[0].mxu0
  %v568 = vadd.f32 0.0, %v567
  %v569 = vpop.f32.mrb[0].mxu0
  %570 = vdwg.mxu0
  %v571 = vld [vmem:[%s8] sm:$0x3]
  %v572 = vlaneseq
  %v573 = vshrl.u32 %v572, 7
  %v574 = vsub.s32 0, %v573
  %v575 = vrot.slane %v571, %v574
  %v576 = vmul.f32 %v553, %v575
  %v577 = vmul.f32 %v558, %v575
  %v578 = vmul.f32 %v563, %v575
  %v579 = vmul.f32 %v568, %v575
  %v580 = vlaneseq
  %v581 = vshrl.u32 %v580, 7
  %v582 = vsub.s32 1, %v581
  %v583 = vrot.slane %v571, %v582
  %v584 = vadd.f32 %v576, %v583
  %v585 = vadd.f32 %v577, %v583
  %v586 = vadd.f32 %v578, %v583
  %v587 = vadd.f32 %v579, %v583
  %vm588 = vcmp.ge.f32.partialorder %v584, 0.0
  %vm589 = vcmp.ge.f32.partialorder %v585, 0.0
  %vm590 = vcmp.ge.f32.partialorder %v586, 0.0
  %vm591 = vcmp.ge.f32.partialorder %v587, 0.0
  %v592 = vmul.f32 %v584, 0.01
  %v593 = vmul.f32 %v585, 0.01
  %v594 = vmul.f32 %v586, 0.01
  %v595 = vmul.f32 %v587, 0.01
  %v596 = vsel %vm588, %v584, %v592
  %v597 = vsel %vm589, %v585, %v593
  %v598 = vsel %vm590, %v586, %v594
  %v599 = vsel %vm591, %v587, %v595
  %v600 = vld [vmem:[%s10] sm:$0x3]
  %v601 = vlaneseq
  %v602 = vshrl.u32 %v601, 7
  %v603 = vsub.s32 0, %v602
  %v604 = vrot.slane %v600, %v603
  %v605 = vmul.f32 %v596, %v604
  %v606 = vmul.f32 %v597, %v604
  %v607 = vmul.f32 %v598, %v604
  %v608 = vmul.f32 %v599, %v604
  %v609 = vlaneseq
  %v610 = vshrl.u32 %v609, 7
  %v611 = vsub.s32 1, %v610
  %v612 = vrot.slane %v600, %v611
  %v613 = vadd.f32 %v605, %v612
  %v614 = vadd.f32 %v606, %v612
  %v615 = vadd.f32 %v607, %v612
  %v616 = vadd.f32 %v608, %v612
  %v617 = vld [vmem:[%s9] sm:$0xff]
  %v618 = vld [vmem:[%s9 + $0x8] sm:$0xff]
  %v620 = vsel %vm375, %v613, 0
  %v623 = vsel %vm375, %v614, 0
  %v626 = vsel %vm375, %v615, 0
  %v629 = vsel %vm375, %v616, 0
  %631 = vmatprep.subr.mxu0 0.0
  %632 = vmatpush1.msra.mxu0 %v617
  %633 = vmatprep.subr.mxu0 0.0
  %634 = vmatpush1.msra.mxu0 %v618
  %635 = vmatprep.subr.mxu0 0.0
  %636 = vmatpush1.msra.mxu0 0.0
  %637 = vmatprep.subr.mxu0 0.0
  %638 = vmatpush1.msra.mxu0 0.0
  %639 = vmatprep.subr.mxu0 0.0
  %640 = vmatpush1.msra.mxu0 0.0
  %641 = vmatprep.subr.mxu0 0.0
  %642 = vmatpush1.msra.mxu0 0.0
  %643 = vmatprep.subr.mxu0 0.0
  %644 = vmatpush1.msra.mxu0 0.0
  %645 = vmatprep.subr.mxu0 0.0
  %646 = vmatpush1.msra.mxu0 0.0
  %647 = vmatprep.subr.mxu0 0.0
  %648 = vmatpush1.msra.mxu0 0.0
  %649 = vmatprep.subr.mxu0 0.0
  %650 = vmatpush1.msra.mxu0 0.0
  %651 = vmatprep.subr.mxu0 0.0
  %652 = vmatpush1.msra.mxu0 0.0
  %653 = vmatprep.subr.mxu0 0.0
  %654 = vmatpush1.msra.mxu0 0.0
  %655 = vmatprep.subr.mxu0 0.0
  %656 = vmatpush1.msra.mxu0 0.0
  %657 = vmatprep.subr.mxu0 0.0
  %658 = vmatpush1.msra.mxu0 0.0
  %659 = vmatprep.subr.mxu0 0.0
  %660 = vmatpush1.msra.mxu0 0.0
  %661 = vmatprep.subr.mxu0 0.0
  %662 = vmatpush1.msra.mxu0 0.0
  %663 = vmatprep.subr.mxu0 0.0
  %664 = vmatpush1.msra.mxu0 0.0
  %665 = vmatprep.subr.mxu0 0.0
  %666 = vmatpush1.msra.mxu0 0.0
  %667 = vmatprep.subr.mxu0 0.0
  %668 = vmatpush1.msra.mxu0 0.0
  %669 = vmatprep.subr.mxu0 0.0
  %670 = vmatpush1.msra.mxu0 0.0
  %671 = vmatprep.subr.mxu0 0.0
  %672 = vmatpush1.msra.mxu0 0.0
  %673 = vmatprep.subr.mxu0 0.0
  %674 = vmatpush1.msra.mxu0 0.0
  %675 = vmatprep.subr.mxu0 0.0
  %676 = vmatpush1.msra.mxu0 0.0
  %677 = vmatprep.subr.mxu0 0.0
  %678 = vmatpush1.msra.mxu0 0.0
  %679 = vmatprep.subr.mxu0 0.0
  %680 = vmatpush1.msra.mxu0 0.0
  %681 = vmatprep.subr.mxu0 0.0
  %682 = vmatpush1.msra.mxu0 0.0
  %683 = vmatprep.subr.mxu0 0.0
  %684 = vmatpush1.msra.mxu0 0.0
  %685 = vmatprep.subr.mxu0 0.0
  %686 = vmatpush1.msra.mxu0 0.0
  %687 = vmatprep.subr.mxu0 0.0
  %688 = vmatpush1.msra.mxu0 0.0
  %689 = vmatprep.subr.mxu0 0.0
  %690 = vmatpush1.msra.mxu0 0.0
  %691 = vmatprep.subr.mxu0 0.0
  %692 = vmatpush1.msra.mxu0 0.0
  %693 = vmatprep.subr.mxu0 0.0
  %694 = vmatpush1.msra.mxu0 0.0
  %695 = vmatprep.mubr.f32.mxu0 0.0
  %696 = vmatmul.mubr.f32.gmra.mrb[0].mxu0 %v620
  %v697 = vpop.f32.mrb[0].mxu0
  %v698 = vadd.f32 0.0, %v697
  %v699 = vpop.f32.mrb[0].mxu0
  %700 = vmatprep.mubr.f32.mxu0 0.0
  %701 = vmatmul.mubr.f32.gmra.mrb[0].mxu0 %v623
  %v702 = vpop.f32.mrb[0].mxu0
  %v703 = vadd.f32 0.0, %v702
  %v704 = vpop.f32.mrb[0].mxu0
  %705 = vmatprep.mubr.f32.mxu0 0.0
  %706 = vmatmul.mubr.f32.gmra.mrb[0].mxu0 %v626
  %v707 = vpop.f32.mrb[0].mxu0
  %v708 = vadd.f32 0.0, %v707
  %v709 = vpop.f32.mrb[0].mxu0
  %710 = vmatprep.mubr.f32.mxu0 0.0
  %711 = vmatmul.mubr.f32.gmra.mrb[0].mxu0 %v629
  %v712 = vpop.f32.mrb[0].mxu0
  %v713 = vadd.f32 0.0, %v712
  %v714 = vpop.f32.mrb[0].mxu0
  %715 = vdwg.mxu0
  %716 = vmatprep.subr.mxu0 0.0
  %717 = vmatpush1.msra.mxu0 %v698
  %718 = vmatprep.subr.mxu0 0.0
  %719 = vmatpush1.msra.mxu0 %v703
  %720 = vmatprep.subr.mxu0 0.0
  %721 = vmatpush1.msra.mxu0 %v708
  %722 = vmatprep.subr.mxu0 0.0
  %723 = vmatpush1.msra.mxu0 %v713
  %724 = vmatprep.subr.mxu0 0.0
  %725 = vmatpush1.msra.mxu0 0.0
  %726 = vmatprep.subr.mxu0 0.0
  %727 = vmatpush1.msra.mxu0 0.0
  %728 = vmatprep.subr.mxu0 0.0
  %729 = vmatpush1.msra.mxu0 0.0
  %730 = vmatprep.subr.mxu0 0.0
  %731 = vmatpush1.msra.mxu0 0.0
  %732 = vmatprep.subr.mxu0 0.0
  %733 = vmatpush1.msra.mxu0 0.0
  %734 = vmatprep.subr.mxu0 0.0
  %735 = vmatpush1.msra.mxu0 0.0
  %736 = vmatprep.subr.mxu0 0.0
  %737 = vmatpush1.msra.mxu0 0.0
  %738 = vmatprep.subr.mxu0 0.0
  %739 = vmatpush1.msra.mxu0 0.0
  %740 = vmatprep.subr.mxu0 0.0
  %741 = vmatpush1.msra.mxu0 0.0
  %742 = vmatprep.subr.mxu0 0.0
  %743 = vmatpush1.msra.mxu0 0.0
  %744 = vmatprep.subr.mxu0 0.0
  %745 = vmatpush1.msra.mxu0 0.0
  %746 = vmatprep.subr.mxu0 0.0
  %747 = vmatpush1.msra.mxu0 0.0
  %748 = vmatprep.subr.mxu0 0.0
  %749 = vmatpush1.msra.mxu0 0.0
  %750 = vmatprep.subr.mxu0 0.0
  %751 = vmatpush1.msra.mxu0 0.0
  %752 = vmatprep.subr.mxu0 0.0
  %753 = vmatpush1.msra.mxu0 0.0
  %754 = vmatprep.subr.mxu0 0.0
  %755 = vmatpush1.msra.mxu0 0.0
  %756 = vmatprep.subr.mxu0 0.0
  %757 = vmatpush1.msra.mxu0 0.0
  %758 = vmatprep.subr.mxu0 0.0
  %759 = vmatpush1.msra.mxu0 0.0
  %760 = vmatprep.subr.mxu0 0.0
  %761 = vmatpush1.msra.mxu0 0.0
  %762 = vmatprep.subr.mxu0 0.0
  %763 = vmatpush1.msra.mxu0 0.0
  %764 = vmatprep.subr.mxu0 0.0
  %765 = vmatpush1.msra.mxu0 0.0
  %766 = vmatprep.subr.mxu0 0.0
  %767 = vmatpush1.msra.mxu0 0.0
  %768 = vmatprep.subr.mxu0 0.0
  %769 = vmatpush1.msra.mxu0 0.0
  %770 = vmatprep.subr.mxu0 0.0
  %771 = vmatpush1.msra.mxu0 0.0
  %772 = vmatprep.subr.mxu0 0.0
  %773 = vmatpush1.msra.mxu0 0.0
  %774 = vmatprep.subr.mxu0 0.0
  %775 = vmatpush1.msra.mxu0 0.0
  %776 = vmatprep.subr.mxu0 0.0
  %777 = vmatpush1.msra.mxu0 0.0
  %778 = vmatprep.subr.mxu0 0.0
  %779 = vmatpush1.msra.mxu0 0.0
  %780 = vmatprep.mubr.f32.mxu0 0.0
  %781 = vmatmul.mubr.f32.gmra.mrb[0].mxu0 %v475
  %v782 = vpop.f32.mrb[0].mxu0
  %v783 = vadd.f32 0.0, %v782
  %v784 = vpop.f32.mrb[0].mxu0
  %785 = vmatprep.mubr.f32.mxu0 0.0
  %786 = vmatmul.mubr.f32.gmra.mrb[0].mxu0 %v478
  %v787 = vpop.f32.mrb[0].mxu0
  %v788 = vadd.f32 0.0, %v787
  %v789 = vpop.f32.mrb[0].mxu0
  %790 = vmatprep.mubr.f32.mxu0 0.0
  %791 = vmatmul.mubr.f32.gmra.mrb[0].mxu0 %v481
  %v792 = vpop.f32.mrb[0].mxu0
  %v793 = vadd.f32 0.0, %v792
  %v794 = vpop.f32.mrb[0].mxu0
  %795 = vmatprep.mubr.f32.mxu0 0.0
  %796 = vmatmul.mubr.f32.gmra.mrb[0].mxu0 %v484
  %v797 = vpop.f32.mrb[0].mxu0
  %v798 = vadd.f32 0.0, %v797
  %v799 = vpop.f32.mrb[0].mxu0
  %800 = vdwg.mxu0
  %v801 = vld [vmem:[%s11] sm:$0x3]
  %v802 = vlaneseq
  %v803 = vshrl.u32 %v802, 7
  %v804 = vsub.s32 0, %v803
  %v805 = vrot.slane %v801, %v804
  %v806 = vmul.f32 %v783, %v805
  %v807 = vmul.f32 %v788, %v805
  %v808 = vmul.f32 %v793, %v805
  %v809 = vmul.f32 %v798, %v805
  %v810 = vlaneseq
  %v811 = vshrl.u32 %v810, 7
  %v812 = vsub.s32 1, %v811
  %v813 = vrot.slane %v801, %v812
  %v814 = vadd.f32 %v806, %v813
  %v815 = vadd.f32 %v807, %v813
  %v816 = vadd.f32 %v808, %v813
  %v817 = vadd.f32 %v809, %v813
  %vm818 = vcmp.ge.f32.partialorder %v814, 0.0
  %vm819 = vcmp.ge.f32.partialorder %v815, 0.0
  %vm820 = vcmp.ge.f32.partialorder %v816, 0.0
  %vm821 = vcmp.ge.f32.partialorder %v817, 0.0
  %v822 = vmul.f32 %v814, 0.01
  %v823 = vmul.f32 %v815, 0.01
  %v824 = vmul.f32 %v816, 0.01
  %v825 = vmul.f32 %v817, 0.01
  %v826 = vsel %vm818, %v814, %v822
  %v827 = vsel %vm819, %v815, %v823
  %v828 = vsel %vm820, %v816, %v824
  %v829 = vsel %vm821, %v817, %v825
  %v830 = vadd.f32 %v352, %v826
  %v831 = vadd.f32 %v353, %v827
  %v832 = vadd.f32 %v354, %v828
  %v833 = vadd.f32 %v355, %v829
  %v834 = vld [vmem:[%s13] sm:$0x3]
  %v835 = vlaneseq
  %v836 = vshrl.u32 %v835, 7
  %v837 = vsub.s32 0, %v836
  %v838 = vrot.slane %v834, %v837
  %v839 = vmul.f32 %v830, %v838
  %v840 = vmul.f32 %v831, %v838
  %v841 = vmul.f32 %v832, %v838
  %v842 = vmul.f32 %v833, %v838
  %v843 = vlaneseq
  %v844 = vshrl.u32 %v843, 7
  %v845 = vsub.s32 1, %v844
  %v846 = vrot.slane %v834, %v845
  %v847 = vadd.f32 %v839, %v846
  %v848 = vadd.f32 %v840, %v846
  %v849 = vadd.f32 %v841, %v846
  %v850 = vadd.f32 %v842, %v846
  %v851 = vld [vmem:[%s12] sm:$0xff]
  %v852 = vld [vmem:[%s12 + $0x8] sm:$0xff]
  %v854 = vsel %vm375, %v847, 0
  %v857 = vsel %vm375, %v848, 0
  %v860 = vsel %vm375, %v849, 0
  %v863 = vsel %vm375, %v850, 0
  %865 = vmatprep.subr.mxu0 0.0
  %866 = vmatpush1.msra.mxu0 %v851
  %867 = vmatprep.subr.mxu0 0.0
  %868 = vmatpush1.msra.mxu0 %v852
  %869 = vmatprep.subr.mxu0 0.0
  %870 = vmatpush1.msra.mxu0 0.0
  %871 = vmatprep.subr.mxu0 0.0
  %872 = vmatpush1.msra.mxu0 0.0
  %873 = vmatprep.subr.mxu0 0.0
  %874 = vmatpush1.msra.mxu0 0.0
  %875 = vmatprep.subr.mxu0 0.0
  %876 = vmatpush1.msra.mxu0 0.0
  %877 = vmatprep.subr.mxu0 0.0
  %878 = vmatpush1.msra.mxu0 0.0
  %879 = vmatprep.subr.mxu0 0.0
  %880 = vmatpush1.msra.mxu0 0.0
  %881 = vmatprep.subr.mxu0 0.0
  %882 = vmatpush1.msra.mxu0 0.0
  %883 = vmatprep.subr.mxu0 0.0
  %884 = vmatpush1.msra.mxu0 0.0
  %885 = vmatprep.subr.mxu0 0.0
  %886 = vmatpush1.msra.mxu0 0.0
  %887 = vmatprep.subr.mxu0 0.0
  %888 = vmatpush1.msra.mxu0 0.0
  %889 = vmatprep.subr.mxu0 0.0
  %890 = vmatpush1.msra.mxu0 0.0
  %891 = vmatprep.subr.mxu0 0.0
  %892 = vmatpush1.msra.mxu0 0.0
  %893 = vmatprep.subr.mxu0 0.0
  %894 = vmatpush1.msra.mxu0 0.0
  %895 = vmatprep.subr.mxu0 0.0
  %896 = vmatpush1.msra.mxu0 0.0
  %897 = vmatprep.subr.mxu0 0.0
  %898 = vmatpush1.msra.mxu0 0.0
  %899 = vmatprep.subr.mxu0 0.0
  %900 = vmatpush1.msra.mxu0 0.0
  %901 = vmatprep.subr.mxu0 0.0
  %902 = vmatpush1.msra.mxu0 0.0
  %903 = vmatprep.subr.mxu0 0.0
  %904 = vmatpush1.msra.mxu0 0.0
  %905 = vmatprep.subr.mxu0 0.0
  %906 = vmatpush1.msra.mxu0 0.0
  %907 = vmatprep.subr.mxu0 0.0
  %908 = vmatpush1.msra.mxu0 0.0
  %909 = vmatprep.subr.mxu0 0.0
  %910 = vmatpush1.msra.mxu0 0.0
  %911 = vmatprep.subr.mxu0 0.0
  %912 = vmatpush1.msra.mxu0 0.0
  %913 = vmatprep.subr.mxu0 0.0
  %914 = vmatpush1.msra.mxu0 0.0
  %915 = vmatprep.subr.mxu0 0.0
  %916 = vmatpush1.msra.mxu0 0.0
  %917 = vmatprep.subr.mxu0 0.0
  %918 = vmatpush1.msra.mxu0 0.0
  %919 = vmatprep.subr.mxu0 0.0
  %920 = vmatpush1.msra.mxu0 0.0
  %921 = vmatprep.subr.mxu0 0.0
  %922 = vmatpush1.msra.mxu0 0.0
  %923 = vmatprep.subr.mxu0 0.0
  %924 = vmatpush1.msra.mxu0 0.0
  %925 = vmatprep.subr.mxu0 0.0
  %926 = vmatpush1.msra.mxu0 0.0
  %927 = vmatprep.subr.mxu0 0.0
  %928 = vmatpush1.msra.mxu0 0.0
  %929 = vmatprep.mubr.f32.mxu0 0.0
  %930 = vmatmul.mubr.f32.gmra.mrb[0].mxu0 %v854
  %v931 = vpop.f32.mrb[0].mxu0
  %v932 = vadd.f32 0.0, %v931
  %v933 = vpop.f32.mrb[0].mxu0
  %934 = vmatprep.mubr.f32.mxu0 0.0
  %935 = vmatmul.mubr.f32.gmra.mrb[0].mxu0 %v857
  %v936 = vpop.f32.mrb[0].mxu0
  %v937 = vadd.f32 0.0, %v936
  %v938 = vpop.f32.mrb[0].mxu0
  %939 = vmatprep.mubr.f32.mxu0 0.0
  %940 = vmatmul.mubr.f32.gmra.mrb[0].mxu0 %v860
  %v941 = vpop.f32.mrb[0].mxu0
  %v942 = vadd.f32 0.0, %v941
  %v943 = vpop.f32.mrb[0].mxu0
  %944 = vmatprep.mubr.f32.mxu0 0.0
  %945 = vmatmul.mubr.f32.gmra.mrb[0].mxu0 %v863
  %v946 = vpop.f32.mrb[0].mxu0
  %v947 = vadd.f32 0.0, %v946
  %v948 = vpop.f32.mrb[0].mxu0
  %949 = vdwg.mxu0
  %950 = vmatprep.subr.mxu0 0.0
  %951 = vmatpush1.msra.mxu0 %v932
  %952 = vmatprep.subr.mxu0 0.0
  %953 = vmatpush1.msra.mxu0 %v937
  %954 = vmatprep.subr.mxu0 0.0
  %955 = vmatpush1.msra.mxu0 %v942
  %956 = vmatprep.subr.mxu0 0.0
  %957 = vmatpush1.msra.mxu0 %v947
  %958 = vmatprep.subr.mxu0 0.0
  %959 = vmatpush1.msra.mxu0 0.0
  %960 = vmatprep.subr.mxu0 0.0
  %961 = vmatpush1.msra.mxu0 0.0
  %962 = vmatprep.subr.mxu0 0.0
  %963 = vmatpush1.msra.mxu0 0.0
  %964 = vmatprep.subr.mxu0 0.0
  %965 = vmatpush1.msra.mxu0 0.0
  %966 = vmatprep.subr.mxu0 0.0
  %967 = vmatpush1.msra.mxu0 0.0
  %968 = vmatprep.subr.mxu0 0.0
  %969 = vmatpush1.msra.mxu0 0.0
  %970 = vmatprep.subr.mxu0 0.0
  %971 = vmatpush1.msra.mxu0 0.0
  %972 = vmatprep.subr.mxu0 0.0
  %973 = vmatpush1.msra.mxu0 0.0
  %974 = vmatprep.subr.mxu0 0.0
  %975 = vmatpush1.msra.mxu0 0.0
  %976 = vmatprep.subr.mxu0 0.0
  %977 = vmatpush1.msra.mxu0 0.0
  %978 = vmatprep.subr.mxu0 0.0
  %979 = vmatpush1.msra.mxu0 0.0
  %980 = vmatprep.subr.mxu0 0.0
  %981 = vmatpush1.msra.mxu0 0.0
  %982 = vmatprep.subr.mxu0 0.0
  %983 = vmatpush1.msra.mxu0 0.0
  %984 = vmatprep.subr.mxu0 0.0
  %985 = vmatpush1.msra.mxu0 0.0
  %986 = vmatprep.subr.mxu0 0.0
  %987 = vmatpush1.msra.mxu0 0.0
  %988 = vmatprep.subr.mxu0 0.0
  %989 = vmatpush1.msra.mxu0 0.0
  %990 = vmatprep.subr.mxu0 0.0
  %991 = vmatpush1.msra.mxu0 0.0
  %992 = vmatprep.subr.mxu0 0.0
  %993 = vmatpush1.msra.mxu0 0.0
  %994 = vmatprep.subr.mxu0 0.0
  %995 = vmatpush1.msra.mxu0 0.0
  %996 = vmatprep.subr.mxu0 0.0
  %997 = vmatpush1.msra.mxu0 0.0
  %998 = vmatprep.subr.mxu0 0.0
  %999 = vmatpush1.msra.mxu0 0.0
  %1000 = vmatprep.subr.mxu0 0.0
  %1001 = vmatpush1.msra.mxu0 0.0
  %1002 = vmatprep.subr.mxu0 0.0
  %1003 = vmatpush1.msra.mxu0 0.0
  %1004 = vmatprep.subr.mxu0 0.0
  %1005 = vmatpush1.msra.mxu0 0.0
  %1006 = vmatprep.subr.mxu0 0.0
  %1007 = vmatpush1.msra.mxu0 0.0
  %1008 = vmatprep.subr.mxu0 0.0
  %1009 = vmatpush1.msra.mxu0 0.0
  %1010 = vmatprep.subr.mxu0 0.0
  %1011 = vmatpush1.msra.mxu0 0.0
  %1012 = vmatprep.subr.mxu0 0.0
  %1013 = vmatpush1.msra.mxu0 0.0
  %1014 = vmatprep.mubr.f32.mxu0 0.0
  %1015 = vmatmul.mubr.f32.gmra.mrb[0].mxu0 %v475
  %v1016 = vpop.f32.mrb[0].mxu0
  %v1017 = vadd.f32 0.0, %v1016
  %v1018 = vpop.f32.mrb[0].mxu0
  %1019 = vmatprep.mubr.f32.mxu0 0.0
  %1020 = vmatmul.mubr.f32.gmra.mrb[0].mxu0 %v478
  %v1021 = vpop.f32.mrb[0].mxu0
  %v1022 = vadd.f32 0.0, %v1021
  %v1023 = vpop.f32.mrb[0].mxu0
  %1024 = vmatprep.mubr.f32.mxu0 0.0
  %1025 = vmatmul.mubr.f32.gmra.mrb[0].mxu0 %v481
  %v1026 = vpop.f32.mrb[0].mxu0
  %v1027 = vadd.f32 0.0, %v1026
  %v1028 = vpop.f32.mrb[0].mxu0
  %1029 = vmatprep.mubr.f32.mxu0 0.0
  %1030 = vmatmul.mubr.f32.gmra.mrb[0].mxu0 %v484
  %v1031 = vpop.f32.mrb[0].mxu0
  %v1032 = vadd.f32 0.0, %v1031
  %v1033 = vpop.f32.mrb[0].mxu0
  %1034 = vdwg.mxu0
  %v1035 = vld [vmem:[%s14] sm:$0x3]
  %v1036 = vlaneseq
  %v1037 = vshrl.u32 %v1036, 7
  %v1038 = vsub.s32 0, %v1037
  %v1039 = vrot.slane %v1035, %v1038
  %v1040 = vmul.f32 %v1017, %v1039
  %v1041 = vmul.f32 %v1022, %v1039
  %v1042 = vmul.f32 %v1027, %v1039
  %v1043 = vmul.f32 %v1032, %v1039
  %v1044 = vlaneseq
  %v1045 = vshrl.u32 %v1044, 7
  %v1046 = vsub.s32 1, %v1045
  %v1047 = vrot.slane %v1035, %v1046
  %v1048 = vadd.f32 %v1040, %v1047
  %v1049 = vadd.f32 %v1041, %v1047
  %v1050 = vadd.f32 %v1042, %v1047
  %v1051 = vadd.f32 %v1043, %v1047
  %vm1052 = vcmp.ge.f32.partialorder %v1048, 0.0
  %vm1053 = vcmp.ge.f32.partialorder %v1049, 0.0
  %vm1054 = vcmp.ge.f32.partialorder %v1050, 0.0
  %vm1055 = vcmp.ge.f32.partialorder %v1051, 0.0
  %v1056 = vmul.f32 %v1048, 0.01
  %v1057 = vmul.f32 %v1049, 0.01
  %v1058 = vmul.f32 %v1050, 0.01
  %v1059 = vmul.f32 %v1051, 0.01
  %v1060 = vsel %vm1052, %v1048, %v1056
  %v1061 = vsel %vm1053, %v1049, %v1057
  %v1062 = vsel %vm1054, %v1050, %v1058
  %v1063 = vsel %vm1055, %v1051, %v1059
  %v1064 = vld [vmem:[%s16] sm:$0x3]
  %v1065 = vlaneseq
  %v1066 = vshrl.u32 %v1065, 7
  %v1067 = vsub.s32 0, %v1066
  %v1068 = vrot.slane %v1064, %v1067
  %v1069 = vmul.f32 %v1060, %v1068
  %v1070 = vmul.f32 %v1061, %v1068
  %v1071 = vmul.f32 %v1062, %v1068
  %v1072 = vmul.f32 %v1063, %v1068
  %v1073 = vlaneseq
  %v1074 = vshrl.u32 %v1073, 7
  %v1075 = vsub.s32 1, %v1074
  %v1076 = vrot.slane %v1064, %v1075
  %v1077 = vadd.f32 %v1069, %v1076
  %v1078 = vadd.f32 %v1070, %v1076
  %v1079 = vadd.f32 %v1071, %v1076
  %v1080 = vadd.f32 %v1072, %v1076
  %v1081 = vld [vmem:[%s15] sm:$0xff]
  %v1082 = vld [vmem:[%s15 + $0x8] sm:$0xff]
  %v1084 = vsel %vm375, %v1077, 0
  %v1087 = vsel %vm375, %v1078, 0
  %v1090 = vsel %vm375, %v1079, 0
  %v1093 = vsel %vm375, %v1080, 0
  %1095 = vmatprep.subr.mxu0 0.0
  %1096 = vmatpush1.msra.mxu0 %v1081
  %1097 = vmatprep.subr.mxu0 0.0
  %1098 = vmatpush1.msra.mxu0 %v1082
  %1099 = vmatprep.subr.mxu0 0.0
  %1100 = vmatpush1.msra.mxu0 0.0
  %1101 = vmatprep.subr.mxu0 0.0
  %1102 = vmatpush1.msra.mxu0 0.0
  %1103 = vmatprep.subr.mxu0 0.0
  %1104 = vmatpush1.msra.mxu0 0.0
  %1105 = vmatprep.subr.mxu0 0.0
  %1106 = vmatpush1.msra.mxu0 0.0
  %1107 = vmatprep.subr.mxu0 0.0
  %1108 = vmatpush1.msra.mxu0 0.0
  %1109 = vmatprep.subr.mxu0 0.0
  %1110 = vmatpush1.msra.mxu0 0.0
  %1111 = vmatprep.subr.mxu0 0.0
  %1112 = vmatpush1.msra.mxu0 0.0
  %1113 = vmatprep.subr.mxu0 0.0
  %1114 = vmatpush1.msra.mxu0 0.0
  %1115 = vmatprep.subr.mxu0 0.0
  %1116 = vmatpush1.msra.mxu0 0.0
  %1117 = vmatprep.subr.mxu0 0.0
  %1118 = vmatpush1.msra.mxu0 0.0
  %1119 = vmatprep.subr.mxu0 0.0
  %1120 = vmatpush1.msra.mxu0 0.0
  %1121 = vmatprep.subr.mxu0 0.0
  %1122 = vmatpush1.msra.mxu0 0.0
  %1123 = vmatprep.subr.mxu0 0.0
  %1124 = vmatpush1.msra.mxu0 0.0
  %1125 = vmatprep.subr.mxu0 0.0
  %1126 = vmatpush1.msra.mxu0 0.0
  %1127 = vmatprep.subr.mxu0 0.0
  %1128 = vmatpush1.msra.mxu0 0.0
  %1129 = vmatprep.subr.mxu0 0.0
  %1130 = vmatpush1.msra.mxu0 0.0
  %1131 = vmatprep.subr.mxu0 0.0
  %1132 = vmatpush1.msra.mxu0 0.0
  %1133 = vmatprep.subr.mxu0 0.0
  %1134 = vmatpush1.msra.mxu0 0.0
  %1135 = vmatprep.subr.mxu0 0.0
  %1136 = vmatpush1.msra.mxu0 0.0
  %1137 = vmatprep.subr.mxu0 0.0
  %1138 = vmatpush1.msra.mxu0 0.0
  %1139 = vmatprep.subr.mxu0 0.0
  %1140 = vmatpush1.msra.mxu0 0.0
  %1141 = vmatprep.subr.mxu0 0.0
  %1142 = vmatpush1.msra.mxu0 0.0
  %1143 = vmatprep.subr.mxu0 0.0
  %1144 = vmatpush1.msra.mxu0 0.0
  %1145 = vmatprep.subr.mxu0 0.0
  %1146 = vmatpush1.msra.mxu0 0.0
  %1147 = vmatprep.subr.mxu0 0.0
  %1148 = vmatpush1.msra.mxu0 0.0
  %1149 = vmatprep.subr.mxu0 0.0
  %1150 = vmatpush1.msra.mxu0 0.0
  %1151 = vmatprep.subr.mxu0 0.0
  %1152 = vmatpush1.msra.mxu0 0.0
  %1153 = vmatprep.subr.mxu0 0.0
  %1154 = vmatpush1.msra.mxu0 0.0
  %1155 = vmatprep.subr.mxu0 0.0
  %1156 = vmatpush1.msra.mxu0 0.0
  %1157 = vmatprep.subr.mxu0 0.0
  %1158 = vmatpush1.msra.mxu0 0.0
  %1159 = vmatprep.mubr.f32.mxu0 0.0
  %1160 = vmatmul.mubr.f32.gmra.mrb[0].mxu0 %v1084
  %v1161 = vpop.f32.mrb[0].mxu0
  %v1162 = vadd.f32 0.0, %v1161
  %v1163 = vpop.f32.mrb[0].mxu0
  %1164 = vmatprep.mubr.f32.mxu0 0.0
  %1165 = vmatmul.mubr.f32.gmra.mrb[0].mxu0 %v1087
  %v1166 = vpop.f32.mrb[0].mxu0
  %v1167 = vadd.f32 0.0, %v1166
  %v1168 = vpop.f32.mrb[0].mxu0
  %1169 = vmatprep.mubr.f32.mxu0 0.0
  %1170 = vmatmul.mubr.f32.gmra.mrb[0].mxu0 %v1090
  %v1171 = vpop.f32.mrb[0].mxu0
  %v1172 = vadd.f32 0.0, %v1171
  %v1173 = vpop.f32.mrb[0].mxu0
  %1174 = vmatprep.mubr.f32.mxu0 0.0
  %1175 = vmatmul.mubr.f32.gmra.mrb[0].mxu0 %v1093
  %v1176 = vpop.f32.mrb[0].mxu0
  %v1177 = vadd.f32 0.0, %v1176
  %v1178 = vpop.f32.mrb[0].mxu0
  %1179 = vdwg.mxu0
  %1180 = vmatprep.subr.mxu0 0.0
  %1181 = vmatpush1.msra.mxu0 %v1162
  %1182 = vmatprep.subr.mxu0 0.0
  %1183 = vmatpush1.msra.mxu0 %v1167
  %1184 = vmatprep.subr.mxu0 0.0
  %1185 = vmatpush1.msra.mxu0 %v1172
  %1186 = vmatprep.subr.mxu0 0.0
  %1187 = vmatpush1.msra.mxu0 %v1177
  %1188 = vmatprep.subr.mxu0 0.0
  %1189 = vmatpush1.msra.mxu0 0.0
  %1190 = vmatprep.subr.mxu0 0.0
  %1191 = vmatpush1.msra.mxu0 0.0
  %1192 = vmatprep.subr.mxu0 0.0
  %1193 = vmatpush1.msra.mxu0 0.0
  %1194 = vmatprep.subr.mxu0 0.0
  %1195 = vmatpush1.msra.mxu0 0.0
  %1196 = vmatprep.subr.mxu0 0.0
  %1197 = vmatpush1.msra.mxu0 0.0
  %1198 = vmatprep.subr.mxu0 0.0
  %1199 = vmatpush1.msra.mxu0 0.0
  %1200 = vmatprep.subr.mxu0 0.0
  %1201 = vmatpush1.msra.mxu0 0.0
  %1202 = vmatprep.subr.mxu0 0.0
  %1203 = vmatpush1.msra.mxu0 0.0
  %1204 = vmatprep.subr.mxu0 0.0
  %1205 = vmatpush1.msra.mxu0 0.0
  %1206 = vmatprep.subr.mxu0 0.0
  %1207 = vmatpush1.msra.mxu0 0.0
  %1208 = vmatprep.subr.mxu0 0.0
  %1209 = vmatpush1.msra.mxu0 0.0
  %1210 = vmatprep.subr.mxu0 0.0
  %1211 = vmatpush1.msra.mxu0 0.0
  %1212 = vmatprep.subr.mxu0 0.0
  %1213 = vmatpush1.msra.mxu0 0.0
  %1214 = vmatprep.subr.mxu0 0.0
  %1215 = vmatpush1.msra.mxu0 0.0
  %1216 = vmatprep.subr.mxu0 0.0
  %1217 = vmatpush1.msra.mxu0 0.0
  %1218 = vmatprep.subr.mxu0 0.0
  %1219 = vmatpush1.msra.mxu0 0.0
  %1220 = vmatprep.subr.mxu0 0.0
  %1221 = vmatpush1.msra.mxu0 0.0
  %1222 = vmatprep.subr.mxu0 0.0
  %1223 = vmatpush1.msra.mxu0 0.0
  %1224 = vmatprep.subr.mxu0 0.0
  %1225 = vmatpush1.msra.mxu0 0.0
  %1226 = vmatprep.subr.mxu0 0.0
  %1227 = vmatpush1.msra.mxu0 0.0
  %1228 = vmatprep.subr.mxu0 0.0
  %1229 = vmatpush1.msra.mxu0 0.0
  %1230 = vmatprep.subr.mxu0 0.0
  %1231 = vmatpush1.msra.mxu0 0.0
  %1232 = vmatprep.subr.mxu0 0.0
  %1233 = vmatpush1.msra.mxu0 0.0
  %1234 = vmatprep.subr.mxu0 0.0
  %1235 = vmatpush1.msra.mxu0 0.0
  %1236 = vmatprep.subr.mxu0 0.0
  %1237 = vmatpush1.msra.mxu0 0.0
  %1238 = vmatprep.subr.mxu0 0.0
  %1239 = vmatpush1.msra.mxu0 0.0
  %1240 = vmatprep.subr.mxu0 0.0
  %1241 = vmatpush1.msra.mxu0 0.0
  %1242 = vmatprep.subr.mxu0 0.0
  %1243 = vmatpush1.msra.mxu0 0.0
  %1244 = vmatprep.mubr.f32.mxu0 0.0
  %1245 = vmatmul.mubr.f32.gmra.mrb[0].mxu0 %v475
  %v1246 = vpop.f32.mrb[0].mxu0
  %v1247 = vadd.f32 0.0, %v1246
  %v1248 = vpop.f32.mrb[0].mxu0
  %1249 = vmatprep.mubr.f32.mxu0 0.0
  %1250 = vmatmul.mubr.f32.gmra.mrb[0].mxu0 %v478
  %v1251 = vpop.f32.mrb[0].mxu0
  %v1252 = vadd.f32 0.0, %v1251
  %v1253 = vpop.f32.mrb[0].mxu0
  %1254 = vmatprep.mubr.f32.mxu0 0.0
  %1255 = vmatmul.mubr.f32.gmra.mrb[0].mxu0 %v481
  %v1256 = vpop.f32.mrb[0].mxu0
  %v1257 = vadd.f32 0.0, %v1256
  %v1258 = vpop.f32.mrb[0].mxu0
  %1259 = vmatprep.mubr.f32.mxu0 0.0
  %1260 = vmatmul.mubr.f32.gmra.mrb[0].mxu0 %v484
  %v1261 = vpop.f32.mrb[0].mxu0
  %v1262 = vadd.f32 0.0, %v1261
  %v1263 = vpop.f32.mrb[0].mxu0
  %1264 = vdwg.mxu0
  %v1265 = vld [vmem:[%s17] sm:$0x3]
  %v1266 = vlaneseq
  %v1267 = vshrl.u32 %v1266, 7
  %v1268 = vsub.s32 0, %v1267
  %v1269 = vrot.slane %v1265, %v1268
  %v1270 = vmul.f32 %v1247, %v1269
  %v1271 = vmul.f32 %v1252, %v1269
  %v1272 = vmul.f32 %v1257, %v1269
  %v1273 = vmul.f32 %v1262, %v1269
  %v1274 = vlaneseq
  %v1275 = vshrl.u32 %v1274, 7
  %v1276 = vsub.s32 1, %v1275
  %v1277 = vrot.slane %v1265, %v1276
  %v1278 = vadd.f32 %v1270, %v1277
  %v1279 = vadd.f32 %v1271, %v1277
  %v1280 = vadd.f32 %v1272, %v1277
  %v1281 = vadd.f32 %v1273, %v1277
  %vm1282 = vcmp.ge.f32.partialorder %v1278, 0.0
  %vm1283 = vcmp.ge.f32.partialorder %v1279, 0.0
  %vm1284 = vcmp.ge.f32.partialorder %v1280, 0.0
  %vm1285 = vcmp.ge.f32.partialorder %v1281, 0.0
  %v1286 = vmul.f32 %v1278, 0.01
  %v1287 = vmul.f32 %v1279, 0.01
  %v1288 = vmul.f32 %v1280, 0.01
  %v1289 = vmul.f32 %v1281, 0.01
  %v1290 = vsel %vm1282, %v1278, %v1286
  %v1291 = vsel %vm1283, %v1279, %v1287
  %v1292 = vsel %vm1284, %v1280, %v1288
  %v1293 = vsel %vm1285, %v1281, %v1289
  %v1294 = vld [vmem:[%s18] sm:$0xff]
  %v1295 = vld [vmem:[%s18 + $0x8] sm:$0xff]
  %v1297 = vsel %vm375, %v335, 0
  %v1300 = vsel %vm375, %v336, 0
  %v1303 = vsel %vm375, %v337, 0
  %v1306 = vsel %vm375, %v338, 0
  %1308 = vmatprep.subr.mxu0 0.0
  %1309 = vmatpush1.msra.mxu0 %v1294
  %1310 = vmatprep.subr.mxu0 0.0
  %1311 = vmatpush1.msra.mxu0 %v1295
  %1312 = vmatprep.subr.mxu0 0.0
  %1313 = vmatpush1.msra.mxu0 0.0
  %1314 = vmatprep.subr.mxu0 0.0
  %1315 = vmatpush1.msra.mxu0 0.0
  %1316 = vmatprep.subr.mxu0 0.0
  %1317 = vmatpush1.msra.mxu0 0.0
  %1318 = vmatprep.subr.mxu0 0.0
  %1319 = vmatpush1.msra.mxu0 0.0
  %1320 = vmatprep.subr.mxu0 0.0
  %1321 = vmatpush1.msra.mxu0 0.0
  %1322 = vmatprep.subr.mxu0 0.0
  %1323 = vmatpush1.msra.mxu0 0.0
  %1324 = vmatprep.subr.mxu0 0.0
  %1325 = vmatpush1.msra.mxu0 0.0
  %1326 = vmatprep.subr.mxu0 0.0
  %1327 = vmatpush1.msra.mxu0 0.0
  %1328 = vmatprep.subr.mxu0 0.0
  %1329 = vmatpush1.msra.mxu0 0.0
  %1330 = vmatprep.subr.mxu0 0.0
  %1331 = vmatpush1.msra.mxu0 0.0
  %1332 = vmatprep.subr.mxu0 0.0
  %1333 = vmatpush1.msra.mxu0 0.0
  %1334 = vmatprep.subr.mxu0 0.0
  %1335 = vmatpush1.msra.mxu0 0.0
  %1336 = vmatprep.subr.mxu0 0.0
  %1337 = vmatpush1.msra.mxu0 0.0
  %1338 = vmatprep.subr.mxu0 0.0
  %1339 = vmatpush1.msra.mxu0 0.0
  %1340 = vmatprep.subr.mxu0 0.0
  %1341 = vmatpush1.msra.mxu0 0.0
  %1342 = vmatprep.subr.mxu0 0.0
  %1343 = vmatpush1.msra.mxu0 0.0
  %1344 = vmatprep.subr.mxu0 0.0
  %1345 = vmatpush1.msra.mxu0 0.0
  %1346 = vmatprep.subr.mxu0 0.0
  %1347 = vmatpush1.msra.mxu0 0.0
  %1348 = vmatprep.subr.mxu0 0.0
  %1349 = vmatpush1.msra.mxu0 0.0
  %1350 = vmatprep.subr.mxu0 0.0
  %1351 = vmatpush1.msra.mxu0 0.0
  %1352 = vmatprep.subr.mxu0 0.0
  %1353 = vmatpush1.msra.mxu0 0.0
  %1354 = vmatprep.subr.mxu0 0.0
  %1355 = vmatpush1.msra.mxu0 0.0
  %1356 = vmatprep.subr.mxu0 0.0
  %1357 = vmatpush1.msra.mxu0 0.0
  %1358 = vmatprep.subr.mxu0 0.0
  %1359 = vmatpush1.msra.mxu0 0.0
  %1360 = vmatprep.subr.mxu0 0.0
  %1361 = vmatpush1.msra.mxu0 0.0
  %1362 = vmatprep.subr.mxu0 0.0
  %1363 = vmatpush1.msra.mxu0 0.0
  %1364 = vmatprep.subr.mxu0 0.0
  %1365 = vmatpush1.msra.mxu0 0.0
  %1366 = vmatprep.subr.mxu0 0.0
  %1367 = vmatpush1.msra.mxu0 0.0
  %1368 = vmatprep.subr.mxu0 0.0
  %1369 = vmatpush1.msra.mxu0 0.0
  %1370 = vmatprep.subr.mxu0 0.0
  %1371 = vmatpush1.msra.mxu0 0.0
  %1372 = vmatprep.mubr.f32.mxu0 0.0
  %1373 = vmatmul.mubr.f32.gmra.mrb[0].mxu0 %v1297
  %v1374 = vpop.f32.mrb[0].mxu0
  %v1375 = vadd.f32 0.0, %v1374
  %v1376 = vpop.f32.mrb[0].mxu0
  %1377 = vmatprep.mubr.f32.mxu0 0.0
  %1378 = vmatmul.mubr.f32.gmra.mrb[0].mxu0 %v1300
  %v1379 = vpop.f32.mrb[0].mxu0
  %v1380 = vadd.f32 0.0, %v1379
  %v1381 = vpop.f32.mrb[0].mxu0
  %1382 = vmatprep.mubr.f32.mxu0 0.0
  %1383 = vmatmul.mubr.f32.gmra.mrb[0].mxu0 %v1303
  %v1384 = vpop.f32.mrb[0].mxu0
  %v1385 = vadd.f32 0.0, %v1384
  %v1386 = vpop.f32.mrb[0].mxu0
  %1387 = vmatprep.mubr.f32.mxu0 0.0
  %1388 = vmatmul.mubr.f32.gmra.mrb[0].mxu0 %v1306
  %v1389 = vpop.f32.mrb[0].mxu0
  %v1390 = vadd.f32 0.0, %v1389
  %v1391 = vpop.f32.mrb[0].mxu0
  %1392 = vdwg.mxu0
  %v1393 = vld [vmem:[%s19] sm:$0x3]
  %v1394 = vlaneseq
  %v1395 = vshrl.u32 %v1394, 7
  %v1396 = vsub.s32 0, %v1395
  %v1397 = vrot.slane %v1393, %v1396
  %v1398 = vmul.f32 %v1375, %v1397
  %v1399 = vmul.f32 %v1380, %v1397
  %v1400 = vmul.f32 %v1385, %v1397
  %v1401 = vmul.f32 %v1390, %v1397
  %v1402 = vsel %vm375, %v1398, 0.0
  %1403 = vadd.xlane.f32.xlu0 %v1402
  %v1404 = vpop.xlane.xlu0 %1403
  %v1405 = vsel %vm375, %v1399, 0.0
  %1406 = vadd.xlane.f32.xlu0 %v1405
  %v1407 = vpop.xlane.xlu0 %1406
  %v1408 = vsel %vm375, %v1400, 0.0
  %1409 = vadd.xlane.f32.xlu0 %v1408
  %v1410 = vpop.xlane.xlu0 %1409
  %v1411 = vsel %vm375, %v1401, 0.0
  %1412 = vadd.xlane.f32.xlu0 %v1411
  %v1413 = vpop.xlane.xlu0 %1412
  %v1415 = vrot.slane %v1393, 1
  %v1416 = vsel %vm375, %v1415, 0
  %v1419 = vsel %vm375, %v1375, 0
  %v1422 = vsel %vm375, %v1380, 0
  %v1425 = vsel %vm375, %v1385, 0
  %v1428 = vsel %vm375, %v1390, 0
  %1430 = vmatprep.subr.mxu0 0.0
  %1431 = vmatpush1.xpose.msra.mxu0 %v1419
  %1432 = vmatprep.subr.mxu0 0.0
  %1433 = vmatpush1.xpose.msra.mxu0 %v1422
  %1434 = vmatprep.subr.mxu0 0.0
  %1435 = vmatpush1.xpose.msra.mxu0 %v1425
  %1436 = vmatprep.subr.mxu0 0.0
  %1437 = vmatpush1.xpose.msra.mxu0 %v1428
  %1438 = vmatprep.subr.mxu0 0.0
  %1439 = vmatpush1.xpose.msra.mxu0 0.0
  %1440 = vmatprep.subr.mxu0 0.0
  %1441 = vmatpush1.xpose.msra.mxu0 0.0
  %1442 = vmatprep.subr.mxu0 0.0
  %1443 = vmatpush1.xpose.msra.mxu0 0.0
  %1444 = vmatprep.subr.mxu0 0.0
  %1445 = vmatpush1.xpose.msra.mxu0 0.0
  %1446 = vmatprep.subr.mxu0 0.0
  %1447 = vmatpush1.xpose.msra.mxu0 0.0
  %1448 = vmatprep.subr.mxu0 0.0
  %1449 = vmatpush1.xpose.msra.mxu0 0.0
  %1450 = vmatprep.subr.mxu0 0.0
  %1451 = vmatpush1.xpose.msra.mxu0 0.0
  %1452 = vmatprep.subr.mxu0 0.0
  %1453 = vmatpush1.xpose.msra.mxu0 0.0
  %1454 = vmatprep.subr.mxu0 0.0
  %1455 = vmatpush1.xpose.msra.mxu0 0.0
  %1456 = vmatprep.subr.mxu0 0.0
  %1457 = vmatpush1.xpose.msra.mxu0 0.0
  %1458 = vmatprep.subr.mxu0 0.0
  %1459 = vmatpush1.xpose.msra.mxu0 0.0
  %1460 = vmatprep.subr.mxu0 0.0
  %1461 = vmatpush1.xpose.msra.mxu0 0.0
  %1462 = vmatprep.subr.mxu0 0.0
  %1463 = vmatpush1.xpose.msra.mxu0 0.0
  %1464 = vmatprep.subr.mxu0 0.0
  %1465 = vmatpush1.xpose.msra.mxu0 0.0
  %1466 = vmatprep.subr.mxu0 0.0
  %1467 = vmatpush1.xpose.msra.mxu0 0.0
  %1468 = vmatprep.subr.mxu0 0.0
  %1469 = vmatpush1.xpose.msra.mxu0 0.0
  %1470 = vmatprep.subr.mxu0 0.0
  %1471 = vmatpush1.xpose.msra.mxu0 0.0
  %1472 = vmatprep.subr.mxu0 0.0
  %1473 = vmatpush1.xpose.msra.mxu0 0.0
  %1474 = vmatprep.subr.mxu0 0.0
  %1475 = vmatpush1.xpose.msra.mxu0 0.0
  %1476 = vmatprep.subr.mxu0 0.0
  %1477 = vmatpush1.xpose.msra.mxu0 0.0
  %1478 = vmatprep.subr.mxu0 0.0
  %1479 = vmatpush1.xpose.msra.mxu0 0.0
  %1480 = vmatprep.subr.mxu0 0.0
  %1481 = vmatpush1.xpose.msra.mxu0 0.0
  %1482 = vmatprep.subr.mxu0 0.0
  %1483 = vmatpush1.xpose.msra.mxu0 0.0
  %1484 = vmatprep.subr.mxu0 0.0
  %1485 = vmatpush1.xpose.msra.mxu0 0.0
  %1486 = vmatprep.subr.mxu0 0.0
  %1487 = vmatpush1.xpose.msra.mxu0 0.0
  %1488 = vmatprep.subr.mxu0 0.0
  %1489 = vmatpush1.xpose.msra.mxu0 0.0
  %1490 = vmatprep.subr.mxu0 0.0
  %1491 = vmatpush1.xpose.msra.mxu0 0.0
  %1492 = vmatprep.subr.mxu0 0.0
  %1493 = vmatpush1.xpose.msra.mxu0 0.0
  %1494 = vmatprep.mubr.f32.mxu0 0.0
  %1495 = vmatmul.mubr.f32.gmra.mrb[0].mxu0 %v1416
  %v1496 = vpop.f32.mrb[0].mxu0
  %v1497 = vadd.f32 0.0, %v1496
  %v1498 = vpop.f32.mrb[0].mxu0
  %1499 = vdwg.mxu0
  %v1500 = vlaneseq
  %v1501 = vshrl.u32 %v1500, 7
  %v1502 = vsub.s32 0, %v1501
  %v1503 = vrot.slane %v1497, %v1502
  %v1504 = vadd.f32 %v1404, %v1503
  %v1505 = vadd.f32 %v1407, %v1503
  %v1506 = vadd.f32 %v1410, %v1503
  %v1507 = vadd.f32 %v1413, %v1503
  %vm1508 = vcmp.ge.f32.partialorder %v1504, 0.0
  %vm1509 = vcmp.ge.f32.partialorder %v1505, 0.0
  %vm1510 = vcmp.ge.f32.partialorder %v1506, 0.0
  %vm1511 = vcmp.ge.f32.partialorder %v1507, 0.0
  %v1512 = vmul.f32 %v1504, 0.2
  %v1513 = vmul.f32 %v1505, 0.2
  %v1514 = vmul.f32 %v1506, 0.2
  %v1515 = vmul.f32 %v1507, 0.2
  %v1516 = vsel %vm1508, %v1504, %v1512
  %v1517 = vsel %vm1509, %v1505, %v1513
  %v1518 = vsel %vm1510, %v1506, %v1514
  %v1519 = vsel %vm1511, %v1507, %v1515
  %vm1520 = vcmp.gt.f32.partialorder %v77, 0.0
  %vm1521 = vcmp.gt.f32.partialorder %v78, 0.0
  %vm1522 = vcmp.gt.f32.partialorder %v79, 0.0
  %vm1523 = vcmp.gt.f32.partialorder %v80, 0.0
  %v1524 = vsel %vm1520, %v1516, -9e+15
  %v1525 = vsel %vm1521, %v1517, -9e+15
  %v1526 = vsel %vm1522, %v1518, -9e+15
  %v1527 = vsel %vm1523, %v1519, -9e+15
  %v1528 = vsel %vm473, %v1524, -inf
  %1529 = vmax.xlane.f32.xlu0 %v1528
  %v1530 = vpop.xlane.xlu0 %1529
  %v1531 = vsel %vm473, %v1525, -inf
  %1532 = vmax.xlane.f32.xlu0 %v1531
  %v1533 = vpop.xlane.xlu0 %1532
  %v1534 = vsel %vm473, %v1526, -inf
  %1535 = vmax.xlane.f32.xlu0 %v1534
  %v1536 = vpop.xlane.xlu0 %1535
  %v1537 = vsel %vm473, %v1527, -inf
  %1538 = vmax.xlane.f32.xlu0 %v1537
  %v1539 = vpop.xlane.xlu0 %1538
  %v1540 = vsub.f32 %v1524, %v1530
  %v1541 = vsub.f32 %v1525, %v1533
  %v1542 = vsub.f32 %v1526, %v1536
  %v1543 = vsub.f32 %v1527, %v1539
  %v1544 = vmul.f32 %v1540, 1.442695
  %v1545 = vpow.pop %v1544
  %v1546 = vmul.f32 %v1541, 1.442695
  %v1547 = vpow.pop %v1546
  %v1548 = vmul.f32 %v1542, 1.442695
  %v1549 = vpow.pop %v1548
  %v1550 = vmul.f32 %v1543, 1.442695
  %v1551 = vpow.pop %v1550
  %v1552 = vsel %vm473, %v1545, 0.0
  %1553 = vadd.xlane.f32.xlu0 %v1552
  %v1554 = vpop.xlane.xlu0 %1553
  %v1555 = vsel %vm473, %v1547, 0.0
  %1556 = vadd.xlane.f32.xlu0 %v1555
  %v1557 = vpop.xlane.xlu0 %1556
  %v1558 = vsel %vm473, %v1549, 0.0
  %1559 = vadd.xlane.f32.xlu0 %v1558
  %v1560 = vpop.xlane.xlu0 %1559
  %v1561 = vsel %vm473, %v1551, 0.0
  %1562 = vadd.xlane.f32.xlu0 %v1561
  %v1563 = vpop.xlane.xlu0 %1562
  %v1564 = vrcp.pop %v1554
  %v1565 = vrcp.pop %v1557
  %v1566 = vrcp.pop %v1560
  %v1567 = vrcp.pop %v1563
  %v1568 = vmul.f32 %v1545, %v1564
  %v1569 = vmul.f32 %v1547, %v1565
  %v1570 = vmul.f32 %v1549, %v1566
  %v1571 = vmul.f32 %v1551, %v1567
  %v1573 = vsel %vm473, %v1568, 0
  %v1576 = vsel %vm473, %v1569, 0
  %v1579 = vsel %vm473, %v1570, 0
  %v1582 = vsel %vm473, %v1571, 0
  %1584 = vmatprep.subr.mxu0 0.0
  %1585 = vmatpush1.msra.mxu0 %v1375
  %1586 = vmatprep.subr.mxu0 0.0
  %1587 = vmatpush1.msra.mxu0 %v1380
  %1588 = vmatprep.subr.mxu0 0.0
  %1589 = vmatpush1.msra.mxu0 %v1385
  %1590 = vmatprep.subr.mxu0 0.0
  %1591 = vmatpush1.msra.mxu0 %v1390
  %1592 = vmatprep.subr.mxu0 0.0
  %1593 = vmatpush1.msra.mxu0 0.0
  %1594 = vmatprep.subr.mxu0 0.0
  %1595 = vmatpush1.msra.mxu0 0.0
  %1596 = vmatprep.subr.mxu0 0.0
  %1597 = vmatpush1.msra.mxu0 0.0
  %1598 = vmatprep.subr.mxu0 0.0
  %1599 = vmatpush1.msra.mxu0 0.0
  %1600 = vmatprep.subr.mxu0 0.0
  %1601 = vmatpush1.msra.mxu0 0.0
  %1602 = vmatprep.subr.mxu0 0.0
  %1603 = vmatpush1.msra.mxu0 0.0
  %1604 = vmatprep.subr.mxu0 0.0
  %1605 = vmatpush1.msra.mxu0 0.0
  %1606 = vmatprep.subr.mxu0 0.0
  %1607 = vmatpush1.msra.mxu0 0.0
  %1608 = vmatprep.subr.mxu0 0.0
  %1609 = vmatpush1.msra.mxu0 0.0
  %1610 = vmatprep.subr.mxu0 0.0
  %1611 = vmatpush1.msra.mxu0 0.0
  %1612 = vmatprep.subr.mxu0 0.0
  %1613 = vmatpush1.msra.mxu0 0.0
  %1614 = vmatprep.subr.mxu0 0.0
  %1615 = vmatpush1.msra.mxu0 0.0
  %1616 = vmatprep.subr.mxu0 0.0
  %1617 = vmatpush1.msra.mxu0 0.0
  %1618 = vmatprep.subr.mxu0 0.0
  %1619 = vmatpush1.msra.mxu0 0.0
  %1620 = vmatprep.subr.mxu0 0.0
  %1621 = vmatpush1.msra.mxu0 0.0
  %1622 = vmatprep.subr.mxu0 0.0
  %1623 = vmatpush1.msra.mxu0 0.0
  %1624 = vmatprep.subr.mxu0 0.0
  %1625 = vmatpush1.msra.mxu0 0.0
  %1626 = vmatprep.subr.mxu0 0.0
  %1627 = vmatpush1.msra.mxu0 0.0
  %1628 = vmatprep.subr.mxu0 0.0
  %1629 = vmatpush1.msra.mxu0 0.0
  %1630 = vmatprep.subr.mxu0 0.0
  %1631 = vmatpush1.msra.mxu0 0.0
  %1632 = vmatprep.subr.mxu0 0.0
  %1633 = vmatpush1.msra.mxu0 0.0
  %1634 = vmatprep.subr.mxu0 0.0
  %1635 = vmatpush1.msra.mxu0 0.0
  %1636 = vmatprep.subr.mxu0 0.0
  %1637 = vmatpush1.msra.mxu0 0.0
  %1638 = vmatprep.subr.mxu0 0.0
  %1639 = vmatpush1.msra.mxu0 0.0
  %1640 = vmatprep.subr.mxu0 0.0
  %1641 = vmatpush1.msra.mxu0 0.0
  %1642 = vmatprep.subr.mxu0 0.0
  %1643 = vmatpush1.msra.mxu0 0.0
  %1644 = vmatprep.subr.mxu0 0.0
  %1645 = vmatpush1.msra.mxu0 0.0
  %1646 = vmatprep.subr.mxu0 0.0
  %1647 = vmatpush1.msra.mxu0 0.0
  %1648 = vmatprep.mubr.f32.mxu0 0.0
  %1649 = vmatmul.mubr.f32.gmra.mrb[0].mxu0 %v1573
  %v1650 = vpop.f32.mrb[0].mxu0
  %v1651 = vadd.f32 0.0, %v1650
  %v1652 = vpop.f32.mrb[0].mxu0
  %1653 = vmatprep.mubr.f32.mxu0 0.0
  %1654 = vmatmul.mubr.f32.gmra.mrb[0].mxu0 %v1576
  %v1655 = vpop.f32.mrb[0].mxu0
  %v1656 = vadd.f32 0.0, %v1655
  %v1657 = vpop.f32.mrb[0].mxu0
  %1658 = vmatprep.mubr.f32.mxu0 0.0
  %1659 = vmatmul.mubr.f32.gmra.mrb[0].mxu0 %v1579
  %v1660 = vpop.f32.mrb[0].mxu0
  %v1661 = vadd.f32 0.0, %v1660
  %v1662 = vpop.f32.mrb[0].mxu0
  %1663 = vmatprep.mubr.f32.mxu0 0.0
  %1664 = vmatmul.mubr.f32.gmra.mrb[0].mxu0 %v1582
  %v1665 = vpop.f32.mrb[0].mxu0
  %v1666 = vadd.f32 0.0, %v1665
  %v1667 = vpop.f32.mrb[0].mxu0
  %1668 = vdwg.mxu0
  %vm1669 = vcmp.gt.f32.partialorder %v1651, 0.0
  %vm1670 = vcmp.gt.f32.partialorder %v1656, 0.0
  %vm1671 = vcmp.gt.f32.partialorder %v1661, 0.0
  %vm1672 = vcmp.gt.f32.partialorder %v1666, 0.0
  %v1673 = vmul.f32 %v1651, 1.442695
  %v1674 = vpow.pop %v1673
  %v1675 = vmul.f32 %v1656, 1.442695
  %v1676 = vpow.pop %v1675
  %v1677 = vmul.f32 %v1661, 1.442695
  %v1678 = vpow.pop %v1677
  %v1679 = vmul.f32 %v1666, 1.442695
  %v1680 = vpow.pop %v1679
  %v1681 = vsub.f32 %v1674, 1.0
  %v1682 = vsub.f32 %v1676, 1.0
  %v1683 = vsub.f32 %v1678, 1.0
  %v1684 = vsub.f32 %v1680, 1.0
  %v1685 = vsel %vm1669, %v1651, %v1681
  %v1686 = vsel %vm1670, %v1656, %v1682
  %v1687 = vsel %vm1671, %v1661, %v1683
  %v1688 = vsel %vm1672, %v1666, %v1684
  %v1689 = vld [vmem:[%s20] sm:$0xff]
  %v1690 = vld [vmem:[%s20 + $0x8] sm:$0xff]
  %s1691 = scalar_lea.vmem %s18, 16
  %v1692 = vld [vmem:[%s1691] sm:$0xff]
  %v1693 = vld [vmem:[%s1691 + $0x8] sm:$0xff]
  %1694 = vmatprep.subr.mxu0 0.0
  %1695 = vmatpush1.msra.mxu0 %v1692
  %1696 = vmatprep.subr.mxu0 0.0
  %1697 = vmatpush1.msra.mxu0 %v1693
  %1698 = vmatprep.subr.mxu0 0.0
  %1699 = vmatpush1.msra.mxu0 0.0
  %1700 = vmatprep.subr.mxu0 0.0
  %1701 = vmatpush1.msra.mxu0 0.0
  %1702 = vmatprep.subr.mxu0 0.0
  %1703 = vmatpush1.msra.mxu0 0.0
  %1704 = vmatprep.subr.mxu0 0.0
  %1705 = vmatpush1.msra.mxu0 0.0
  %1706 = vmatprep.subr.mxu0 0.0
  %1707 = vmatpush1.msra.mxu0 0.0
  %1708 = vmatprep.subr.mxu0 0.0
  %1709 = vmatpush1.msra.mxu0 0.0
  %1710 = vmatprep.subr.mxu0 0.0
  %1711 = vmatpush1.msra.mxu0 0.0
  %1712 = vmatprep.subr.mxu0 0.0
  %1713 = vmatpush1.msra.mxu0 0.0
  %1714 = vmatprep.subr.mxu0 0.0
  %1715 = vmatpush1.msra.mxu0 0.0
  %1716 = vmatprep.subr.mxu0 0.0
  %1717 = vmatpush1.msra.mxu0 0.0
  %1718 = vmatprep.subr.mxu0 0.0
  %1719 = vmatpush1.msra.mxu0 0.0
  %1720 = vmatprep.subr.mxu0 0.0
  %1721 = vmatpush1.msra.mxu0 0.0
  %1722 = vmatprep.subr.mxu0 0.0
  %1723 = vmatpush1.msra.mxu0 0.0
  %1724 = vmatprep.subr.mxu0 0.0
  %1725 = vmatpush1.msra.mxu0 0.0
  %1726 = vmatprep.subr.mxu0 0.0
  %1727 = vmatpush1.msra.mxu0 0.0
  %1728 = vmatprep.subr.mxu0 0.0
  %1729 = vmatpush1.msra.mxu0 0.0
  %1730 = vmatprep.subr.mxu0 0.0
  %1731 = vmatpush1.msra.mxu0 0.0
  %1732 = vmatprep.subr.mxu0 0.0
  %1733 = vmatpush1.msra.mxu0 0.0
  %1734 = vmatprep.subr.mxu0 0.0
  %1735 = vmatpush1.msra.mxu0 0.0
  %1736 = vmatprep.subr.mxu0 0.0
  %1737 = vmatpush1.msra.mxu0 0.0
  %1738 = vmatprep.subr.mxu0 0.0
  %1739 = vmatpush1.msra.mxu0 0.0
  %1740 = vmatprep.subr.mxu0 0.0
  %1741 = vmatpush1.msra.mxu0 0.0
  %1742 = vmatprep.subr.mxu0 0.0
  %1743 = vmatpush1.msra.mxu0 0.0
  %1744 = vmatprep.subr.mxu0 0.0
  %1745 = vmatpush1.msra.mxu0 0.0
  %1746 = vmatprep.subr.mxu0 0.0
  %1747 = vmatpush1.msra.mxu0 0.0
  %1748 = vmatprep.subr.mxu0 0.0
  %1749 = vmatpush1.msra.mxu0 0.0
  %1750 = vmatprep.subr.mxu0 0.0
  %1751 = vmatpush1.msra.mxu0 0.0
  %1752 = vmatprep.subr.mxu0 0.0
  %1753 = vmatpush1.msra.mxu0 0.0
  %1754 = vmatprep.subr.mxu0 0.0
  %1755 = vmatpush1.msra.mxu0 0.0
  %1756 = vmatprep.subr.mxu0 0.0
  %1757 = vmatpush1.msra.mxu0 0.0
  %1758 = vmatprep.mubr.f32.mxu0 0.0
  %1759 = vmatmul.mubr.f32.gmra.mrb[0].mxu0 %v1297
  %v1760 = vpop.f32.mrb[0].mxu0
  %v1761 = vadd.f32 0.0, %v1760
  %v1762 = vpop.f32.mrb[0].mxu0
  %1763 = vmatprep.mubr.f32.mxu0 0.0
  %1764 = vmatmul.mubr.f32.gmra.mrb[0].mxu0 %v1300
  %v1765 = vpop.f32.mrb[0].mxu0
  %v1766 = vadd.f32 0.0, %v1765
  %v1767 = vpop.f32.mrb[0].mxu0
  %1768 = vmatprep.mubr.f32.mxu0 0.0
  %1769 = vmatmul.mubr.f32.gmra.mrb[0].mxu0 %v1303
  %v1770 = vpop.f32.mrb[0].mxu0
  %v1771 = vadd.f32 0.0, %v1770
  %v1772 = vpop.f32.mrb[0].mxu0
  %1773 = vmatprep.mubr.f32.mxu0 0.0
  %1774 = vmatmul.mubr.f32.gmra.mrb[0].mxu0 %v1306
  %v1775 = vpop.f32.mrb[0].mxu0
  %v1776 = vadd.f32 0.0, %v1775
  %v1777 = vpop.f32.mrb[0].mxu0
  %1778 = vdwg.mxu0
  %s1779 = scalar_lea.vmem %s19, 2
  %v1780 = vld [vmem:[%s1779] sm:$0x3]
  %v1781 = vlaneseq
  %v1782 = vshrl.u32 %v1781, 7
  %v1783 = vsub.s32 0, %v1782
  %v1784 = vrot.slane %v1780, %v1783
  %v1785 = vmul.f32 %v1761, %v1784
  %v1786 = vmul.f32 %v1766, %v1784
  %v1787 = vmul.f32 %v1771, %v1784
  %v1788 = vmul.f32 %v1776, %v1784
  %v1789 = vsel %vm375, %v1785, 0.0
  %1790 = vadd.xlane.f32.xlu0 %v1789
  %v1791 = vpop.xlane.xlu0 %1790
  %v1792 = vsel %vm375, %v1786, 0.0
  %1793 = vadd.xlane.f32.xlu0 %v1792
  %v1794 = vpop.xlane.xlu0 %1793
  %v1795 = vsel %vm375, %v1787, 0.0
  %1796 = vadd.xlane.f32.xlu0 %v1795
  %v1797 = vpop.xlane.xlu0 %1796
  %v1798 = vsel %vm375, %v1788, 0.0
  %1799 = vadd.xlane.f32.xlu0 %v1798
  %v1800 = vpop.xlane.xlu0 %1799
  %v1802 = vrot.slane %v1780, 1
  %v1803 = vsel %vm375, %v1802, 0
  %v1806 = vsel %vm375, %v1761, 0
  %v1809 = vsel %vm375, %v1766, 0
  %v1812 = vsel %vm375, %v1771, 0
  %v1815 = vsel %vm375, %v1776, 0
  %1817 = vmatprep.subr.mxu0 0.0
  %1818 = vmatpush1.xpose.msra.mxu0 %v1806
  %1819 = vmatprep.subr.mxu0 0.0
  %1820 = vmatpush1.xpose.msra.mxu0 %v1809
  %1821 = vmatprep.subr.mxu0 0.0
  %1822 = vmatpush1.xpose.msra.mxu0 %v1812
  %1823 = vmatprep.subr.mxu0 0.0
  %1824 = vmatpush1.xpose.msra.mxu0 %v1815
  %1825 = vmatprep.subr.mxu0 0.0
  %1826 = vmatpush1.xpose.msra.mxu0 0.0
  %1827 = vmatprep.subr.mxu0 0.0
  %1828 = vmatpush1.xpose.msra.mxu0 0.0
  %1829 = vmatprep.subr.mxu0 0.0
  %1830 = vmatpush1.xpose.msra.mxu0 0.0
  %1831 = vmatprep.subr.mxu0 0.0
  %1832 = vmatpush1.xpose.msra.mxu0 0.0
  %1833 = vmatprep.subr.mxu0 0.0
  %1834 = vmatpush1.xpose.msra.mxu0 0.0
  %1835 = vmatprep.subr.mxu0 0.0
  %1836 = vmatpush1.xpose.msra.mxu0 0.0
  %1837 = vmatprep.subr.mxu0 0.0
  %1838 = vmatpush1.xpose.msra.mxu0 0.0
  %1839 = vmatprep.subr.mxu0 0.0
  %1840 = vmatpush1.xpose.msra.mxu0 0.0
  %1841 = vmatprep.subr.mxu0 0.0
  %1842 = vmatpush1.xpose.msra.mxu0 0.0
  %1843 = vmatprep.subr.mxu0 0.0
  %1844 = vmatpush1.xpose.msra.mxu0 0.0
  %1845 = vmatprep.subr.mxu0 0.0
  %1846 = vmatpush1.xpose.msra.mxu0 0.0
  %1847 = vmatprep.subr.mxu0 0.0
  %1848 = vmatpush1.xpose.msra.mxu0 0.0
  %1849 = vmatprep.subr.mxu0 0.0
  %1850 = vmatpush1.xpose.msra.mxu0 0.0
  %1851 = vmatprep.subr.mxu0 0.0
  %1852 = vmatpush1.xpose.msra.mxu0 0.0
  %1853 = vmatprep.subr.mxu0 0.0
  %1854 = vmatpush1.xpose.msra.mxu0 0.0
  %1855 = vmatprep.subr.mxu0 0.0
  %1856 = vmatpush1.xpose.msra.mxu0 0.0
  %1857 = vmatprep.subr.mxu0 0.0
  %1858 = vmatpush1.xpose.msra.mxu0 0.0
  %1859 = vmatprep.subr.mxu0 0.0
  %1860 = vmatpush1.xpose.msra.mxu0 0.0
  %1861 = vmatprep.subr.mxu0 0.0
  %1862 = vmatpush1.xpose.msra.mxu0 0.0
  %1863 = vmatprep.subr.mxu0 0.0
  %1864 = vmatpush1.xpose.msra.mxu0 0.0
  %1865 = vmatprep.subr.mxu0 0.0
  %1866 = vmatpush1.xpose.msra.mxu0 0.0
  %1867 = vmatprep.subr.mxu0 0.0
  %1868 = vmatpush1.xpose.msra.mxu0 0.0
  %1869 = vmatprep.subr.mxu0 0.0
  %1870 = vmatpush1.xpose.msra.mxu0 0.0
  %1871 = vmatprep.subr.mxu0 0.0
  %1872 = vmatpush1.xpose.msra.mxu0 0.0
  %1873 = vmatprep.subr.mxu0 0.0
  %1874 = vmatpush1.xpose.msra.mxu0 0.0
  %1875 = vmatprep.subr.mxu0 0.0
  %1876 = vmatpush1.xpose.msra.mxu0 0.0
  %1877 = vmatprep.subr.mxu0 0.0
  %1878 = vmatpush1.xpose.msra.mxu0 0.0
  %1879 = vmatprep.subr.mxu0 0.0
  %1880 = vmatpush1.xpose.msra.mxu0 0.0
  %1881 = vmatprep.mubr.f32.mxu0 0.0
  %1882 = vmatmul.mubr.f32.gmra.mrb[0].mxu0 %v1803
  %v1883 = vpop.f32.mrb[0].mxu0
  %v1884 = vadd.f32 0.0, %v1883
  %v1885 = vpop.f32.mrb[0].mxu0
  %1886 = vdwg.mxu0
  %v1887 = vlaneseq
  %v1888 = vshrl.u32 %v1887, 7
  %v1889 = vsub.s32 0, %v1888
  %v1890 = vrot.slane %v1884, %v1889
  %v1891 = vadd.f32 %v1791, %v1890
  %v1892 = vadd.f32 %v1794, %v1890
  %v1893 = vadd.f32 %v1797, %v1890
  %v1894 = vadd.f32 %v1800, %v1890
  %vm1895 = vcmp.ge.f32.partialorder %v1891, 0.0
  %vm1896 = vcmp.ge.f32.partialorder %v1892, 0.0
  %vm1897 = vcmp.ge.f32.partialorder %v1893, 0.0
  %vm1898 = vcmp.ge.f32.partialorder %v1894, 0.0
  %v1899 = vmul.f32 %v1891, 0.2
  %v1900 = vmul.f32 %v1892, 0.2
  %v1901 = vmul.f32 %v1893, 0.2
  %v1902 = vmul.f32 %v1894, 0.2
  %v1903 = vsel %vm1895, %v1891, %v1899
  %v1904 = vsel %vm1896, %v1892, %v1900
  %v1905 = vsel %vm1897, %v1893, %v1901
  %v1906 = vsel %vm1898, %v1894, %v1902
  %v1907 = vsel %vm1520, %v1903, -9e+15
  %v1908 = vsel %vm1521, %v1904, -9e+15
  %v1909 = vsel %vm1522, %v1905, -9e+15
  %v1910 = vsel %vm1523, %v1906, -9e+15
  %v1911 = vsel %vm473, %v1907, -inf
  %1912 = vmax.xlane.f32.xlu0 %v1911
  %v1913 = vpop.xlane.xlu0 %1912
  %v1914 = vsel %vm473, %v1908, -inf
  %1915 = vmax.xlane.f32.xlu0 %v1914
  %v1916 = vpop.xlane.xlu0 %1915
  %v1917 = vsel %vm473, %v1909, -inf
  %1918 = vmax.xlane.f32.xlu0 %v1917
  %v1919 = vpop.xlane.xlu0 %1918
  %v1920 = vsel %vm473, %v1910, -inf
  %1921 = vmax.xlane.f32.xlu0 %v1920
  %v1922 = vpop.xlane.xlu0 %1921
  %v1923 = vsub.f32 %v1907, %v1913
  %v1924 = vsub.f32 %v1908, %v1916
  %v1925 = vsub.f32 %v1909, %v1919
  %v1926 = vsub.f32 %v1910, %v1922
  %v1927 = vmul.f32 %v1923, 1.442695
  %v1928 = vpow.pop %v1927
  %v1929 = vmul.f32 %v1924, 1.442695
  %v1930 = vpow.pop %v1929
  %v1931 = vmul.f32 %v1925, 1.442695
  %v1932 = vpow.pop %v1931
  %v1933 = vmul.f32 %v1926, 1.442695
  %v1934 = vpow.pop %v1933
  %v1935 = vsel %vm473, %v1928, 0.0
  %1936 = vadd.xlane.f32.xlu0 %v1935
  %v1937 = vpop.xlane.xlu0 %1936
  %v1938 = vsel %vm473, %v1930, 0.0
  %1939 = vadd.xlane.f32.xlu0 %v1938
  %v1940 = vpop.xlane.xlu0 %1939
  %v1941 = vsel %vm473, %v1932, 0.0
  %1942 = vadd.xlane.f32.xlu0 %v1941
  %v1943 = vpop.xlane.xlu0 %1942
  %v1944 = vsel %vm473, %v1934, 0.0
  %1945 = vadd.xlane.f32.xlu0 %v1944
  %v1946 = vpop.xlane.xlu0 %1945
  %v1947 = vrcp.pop %v1937
  %v1948 = vrcp.pop %v1940
  %v1949 = vrcp.pop %v1943
  %v1950 = vrcp.pop %v1946
  %v1951 = vmul.f32 %v1928, %v1947
  %v1952 = vmul.f32 %v1930, %v1948
  %v1953 = vmul.f32 %v1932, %v1949
  %v1954 = vmul.f32 %v1934, %v1950
  %v1956 = vsel %vm473, %v1951, 0
  %v1959 = vsel %vm473, %v1952, 0
  %v1962 = vsel %vm473, %v1953, 0
  %v1965 = vsel %vm473, %v1954, 0
  %1967 = vmatprep.subr.mxu0 0.0
  %1968 = vmatpush1.msra.mxu0 %v1761
  %1969 = vmatprep.subr.mxu0 0.0
  %1970 = vmatpush1.msra.mxu0 %v1766
  %1971 = vmatprep.subr.mxu0 0.0
  %1972 = vmatpush1.msra.mxu0 %v1771
  %1973 = vmatprep.subr.mxu0 0.0
  %1974 = vmatpush1.msra.mxu0 %v1776
  %1975 = vmatprep.subr.mxu0 0.0
  %1976 = vmatpush1.msra.mxu0 0.0
  %1977 = vmatprep.subr.mxu0 0.0
  %1978 = vmatpush1.msra.mxu0 0.0
  %1979 = vmatprep.subr.mxu0 0.0
  %1980 = vmatpush1.msra.mxu0 0.0
  %1981 = vmatprep.subr.mxu0 0.0
  %1982 = vmatpush1.msra.mxu0 0.0
  %1983 = vmatprep.subr.mxu0 0.0
  %1984 = vmatpush1.msra.mxu0 0.0
  %1985 = vmatprep.subr.mxu0 0.0
  %1986 = vmatpush1.msra.mxu0 0.0
  %1987 = vmatprep.subr.mxu0 0.0
  %1988 = vmatpush1.msra.mxu0 0.0
  %1989 = vmatprep.subr.mxu0 0.0
  %1990 = vmatpush1.msra.mxu0 0.0
  %1991 = vmatprep.subr.mxu0 0.0
  %1992 = vmatpush1.msra.mxu0 0.0
  %1993 = vmatprep.subr.mxu0 0.0
  %1994 = vmatpush1.msra.mxu0 0.0
  %1995 = vmatprep.subr.mxu0 0.0
  %1996 = vmatpush1.msra.mxu0 0.0
  %1997 = vmatprep.subr.mxu0 0.0
  %1998 = vmatpush1.msra.mxu0 0.0
  %1999 = vmatprep.subr.mxu0 0.0
  %2000 = vmatpush1.msra.mxu0 0.0
  %2001 = vmatprep.subr.mxu0 0.0
  %2002 = vmatpush1.msra.mxu0 0.0
  %2003 = vmatprep.subr.mxu0 0.0
  %2004 = vmatpush1.msra.mxu0 0.0
  %2005 = vmatprep.subr.mxu0 0.0
  %2006 = vmatpush1.msra.mxu0 0.0
  %2007 = vmatprep.subr.mxu0 0.0
  %2008 = vmatpush1.msra.mxu0 0.0
  %2009 = vmatprep.subr.mxu0 0.0
  %2010 = vmatpush1.msra.mxu0 0.0
  %2011 = vmatprep.subr.mxu0 0.0
  %2012 = vmatpush1.msra.mxu0 0.0
  %2013 = vmatprep.subr.mxu0 0.0
  %2014 = vmatpush1.msra.mxu0 0.0
  %2015 = vmatprep.subr.mxu0 0.0
  %2016 = vmatpush1.msra.mxu0 0.0
  %2017 = vmatprep.subr.mxu0 0.0
  %2018 = vmatpush1.msra.mxu0 0.0
  %2019 = vmatprep.subr.mxu0 0.0
  %2020 = vmatpush1.msra.mxu0 0.0
  %2021 = vmatprep.subr.mxu0 0.0
  %2022 = vmatpush1.msra.mxu0 0.0
  %2023 = vmatprep.subr.mxu0 0.0
  %2024 = vmatpush1.msra.mxu0 0.0
  %2025 = vmatprep.subr.mxu0 0.0
  %2026 = vmatpush1.msra.mxu0 0.0
  %2027 = vmatprep.subr.mxu0 0.0
  %2028 = vmatpush1.msra.mxu0 0.0
  %2029 = vmatprep.subr.mxu0 0.0
  %2030 = vmatpush1.msra.mxu0 0.0
  %2031 = vmatprep.mubr.f32.mxu0 0.0
  %2032 = vmatmul.mubr.f32.gmra.mrb[0].mxu0 %v1956
  %v2033 = vpop.f32.mrb[0].mxu0
  %v2034 = vadd.f32 0.0, %v2033
  %v2035 = vpop.f32.mrb[0].mxu0
  %2036 = vmatprep.mubr.f32.mxu0 0.0
  %2037 = vmatmul.mubr.f32.gmra.mrb[0].mxu0 %v1959
  %v2038 = vpop.f32.mrb[0].mxu0
  %v2039 = vadd.f32 0.0, %v2038
  %v2040 = vpop.f32.mrb[0].mxu0
  %2041 = vmatprep.mubr.f32.mxu0 0.0
  %2042 = vmatmul.mubr.f32.gmra.mrb[0].mxu0 %v1962
  %v2043 = vpop.f32.mrb[0].mxu0
  %v2044 = vadd.f32 0.0, %v2043
  %v2045 = vpop.f32.mrb[0].mxu0
  %2046 = vmatprep.mubr.f32.mxu0 0.0
  %2047 = vmatmul.mubr.f32.gmra.mrb[0].mxu0 %v1965
  %v2048 = vpop.f32.mrb[0].mxu0
  %v2049 = vadd.f32 0.0, %v2048
  %v2050 = vpop.f32.mrb[0].mxu0
  %2051 = vdwg.mxu0
  %vm2052 = vcmp.gt.f32.partialorder %v2034, 0.0
  %vm2053 = vcmp.gt.f32.partialorder %v2039, 0.0
  %vm2054 = vcmp.gt.f32.partialorder %v2044, 0.0
  %vm2055 = vcmp.gt.f32.partialorder %v2049, 0.0
  %v2056 = vmul.f32 %v2034, 1.442695
  %v2057 = vpow.pop %v2056
  %v2058 = vmul.f32 %v2039, 1.442695
  %v2059 = vpow.pop %v2058
  %v2060 = vmul.f32 %v2044, 1.442695
  %v2061 = vpow.pop %v2060
  %v2062 = vmul.f32 %v2049, 1.442695
  %v2063 = vpow.pop %v2062
  %v2064 = vsub.f32 %v2057, 1.0
  %v2065 = vsub.f32 %v2059, 1.0
  %v2066 = vsub.f32 %v2061, 1.0
  %v2067 = vsub.f32 %v2063, 1.0
  %v2068 = vsel %vm2052, %v2034, %v2064
  %v2069 = vsel %vm2053, %v2039, %v2065
  %v2070 = vsel %vm2054, %v2044, %v2066
  %v2071 = vsel %vm2055, %v2049, %v2067
  %s2072 = scalar_lea.vmem %s20, 16
  %v2073 = vld [vmem:[%s2072] sm:$0xff]
  %v2074 = vld [vmem:[%s2072 + $0x8] sm:$0xff]
  %v2076 = vsel %vm375, %v2068, 0
  %v2079 = vsel %vm375, %v2069, 0
  %v2082 = vsel %vm375, %v2070, 0
  %v2085 = vsel %vm375, %v2071, 0
  %2087 = vmatprep.subr.mxu0 0.0
  %2088 = vmatpush1.msra.mxu0 %v2073
  %2089 = vmatprep.subr.mxu0 0.0
  %2090 = vmatpush1.msra.mxu0 %v2074
  %2091 = vmatprep.subr.mxu0 0.0
  %2092 = vmatpush1.msra.mxu0 0.0
  %2093 = vmatprep.subr.mxu0 0.0
  %2094 = vmatpush1.msra.mxu0 0.0
  %2095 = vmatprep.subr.mxu0 0.0
  %2096 = vmatpush1.msra.mxu0 0.0
  %2097 = vmatprep.subr.mxu0 0.0
  %2098 = vmatpush1.msra.mxu0 0.0
  %2099 = vmatprep.subr.mxu0 0.0
  %2100 = vmatpush1.msra.mxu0 0.0
  %2101 = vmatprep.subr.mxu0 0.0
  %2102 = vmatpush1.msra.mxu0 0.0
  %2103 = vmatprep.subr.mxu0 0.0
  %2104 = vmatpush1.msra.mxu0 0.0
  %2105 = vmatprep.subr.mxu0 0.0
  %2106 = vmatpush1.msra.mxu0 0.0
  %2107 = vmatprep.subr.mxu0 0.0
  %2108 = vmatpush1.msra.mxu0 0.0
  %2109 = vmatprep.subr.mxu0 0.0
  %2110 = vmatpush1.msra.mxu0 0.0
  %2111 = vmatprep.subr.mxu0 0.0
  %2112 = vmatpush1.msra.mxu0 0.0
  %2113 = vmatprep.subr.mxu0 0.0
  %2114 = vmatpush1.msra.mxu0 0.0
  %2115 = vmatprep.subr.mxu0 0.0
  %2116 = vmatpush1.msra.mxu0 0.0
  %2117 = vmatprep.subr.mxu0 0.0
  %2118 = vmatpush1.msra.mxu0 0.0
  %2119 = vmatprep.subr.mxu0 0.0
  %2120 = vmatpush1.msra.mxu0 0.0
  %2121 = vmatprep.subr.mxu0 0.0
  %2122 = vmatpush1.msra.mxu0 0.0
  %2123 = vmatprep.subr.mxu0 0.0
  %2124 = vmatpush1.msra.mxu0 0.0
  %2125 = vmatprep.subr.mxu0 0.0
  %2126 = vmatpush1.msra.mxu0 0.0
  %2127 = vmatprep.subr.mxu0 0.0
  %2128 = vmatpush1.msra.mxu0 0.0
  %2129 = vmatprep.subr.mxu0 0.0
  %2130 = vmatpush1.msra.mxu0 0.0
  %2131 = vmatprep.subr.mxu0 0.0
  %2132 = vmatpush1.msra.mxu0 0.0
  %2133 = vmatprep.subr.mxu0 0.0
  %2134 = vmatpush1.msra.mxu0 0.0
  %2135 = vmatprep.subr.mxu0 0.0
  %2136 = vmatpush1.msra.mxu0 0.0
  %2137 = vmatprep.subr.mxu0 0.0
  %2138 = vmatpush1.msra.mxu0 0.0
  %2139 = vmatprep.subr.mxu0 0.0
  %2140 = vmatpush1.msra.mxu0 0.0
  %2141 = vmatprep.subr.mxu0 0.0
  %2142 = vmatpush1.msra.mxu0 0.0
  %2143 = vmatprep.subr.mxu0 0.0
  %2144 = vmatpush1.msra.mxu0 0.0
  %2145 = vmatprep.subr.mxu0 0.0
  %2146 = vmatpush1.msra.mxu0 0.0
  %2147 = vmatprep.subr.mxu0 0.0
  %2148 = vmatpush1.msra.mxu0 0.0
  %2149 = vmatprep.subr.mxu0 0.0
  %2150 = vmatpush1.msra.mxu0 0.0
  %2151 = vmatprep.mubr.f32.mxu0 0.0
  %2152 = vmatmul.mubr.f32.gmra.mrb[0].mxu0 %v2076
  %v2153 = vpop.f32.mrb[0].mxu0
  %v2154 = vadd.f32 0.0, %v2153
  %v2155 = vpop.f32.mrb[0].mxu0
  %2156 = vmatprep.mubr.f32.mxu0 0.0
  %2157 = vmatmul.mubr.f32.gmra.mrb[0].mxu0 %v2079
  %v2158 = vpop.f32.mrb[0].mxu0
  %v2159 = vadd.f32 0.0, %v2158
  %v2160 = vpop.f32.mrb[0].mxu0
  %2161 = vmatprep.mubr.f32.mxu0 0.0
  %2162 = vmatmul.mubr.f32.gmra.mrb[0].mxu0 %v2082
  %v2163 = vpop.f32.mrb[0].mxu0
  %v2164 = vadd.f32 0.0, %v2163
  %v2165 = vpop.f32.mrb[0].mxu0
  %2166 = vmatprep.mubr.f32.mxu0 0.0
  %2167 = vmatmul.mubr.f32.gmra.mrb[0].mxu0 %v2085
  %v2168 = vpop.f32.mrb[0].mxu0
  %v2169 = vadd.f32 0.0, %v2168
  %v2170 = vpop.f32.mrb[0].mxu0
  %2171 = vdwg.mxu0
  %v2173 = vsel %vm375, %v1685, 0
  %v2176 = vsel %vm375, %v1686, 0
  %v2179 = vsel %vm375, %v1687, 0
  %v2182 = vsel %vm375, %v1688, 0
  %2184 = vmatprep.subr.mxu0 0.0
  %2185 = vmatpush1.msra.mxu0 %v1689
  %2186 = vmatprep.subr.mxu0 0.0
  %2187 = vmatpush1.msra.mxu0 %v1690
  %2188 = vmatprep.subr.mxu0 0.0
  %2189 = vmatpush1.msra.mxu0 0.0
  %2190 = vmatprep.subr.mxu0 0.0
  %2191 = vmatpush1.msra.mxu0 0.0
  %2192 = vmatprep.subr.mxu0 0.0
  %2193 = vmatpush1.msra.mxu0 0.0
  %2194 = vmatprep.subr.mxu0 0.0
  %2195 = vmatpush1.msra.mxu0 0.0
  %2196 = vmatprep.subr.mxu0 0.0
  %2197 = vmatpush1.msra.mxu0 0.0
  %2198 = vmatprep.subr.mxu0 0.0
  %2199 = vmatpush1.msra.mxu0 0.0
  %2200 = vmatprep.subr.mxu0 0.0
  %2201 = vmatpush1.msra.mxu0 0.0
  %2202 = vmatprep.subr.mxu0 0.0
  %2203 = vmatpush1.msra.mxu0 0.0
  %2204 = vmatprep.subr.mxu0 0.0
  %2205 = vmatpush1.msra.mxu0 0.0
  %2206 = vmatprep.subr.mxu0 0.0
  %2207 = vmatpush1.msra.mxu0 0.0
  %2208 = vmatprep.subr.mxu0 0.0
  %2209 = vmatpush1.msra.mxu0 0.0
  %2210 = vmatprep.subr.mxu0 0.0
  %2211 = vmatpush1.msra.mxu0 0.0
  %2212 = vmatprep.subr.mxu0 0.0
  %2213 = vmatpush1.msra.mxu0 0.0
  %2214 = vmatprep.subr.mxu0 0.0
  %2215 = vmatpush1.msra.mxu0 0.0
  %2216 = vmatprep.subr.mxu0 0.0
  %2217 = vmatpush1.msra.mxu0 0.0
  %2218 = vmatprep.subr.mxu0 0.0
  %2219 = vmatpush1.msra.mxu0 0.0
  %2220 = vmatprep.subr.mxu0 0.0
  %2221 = vmatpush1.msra.mxu0 0.0
  %2222 = vmatprep.subr.mxu0 0.0
  %2223 = vmatpush1.msra.mxu0 0.0
  %2224 = vmatprep.subr.mxu0 0.0
  %2225 = vmatpush1.msra.mxu0 0.0
  %2226 = vmatprep.subr.mxu0 0.0
  %2227 = vmatpush1.msra.mxu0 0.0
  %2228 = vmatprep.subr.mxu0 0.0
  %2229 = vmatpush1.msra.mxu0 0.0
  %2230 = vmatprep.subr.mxu0 0.0
  %2231 = vmatpush1.msra.mxu0 0.0
  %2232 = vmatprep.subr.mxu0 0.0
  %2233 = vmatpush1.msra.mxu0 0.0
  %2234 = vmatprep.subr.mxu0 0.0
  %2235 = vmatpush1.msra.mxu0 0.0
  %2236 = vmatprep.subr.mxu0 0.0
  %2237 = vmatpush1.msra.mxu0 0.0
  %2238 = vmatprep.subr.mxu0 0.0
  %2239 = vmatpush1.msra.mxu0 0.0
  %2240 = vmatprep.subr.mxu0 0.0
  %2241 = vmatpush1.msra.mxu0 0.0
  %2242 = vmatprep.subr.mxu0 0.0
  %2243 = vmatpush1.msra.mxu0 0.0
  %2244 = vmatprep.subr.mxu0 0.0
  %2245 = vmatpush1.msra.mxu0 0.0
  %2246 = vmatprep.subr.mxu0 0.0
  %2247 = vmatpush1.msra.mxu0 0.0
  %2248 = vmatprep.mubr.f32.mxu0 0.0
  %2249 = vmatmul.mubr.f32.gmra.mrb[0].mxu0 %v2173
  %v2250 = vpop.f32.mrb[0].mxu0
  %v2251 = vadd.f32 %v2154, %v2250
  %v2252 = vpop.f32.mrb[0].mxu0
  %2253 = vmatprep.mubr.f32.mxu0 0.0
  %2254 = vmatmul.mubr.f32.gmra.mrb[0].mxu0 %v2176
  %v2255 = vpop.f32.mrb[0].mxu0
  %v2256 = vadd.f32 %v2159, %v2255
  %v2257 = vpop.f32.mrb[0].mxu0
  %2258 = vmatprep.mubr.f32.mxu0 0.0
  %2259 = vmatmul.mubr.f32.gmra.mrb[0].mxu0 %v2179
  %v2260 = vpop.f32.mrb[0].mxu0
  %v2261 = vadd.f32 %v2164, %v2260
  %v2262 = vpop.f32.mrb[0].mxu0
  %2263 = vmatprep.mubr.f32.mxu0 0.0
  %2264 = vmatmul.mubr.f32.gmra.mrb[0].mxu0 %v2182
  %v2265 = vpop.f32.mrb[0].mxu0
  %v2266 = vadd.f32 %v2169, %v2265
  %v2267 = vpop.f32.mrb[0].mxu0
  %2268 = vdwg.mxu0
  %v2269 = vld [vmem:[%s21] sm:$0x3]
  %v2270 = vlaneseq
  %v2271 = vshrl.u32 %v2270, 7
  %v2272 = vsub.s32 0, %v2271
  %v2273 = vrot.slane %v2269, %v2272
  %v2274 = vmul.f32 %v2251, %v2273
  %v2275 = vmul.f32 %v2256, %v2273
  %v2276 = vmul.f32 %v2261, %v2273
  %v2277 = vmul.f32 %v2266, %v2273
  %v2278 = vsel %vm375, %v2274, 0.0
  %2279 = vadd.xlane.f32.xlu0 %v2278
  %v2280 = vpop.xlane.xlu0 %2279
  %v2281 = vsel %vm375, %v2275, 0.0
  %2282 = vadd.xlane.f32.xlu0 %v2281
  %v2283 = vpop.xlane.xlu0 %2282
  %v2284 = vsel %vm375, %v2276, 0.0
  %2285 = vadd.xlane.f32.xlu0 %v2284
  %v2286 = vpop.xlane.xlu0 %2285
  %v2287 = vsel %vm375, %v2277, 0.0
  %2288 = vadd.xlane.f32.xlu0 %v2287
  %v2289 = vpop.xlane.xlu0 %2288
  %v2291 = vrot.slane %v2269, 1
  %v2292 = vsel %vm375, %v2291, 0
  %v2295 = vsel %vm375, %v2251, 0
  %v2298 = vsel %vm375, %v2256, 0
  %v2301 = vsel %vm375, %v2261, 0
  %v2304 = vsel %vm375, %v2266, 0
  %2306 = vmatprep.subr.mxu0 0.0
  %2307 = vmatpush1.xpose.msra.mxu0 %v2295
  %2308 = vmatprep.subr.mxu0 0.0
  %2309 = vmatpush1.xpose.msra.mxu0 %v2298
  %2310 = vmatprep.subr.mxu0 0.0
  %2311 = vmatpush1.xpose.msra.mxu0 %v2301
  %2312 = vmatprep.subr.mxu0 0.0
  %2313 = vmatpush1.xpose.msra.mxu0 %v2304
  %2314 = vmatprep.subr.mxu0 0.0
  %2315 = vmatpush1.xpose.msra.mxu0 0.0
  %2316 = vmatprep.subr.mxu0 0.0
  %2317 = vmatpush1.xpose.msra.mxu0 0.0
  %2318 = vmatprep.subr.mxu0 0.0
  %2319 = vmatpush1.xpose.msra.mxu0 0.0
  %2320 = vmatprep.subr.mxu0 0.0
  %2321 = vmatpush1.xpose.msra.mxu0 0.0
  %2322 = vmatprep.subr.mxu0 0.0
  %2323 = vmatpush1.xpose.msra.mxu0 0.0
  %2324 = vmatprep.subr.mxu0 0.0
  %2325 = vmatpush1.xpose.msra.mxu0 0.0
  %2326 = vmatprep.subr.mxu0 0.0
  %2327 = vmatpush1.xpose.msra.mxu0 0.0
  %2328 = vmatprep.subr.mxu0 0.0
  %2329 = vmatpush1.xpose.msra.mxu0 0.0
  %2330 = vmatprep.subr.mxu0 0.0
  %2331 = vmatpush1.xpose.msra.mxu0 0.0
  %2332 = vmatprep.subr.mxu0 0.0
  %2333 = vmatpush1.xpose.msra.mxu0 0.0
  %2334 = vmatprep.subr.mxu0 0.0
  %2335 = vmatpush1.xpose.msra.mxu0 0.0
  %2336 = vmatprep.subr.mxu0 0.0
  %2337 = vmatpush1.xpose.msra.mxu0 0.0
  %2338 = vmatprep.subr.mxu0 0.0
  %2339 = vmatpush1.xpose.msra.mxu0 0.0
  %2340 = vmatprep.subr.mxu0 0.0
  %2341 = vmatpush1.xpose.msra.mxu0 0.0
  %2342 = vmatprep.subr.mxu0 0.0
  %2343 = vmatpush1.xpose.msra.mxu0 0.0
  %2344 = vmatprep.subr.mxu0 0.0
  %2345 = vmatpush1.xpose.msra.mxu0 0.0
  %2346 = vmatprep.subr.mxu0 0.0
  %2347 = vmatpush1.xpose.msra.mxu0 0.0
  %2348 = vmatprep.subr.mxu0 0.0
  %2349 = vmatpush1.xpose.msra.mxu0 0.0
  %2350 = vmatprep.subr.mxu0 0.0
  %2351 = vmatpush1.xpose.msra.mxu0 0.0
  %2352 = vmatprep.subr.mxu0 0.0
  %2353 = vmatpush1.xpose.msra.mxu0 0.0
  %2354 = vmatprep.subr.mxu0 0.0
  %2355 = vmatpush1.xpose.msra.mxu0 0.0
  %2356 = vmatprep.subr.mxu0 0.0
  %2357 = vmatpush1.xpose.msra.mxu0 0.0
  %2358 = vmatprep.subr.mxu0 0.0
  %2359 = vmatpush1.xpose.msra.mxu0 0.0
  %2360 = vmatprep.subr.mxu0 0.0
  %2361 = vmatpush1.xpose.msra.mxu0 0.0
  %2362 = vmatprep.subr.mxu0 0.0
  %2363 = vmatpush1.xpose.msra.mxu0 0.0
  %2364 = vmatprep.subr.mxu0 0.0
  %2365 = vmatpush1.xpose.msra.mxu0 0.0
  %2366 = vmatprep.subr.mxu0 0.0
  %2367 = vmatpush1.xpose.msra.mxu0 0.0
  %2368 = vmatprep.subr.mxu0 0.0
  %2369 = vmatpush1.xpose.msra.mxu0 0.0
  %2370 = vmatprep.mubr.f32.mxu0 0.0
  %2371 = vmatmul.mubr.f32.gmra.mrb[0].mxu0 %v2292
  %v2372 = vpop.f32.mrb[0].mxu0
  %v2373 = vadd.f32 0.0, %v2372
  %v2374 = vpop.f32.mrb[0].mxu0
  %2375 = vdwg.mxu0
  %v2376 = vlaneseq
  %v2377 = vshrl.u32 %v2376, 7
  %v2378 = vsub.s32 0, %v2377
  %v2379 = vrot.slane %v2373, %v2378
  %v2380 = vadd.f32 %v2280, %v2379
  %v2381 = vadd.f32 %v2283, %v2379
  %v2382 = vadd.f32 %v2286, %v2379
  %v2383 = vadd.f32 %v2289, %v2379
  %vm2384 = vcmp.ge.f32.partialorder %v2380, 0.0
  %vm2385 = vcmp.ge.f32.partialorder %v2381, 0.0
  %vm2386 = vcmp.ge.f32.partialorder %v2382, 0.0
  %vm2387 = vcmp.ge.f32.partialorder %v2383, 0.0
  %v2388 = vmul.f32 %v2380, 0.2
  %v2389 = vmul.f32 %v2381, 0.2
  %v2390 = vmul.f32 %v2382, 0.2
  %v2391 = vmul.f32 %v2383, 0.2
  %v2392 = vsel %vm2384, %v2380, %v2388
  %v2393 = vsel %vm2385, %v2381, %v2389
  %v2394 = vsel %vm2386, %v2382, %v2390
  %v2395 = vsel %vm2387, %v2383, %v2391
  %v2396 = vsel %vm1520, %v2392, -9e+15
  %v2397 = vsel %vm1521, %v2393, -9e+15
  %v2398 = vsel %vm1522, %v2394, -9e+15
  %v2399 = vsel %vm1523, %v2395, -9e+15
  %v2400 = vsel %vm473, %v2396, -inf
  %2401 = vmax.xlane.f32.xlu0 %v2400
  %v2402 = vpop.xlane.xlu0 %2401
  %v2403 = vsel %vm473, %v2397, -inf
  %2404 = vmax.xlane.f32.xlu0 %v2403
  %v2405 = vpop.xlane.xlu0 %2404
  %v2406 = vsel %vm473, %v2398, -inf
  %2407 = vmax.xlane.f32.xlu0 %v2406
  %v2408 = vpop.xlane.xlu0 %2407
  %v2409 = vsel %vm473, %v2399, -inf
  %2410 = vmax.xlane.f32.xlu0 %v2409
  %v2411 = vpop.xlane.xlu0 %2410
  %v2412 = vsub.f32 %v2396, %v2402
  %v2413 = vsub.f32 %v2397, %v2405
  %v2414 = vsub.f32 %v2398, %v2408
  %v2415 = vsub.f32 %v2399, %v2411
  %v2416 = vmul.f32 %v2412, 1.442695
  %v2417 = vpow.pop %v2416
  %v2418 = vmul.f32 %v2413, 1.442695
  %v2419 = vpow.pop %v2418
  %v2420 = vmul.f32 %v2414, 1.442695
  %v2421 = vpow.pop %v2420
  %v2422 = vmul.f32 %v2415, 1.442695
  %v2423 = vpow.pop %v2422
  %v2424 = vsel %vm473, %v2417, 0.0
  %2425 = vadd.xlane.f32.xlu0 %v2424
  %v2426 = vpop.xlane.xlu0 %2425
  %v2427 = vsel %vm473, %v2419, 0.0
  %2428 = vadd.xlane.f32.xlu0 %v2427
  %v2429 = vpop.xlane.xlu0 %2428
  %v2430 = vsel %vm473, %v2421, 0.0
  %2431 = vadd.xlane.f32.xlu0 %v2430
  %v2432 = vpop.xlane.xlu0 %2431
  %v2433 = vsel %vm473, %v2423, 0.0
  %2434 = vadd.xlane.f32.xlu0 %v2433
  %v2435 = vpop.xlane.xlu0 %2434
  %v2436 = vrcp.pop %v2426
  %v2437 = vrcp.pop %v2429
  %v2438 = vrcp.pop %v2432
  %v2439 = vrcp.pop %v2435
  %v2440 = vmul.f32 %v2417, %v2436
  %v2441 = vmul.f32 %v2419, %v2437
  %v2442 = vmul.f32 %v2421, %v2438
  %v2443 = vmul.f32 %v2423, %v2439
  %v2445 = vsel %vm473, %v2440, 0
  %v2448 = vsel %vm473, %v2441, 0
  %v2451 = vsel %vm473, %v2442, 0
  %v2454 = vsel %vm473, %v2443, 0
  %2456 = vmatprep.subr.mxu0 0.0
  %2457 = vmatpush1.msra.mxu0 %v2251
  %2458 = vmatprep.subr.mxu0 0.0
  %2459 = vmatpush1.msra.mxu0 %v2256
  %2460 = vmatprep.subr.mxu0 0.0
  %2461 = vmatpush1.msra.mxu0 %v2261
  %2462 = vmatprep.subr.mxu0 0.0
  %2463 = vmatpush1.msra.mxu0 %v2266
  %2464 = vmatprep.subr.mxu0 0.0
  %2465 = vmatpush1.msra.mxu0 0.0
  %2466 = vmatprep.subr.mxu0 0.0
  %2467 = vmatpush1.msra.mxu0 0.0
  %2468 = vmatprep.subr.mxu0 0.0
  %2469 = vmatpush1.msra.mxu0 0.0
  %2470 = vmatprep.subr.mxu0 0.0
  %2471 = vmatpush1.msra.mxu0 0.0
  %2472 = vmatprep.subr.mxu0 0.0
  %2473 = vmatpush1.msra.mxu0 0.0
  %2474 = vmatprep.subr.mxu0 0.0
  %2475 = vmatpush1.msra.mxu0 0.0
  %2476 = vmatprep.subr.mxu0 0.0
  %2477 = vmatpush1.msra.mxu0 0.0
  %2478 = vmatprep.subr.mxu0 0.0
  %2479 = vmatpush1.msra.mxu0 0.0
  %2480 = vmatprep.subr.mxu0 0.0
  %2481 = vmatpush1.msra.mxu0 0.0
  %2482 = vmatprep.subr.mxu0 0.0
  %2483 = vmatpush1.msra.mxu0 0.0
  %2484 = vmatprep.subr.mxu0 0.0
  %2485 = vmatpush1.msra.mxu0 0.0
  %2486 = vmatprep.subr.mxu0 0.0
  %2487 = vmatpush1.msra.mxu0 0.0
  %2488 = vmatprep.subr.mxu0 0.0
  %2489 = vmatpush1.msra.mxu0 0.0
  %2490 = vmatprep.subr.mxu0 0.0
  %2491 = vmatpush1.msra.mxu0 0.0
  %2492 = vmatprep.subr.mxu0 0.0
  %2493 = vmatpush1.msra.mxu0 0.0
  %2494 = vmatprep.subr.mxu0 0.0
  %2495 = vmatpush1.msra.mxu0 0.0
  %2496 = vmatprep.subr.mxu0 0.0
  %2497 = vmatpush1.msra.mxu0 0.0
  %2498 = vmatprep.subr.mxu0 0.0
  %2499 = vmatpush1.msra.mxu0 0.0
  %2500 = vmatprep.subr.mxu0 0.0
  %2501 = vmatpush1.msra.mxu0 0.0
  %2502 = vmatprep.subr.mxu0 0.0
  %2503 = vmatpush1.msra.mxu0 0.0
  %2504 = vmatprep.subr.mxu0 0.0
  %2505 = vmatpush1.msra.mxu0 0.0
  %2506 = vmatprep.subr.mxu0 0.0
  %2507 = vmatpush1.msra.mxu0 0.0
  %2508 = vmatprep.subr.mxu0 0.0
  %2509 = vmatpush1.msra.mxu0 0.0
  %2510 = vmatprep.subr.mxu0 0.0
  %2511 = vmatpush1.msra.mxu0 0.0
  %2512 = vmatprep.subr.mxu0 0.0
  %2513 = vmatpush1.msra.mxu0 0.0
  %2514 = vmatprep.subr.mxu0 0.0
  %2515 = vmatpush1.msra.mxu0 0.0
  %2516 = vmatprep.subr.mxu0 0.0
  %2517 = vmatpush1.msra.mxu0 0.0
  %2518 = vmatprep.subr.mxu0 0.0
  %2519 = vmatpush1.msra.mxu0 0.0
  %2520 = vmatprep.mubr.f32.mxu0 0.0
  %2521 = vmatmul.mubr.f32.gmra.mrb[0].mxu0 %v2445
  %v2522 = vpop.f32.mrb[0].mxu0
  %v2523 = vadd.f32 0.0, %v2522
  %v2524 = vpop.f32.mrb[0].mxu0
  %2525 = vmatprep.mubr.f32.mxu0 0.0
  %2526 = vmatmul.mubr.f32.gmra.mrb[0].mxu0 %v2448
  %v2527 = vpop.f32.mrb[0].mxu0
  %v2528 = vadd.f32 0.0, %v2527
  %v2529 = vpop.f32.mrb[0].mxu0
  %2530 = vmatprep.mubr.f32.mxu0 0.0
  %2531 = vmatmul.mubr.f32.gmra.mrb[0].mxu0 %v2451
  %v2532 = vpop.f32.mrb[0].mxu0
  %v2533 = vadd.f32 0.0, %v2532
  %v2534 = vpop.f32.mrb[0].mxu0
  %2535 = vmatprep.mubr.f32.mxu0 0.0
  %2536 = vmatmul.mubr.f32.gmra.mrb[0].mxu0 %v2454
  %v2537 = vpop.f32.mrb[0].mxu0
  %v2538 = vadd.f32 0.0, %v2537
  %v2539 = vpop.f32.mrb[0].mxu0
  %2540 = vdwg.mxu0
  %vm2541 = vcmp.gt.f32.partialorder %v2523, 0.0
  %vm2542 = vcmp.gt.f32.partialorder %v2528, 0.0
  %vm2543 = vcmp.gt.f32.partialorder %v2533, 0.0
  %vm2544 = vcmp.gt.f32.partialorder %v2538, 0.0
  %v2545 = vmul.f32 %v2523, 1.442695
  %v2546 = vpow.pop %v2545
  %v2547 = vmul.f32 %v2528, 1.442695
  %v2548 = vpow.pop %v2547
  %v2549 = vmul.f32 %v2533, 1.442695
  %v2550 = vpow.pop %v2549
  %v2551 = vmul.f32 %v2538, 1.442695
  %v2552 = vpow.pop %v2551
  %v2553 = vsub.f32 %v2546, 1.0
  %v2554 = vsub.f32 %v2548, 1.0
  %v2555 = vsub.f32 %v2550, 1.0
  %v2556 = vsub.f32 %v2552, 1.0
  %v2557 = vsel %vm2541, %v2523, %v2553
  %v2558 = vsel %vm2542, %v2528, %v2554
  %v2559 = vsel %vm2543, %v2533, %v2555
  %v2560 = vsel %vm2544, %v2538, %v2556
  %v2561 = vld [vmem:[%s22] sm:$0x3]
  %v2562 = vlaneseq
  %v2563 = vshrl.u32 %v2562, 7
  %v2564 = vsub.s32 0, %v2563
  %v2565 = vrot.slane %v2561, %v2564
  %v2566 = vmul.f32 %v2557, %v2565
  %v2567 = vmul.f32 %v2558, %v2565
  %v2568 = vmul.f32 %v2559, %v2565
  %v2569 = vmul.f32 %v2560, %v2565
  %v2570 = vlaneseq
  %v2571 = vshrl.u32 %v2570, 7
  %v2572 = vsub.s32 1, %v2571
  %v2573 = vrot.slane %v2561, %v2572
  %v2574 = vadd.f32 %v2566, %v2573
  %v2575 = vadd.f32 %v2567, %v2573
  %v2576 = vadd.f32 %v2568, %v2573
  %v2577 = vadd.f32 %v2569, %v2573
  %vm2578 = vcmp.ge.f32.partialorder %v2574, 0.0
  %vm2579 = vcmp.ge.f32.partialorder %v2575, 0.0
  %vm2580 = vcmp.ge.f32.partialorder %v2576, 0.0
  %vm2581 = vcmp.ge.f32.partialorder %v2577, 0.0
  %v2582 = vmul.f32 %v2574, 0.01
  %v2583 = vmul.f32 %v2575, 0.01
  %v2584 = vmul.f32 %v2576, 0.01
  %v2585 = vmul.f32 %v2577, 0.01
  %v2586 = vsel %vm2578, %v2574, %v2582
  %v2587 = vsel %vm2579, %v2575, %v2583
  %v2588 = vsel %vm2580, %v2576, %v2584
  %v2589 = vsel %vm2581, %v2577, %v2585
  %v2590 = vld [vmem:[%s23] sm:$0x1f]
  %v2591 = vmin.f32 %v1290, %v2586
  %v2592 = vmin.f32 %v1291, %v2587
  %v2593 = vmin.f32 %v1292, %v2588
  %v2594 = vmin.f32 %v1293, %v2589
  %v2595 = vmax.f32 %v1290, %v2586
  %v2596 = vmax.f32 %v1291, %v2587
  %v2597 = vmax.f32 %v1292, %v2588
  %v2598 = vmax.f32 %v1293, %v2589
  %v2599 = vlaneseq
  %v2600 = vshrl.u32 %v2599, 7
  %v2601 = vsub.s32 0, %v2600
  %v2602 = vrot.slane %v2590, %v2601
  %v2603 = vmul.f32 %v2591, %v2602
  %v2604 = vmul.f32 %v2592, %v2602
  %v2605 = vmul.f32 %v2593, %v2602
  %v2606 = vmul.f32 %v2594, %v2602
  %v2607 = vlaneseq
  %v2608 = vshrl.u32 %v2607, 7
  %v2609 = vsub.s32 1, %v2608
  %v2610 = vrot.slane %v2590, %v2609
  %v2611 = vmul.f32 %v2595, %v2610
  %v2612 = vmul.f32 %v2596, %v2610
  %v2613 = vmul.f32 %v2597, %v2610
  %v2614 = vmul.f32 %v2598, %v2610
  %v2615 = vadd.f32 %v2603, %v2611
  %v2616 = vadd.f32 %v2604, %v2612
  %v2617 = vadd.f32 %v2605, %v2613
  %v2618 = vadd.f32 %v2606, %v2614
  %v2619 = vlaneseq
  %v2620 = vshrl.u32 %v2619, 7
  %v2621 = vsub.s32 2, %v2620
  %v2622 = vrot.slane %v2590, %v2621
  %v2623 = vmul.f32 %v1290, %v2622
  %v2624 = vmul.f32 %v1291, %v2622
  %v2625 = vmul.f32 %v1292, %v2622
  %v2626 = vmul.f32 %v1293, %v2622
  %v2627 = vadd.f32 %v2615, %v2623
  %v2628 = vadd.f32 %v2616, %v2624
  %v2629 = vadd.f32 %v2617, %v2625
  %v2630 = vadd.f32 %v2618, %v2626
  %v2631 = vlaneseq
  %v2632 = vshrl.u32 %v2631, 7
  %v2633 = vsub.s32 3, %v2632
  %v2634 = vrot.slane %v2590, %v2633
  %v2635 = vmul.f32 %v2586, %v2634
  %v2636 = vmul.f32 %v2587, %v2634
  %v2637 = vmul.f32 %v2588, %v2634
  %v2638 = vmul.f32 %v2589, %v2634
  %v2639 = vadd.f32 %v2627, %v2635
  %v2640 = vadd.f32 %v2628, %v2636
  %v2641 = vadd.f32 %v2629, %v2637
  %v2642 = vadd.f32 %v2630, %v2638
  %v2643 = vlaneseq
  %v2644 = vshrl.u32 %v2643, 7
  %v2645 = vsub.s32 4, %v2644
  %v2646 = vrot.slane %v2590, %v2645
  %v2647 = vadd.f32 %v2639, %v2646
  %v2648 = vadd.f32 %v2640, %v2646
  %v2649 = vadd.f32 %v2641, %v2646
  %v2650 = vadd.f32 %v2642, %v2646
  %vm2651 = vcmp.ge.f32.partialorder %v2647, 0.0
  %vm2652 = vcmp.ge.f32.partialorder %v2648, 0.0
  %vm2653 = vcmp.ge.f32.partialorder %v2649, 0.0
  %vm2654 = vcmp.ge.f32.partialorder %v2650, 0.0
  %v2655 = vmul.f32 %v2647, 0.2
  %v2656 = vmul.f32 %v2648, 0.2
  %v2657 = vmul.f32 %v2649, 0.2
  %v2658 = vmul.f32 %v2650, 0.2
  %v2659 = vsel %vm2651, %v2647, %v2655
  %v2660 = vsel %vm2652, %v2648, %v2656
  %v2661 = vsel %vm2653, %v2649, %v2657
  %v2662 = vsel %vm2654, %v2650, %v2658
  %v2664 = vsel %vm473, %v81, 0
  %v2667 = vsel %vm473, %v82, 0
  %v2670 = vsel %vm473, %v83, 0
  %v2673 = vsel %vm473, %v84, 0
  %v2676 = vsel %vm473, %v85, 0
  %v2679 = vsel %vm473, %v86, 0
  %v2682 = vsel %vm473, %v87, 0
  %v2685 = vsel %vm473, %v88, 0
  %v2688 = vsel %vm473, %v89, 0
  %v2691 = vsel %vm473, %v90, 0
  %v2694 = vsel %vm473, %v91, 0
  %v2697 = vsel %vm473, %v92, 0
  %v2700 = vsel %vm473, %v93, 0
  %v2703 = vsel %vm473, %v94, 0
  %v2706 = vsel %vm473, %v95, 0
  %v2709 = vsel %vm473, %v96, 0
  %v2712 = vsel %vm473, %v97, 0
  %v2715 = vsel %vm473, %v98, 0
  %v2718 = vsel %vm473, %v99, 0
  %v2721 = vsel %vm473, %v100, 0
  %v2724 = vsel %vm473, %v101, 0
  %v2727 = vsel %vm473, %v102, 0
  %v2730 = vsel %vm473, %v103, 0
  %v2733 = vsel %vm473, %v104, 0
  %v2736 = vsel %vm473, %v105, 0
  %v2739 = vsel %vm473, %v106, 0
  %v2742 = vsel %vm473, %v107, 0
  %v2745 = vsel %vm473, %v108, 0
  %v2748 = vsel %vm473, %v109, 0
  %v2751 = vsel %vm473, %v110, 0
  %v2754 = vsel %vm473, %v111, 0
  %v2757 = vsel %vm473, %v112, 0
  %2759 = vmatprep.subr.mxu0 0.0
  %2760 = vmatpush1.msra.mxu0 %v2659
  %2761 = vmatprep.subr.mxu0 0.0
  %2762 = vmatpush1.msra.mxu0 %v2660
  %2763 = vmatprep.subr.mxu0 0.0
  %2764 = vmatpush1.msra.mxu0 %v2661
  %2765 = vmatprep.subr.mxu0 0.0
  %2766 = vmatpush1.msra.mxu0 %v2662
  %2767 = vmatprep.subr.mxu0 0.0
  %2768 = vmatpush1.msra.mxu0 0.0
  %2769 = vmatprep.subr.mxu0 0.0
  %2770 = vmatpush1.msra.mxu0 0.0
  %2771 = vmatprep.subr.mxu0 0.0
  %2772 = vmatpush1.msra.mxu0 0.0
  %2773 = vmatprep.subr.mxu0 0.0
  %2774 = vmatpush1.msra.mxu0 0.0
  %2775 = vmatprep.subr.mxu0 0.0
  %2776 = vmatpush1.msra.mxu0 0.0
  %2777 = vmatprep.subr.mxu0 0.0
  %2778 = vmatpush1.msra.mxu0 0.0
  %2779 = vmatprep.subr.mxu0 0.0
  %2780 = vmatpush1.msra.mxu0 0.0
  %2781 = vmatprep.subr.mxu0 0.0
  %2782 = vmatpush1.msra.mxu0 0.0
  %2783 = vmatprep.subr.mxu0 0.0
  %2784 = vmatpush1.msra.mxu0 0.0
  %2785 = vmatprep.subr.mxu0 0.0
  %2786 = vmatpush1.msra.mxu0 0.0
  %2787 = vmatprep.subr.mxu0 0.0
  %2788 = vmatpush1.msra.mxu0 0.0
  %2789 = vmatprep.subr.mxu0 0.0
  %2790 = vmatpush1.msra.mxu0 0.0
  %2791 = vmatprep.subr.mxu0 0.0
  %2792 = vmatpush1.msra.mxu0 0.0
  %2793 = vmatprep.subr.mxu0 0.0
  %2794 = vmatpush1.msra.mxu0 0.0
  %2795 = vmatprep.subr.mxu0 0.0
  %2796 = vmatpush1.msra.mxu0 0.0
  %2797 = vmatprep.subr.mxu0 0.0
  %2798 = vmatpush1.msra.mxu0 0.0
  %2799 = vmatprep.subr.mxu0 0.0
  %2800 = vmatpush1.msra.mxu0 0.0
  %2801 = vmatprep.subr.mxu0 0.0
  %2802 = vmatpush1.msra.mxu0 0.0
  %2803 = vmatprep.subr.mxu0 0.0
  %2804 = vmatpush1.msra.mxu0 0.0
  %2805 = vmatprep.subr.mxu0 0.0
  %2806 = vmatpush1.msra.mxu0 0.0
  %2807 = vmatprep.subr.mxu0 0.0
  %2808 = vmatpush1.msra.mxu0 0.0
  %2809 = vmatprep.subr.mxu0 0.0
  %2810 = vmatpush1.msra.mxu0 0.0
  %2811 = vmatprep.subr.mxu0 0.0
  %2812 = vmatpush1.msra.mxu0 0.0
  %2813 = vmatprep.subr.mxu0 0.0
  %2814 = vmatpush1.msra.mxu0 0.0
  %2815 = vmatprep.subr.mxu0 0.0
  %2816 = vmatpush1.msra.mxu0 0.0
  %2817 = vmatprep.subr.mxu0 0.0
  %2818 = vmatpush1.msra.mxu0 0.0
  %2819 = vmatprep.subr.mxu0 0.0
  %2820 = vmatpush1.msra.mxu0 0.0
  %2821 = vmatprep.subr.mxu0 0.0
  %2822 = vmatpush1.msra.mxu0 0.0
  %2823 = vmatprep.mubr.f32.mxu0 0.0
  %2824 = vmatmul.mubr.f32.gmra.mrb[0].mxu0 %v2664
  %v2825 = vpop.f32.mrb[0].mxu0
  %v2826 = vadd.f32 0.0, %v2825
  %v2827 = vpop.f32.mrb[0].mxu0
  %2828 = vmatprep.mubr.f32.mxu0 0.0
  %2829 = vmatmul.mubr.f32.gmra.mrb[0].mxu0 %v2667
  %v2830 = vpop.f32.mrb[0].mxu0
  %v2831 = vadd.f32 0.0, %v2830
  %v2832 = vpop.f32.mrb[0].mxu0
  %2833 = vmatprep.mubr.f32.mxu0 0.0
  %2834 = vmatmul.mubr.f32.gmra.mrb[0].mxu0 %v2670
  %v2835 = vpop.f32.mrb[0].mxu0
  %v2836 = vadd.f32 0.0, %v2835
  %v2837 = vpop.f32.mrb[0].mxu0
  %2838 = vmatprep.mubr.f32.mxu0 0.0
  %2839 = vmatmul.mubr.f32.gmra.mrb[0].mxu0 %v2673
  %v2840 = vpop.f32.mrb[0].mxu0
  %v2841 = vadd.f32 0.0, %v2840
  %v2842 = vpop.f32.mrb[0].mxu0
  %2843 = vmatprep.mubr.f32.mxu0 0.0
  %2844 = vmatmul.mubr.f32.gmra.mrb[0].mxu0 %v2676
  %v2845 = vpop.f32.mrb[0].mxu0
  %v2846 = vadd.f32 0.0, %v2845
  %v2847 = vpop.f32.mrb[0].mxu0
  %2848 = vmatprep.mubr.f32.mxu0 0.0
  %2849 = vmatmul.mubr.f32.gmra.mrb[0].mxu0 %v2679
  %v2850 = vpop.f32.mrb[0].mxu0
  %v2851 = vadd.f32 0.0, %v2850
  %v2852 = vpop.f32.mrb[0].mxu0
  %2853 = vmatprep.mubr.f32.mxu0 0.0
  %2854 = vmatmul.mubr.f32.gmra.mrb[0].mxu0 %v2682
  %v2855 = vpop.f32.mrb[0].mxu0
  %v2856 = vadd.f32 0.0, %v2855
  %v2857 = vpop.f32.mrb[0].mxu0
  %2858 = vmatprep.mubr.f32.mxu0 0.0
  %2859 = vmatmul.mubr.f32.gmra.mrb[0].mxu0 %v2685
  %v2860 = vpop.f32.mrb[0].mxu0
  %v2861 = vadd.f32 0.0, %v2860
  %v2862 = vpop.f32.mrb[0].mxu0
  %2863 = vmatprep.mubr.f32.mxu0 0.0
  %2864 = vmatmul.mubr.f32.gmra.mrb[0].mxu0 %v2688
  %v2865 = vpop.f32.mrb[0].mxu0
  %v2866 = vadd.f32 0.0, %v2865
  %v2867 = vpop.f32.mrb[0].mxu0
  %2868 = vmatprep.mubr.f32.mxu0 0.0
  %2869 = vmatmul.mubr.f32.gmra.mrb[0].mxu0 %v2691
  %v2870 = vpop.f32.mrb[0].mxu0
  %v2871 = vadd.f32 0.0, %v2870
  %v2872 = vpop.f32.mrb[0].mxu0
  %2873 = vmatprep.mubr.f32.mxu0 0.0
  %2874 = vmatmul.mubr.f32.gmra.mrb[0].mxu0 %v2694
  %v2875 = vpop.f32.mrb[0].mxu0
  %v2876 = vadd.f32 0.0, %v2875
  %v2877 = vpop.f32.mrb[0].mxu0
  %2878 = vmatprep.mubr.f32.mxu0 0.0
  %2879 = vmatmul.mubr.f32.gmra.mrb[0].mxu0 %v2697
  %v2880 = vpop.f32.mrb[0].mxu0
  %v2881 = vadd.f32 0.0, %v2880
  %v2882 = vpop.f32.mrb[0].mxu0
  %2883 = vmatprep.mubr.f32.mxu0 0.0
  %2884 = vmatmul.mubr.f32.gmra.mrb[0].mxu0 %v2700
  %v2885 = vpop.f32.mrb[0].mxu0
  %v2886 = vadd.f32 0.0, %v2885
  %v2887 = vpop.f32.mrb[0].mxu0
  %2888 = vmatprep.mubr.f32.mxu0 0.0
  %2889 = vmatmul.mubr.f32.gmra.mrb[0].mxu0 %v2703
  %v2890 = vpop.f32.mrb[0].mxu0
  %v2891 = vadd.f32 0.0, %v2890
  %v2892 = vpop.f32.mrb[0].mxu0
  %2893 = vmatprep.mubr.f32.mxu0 0.0
  %2894 = vmatmul.mubr.f32.gmra.mrb[0].mxu0 %v2706
  %v2895 = vpop.f32.mrb[0].mxu0
  %v2896 = vadd.f32 0.0, %v2895
  %v2897 = vpop.f32.mrb[0].mxu0
  %2898 = vmatprep.mubr.f32.mxu0 0.0
  %2899 = vmatmul.mubr.f32.gmra.mrb[0].mxu0 %v2709
  %v2900 = vpop.f32.mrb[0].mxu0
  %v2901 = vadd.f32 0.0, %v2900
  %v2902 = vpop.f32.mrb[0].mxu0
  %2903 = vmatprep.mubr.f32.mxu0 0.0
  %2904 = vmatmul.mubr.f32.gmra.mrb[0].mxu0 %v2712
  %v2905 = vpop.f32.mrb[0].mxu0
  %v2906 = vadd.f32 0.0, %v2905
  %v2907 = vpop.f32.mrb[0].mxu0
  %2908 = vmatprep.mubr.f32.mxu0 0.0
  %2909 = vmatmul.mubr.f32.gmra.mrb[0].mxu0 %v2715
  %v2910 = vpop.f32.mrb[0].mxu0
  %v2911 = vadd.f32 0.0, %v2910
  %v2912 = vpop.f32.mrb[0].mxu0
  %2913 = vmatprep.mubr.f32.mxu0 0.0
  %2914 = vmatmul.mubr.f32.gmra.mrb[0].mxu0 %v2718
  %v2915 = vpop.f32.mrb[0].mxu0
  %v2916 = vadd.f32 0.0, %v2915
  %v2917 = vpop.f32.mrb[0].mxu0
  %2918 = vmatprep.mubr.f32.mxu0 0.0
  %2919 = vmatmul.mubr.f32.gmra.mrb[0].mxu0 %v2721
  %v2920 = vpop.f32.mrb[0].mxu0
  %v2921 = vadd.f32 0.0, %v2920
  %v2922 = vpop.f32.mrb[0].mxu0
  %2923 = vmatprep.mubr.f32.mxu0 0.0
  %2924 = vmatmul.mubr.f32.gmra.mrb[0].mxu0 %v2724
  %v2925 = vpop.f32.mrb[0].mxu0
  %v2926 = vadd.f32 0.0, %v2925
  %v2927 = vpop.f32.mrb[0].mxu0
  %2928 = vmatprep.mubr.f32.mxu0 0.0
  %2929 = vmatmul.mubr.f32.gmra.mrb[0].mxu0 %v2727
  %v2930 = vpop.f32.mrb[0].mxu0
  %v2931 = vadd.f32 0.0, %v2930
  %v2932 = vpop.f32.mrb[0].mxu0
  %2933 = vmatprep.mubr.f32.mxu0 0.0
  %2934 = vmatmul.mubr.f32.gmra.mrb[0].mxu0 %v2730
  %v2935 = vpop.f32.mrb[0].mxu0
  %v2936 = vadd.f32 0.0, %v2935
  %v2937 = vpop.f32.mrb[0].mxu0
  %2938 = vmatprep.mubr.f32.mxu0 0.0
  %2939 = vmatmul.mubr.f32.gmra.mrb[0].mxu0 %v2733
  %v2940 = vpop.f32.mrb[0].mxu0
  %v2941 = vadd.f32 0.0, %v2940
  %v2942 = vpop.f32.mrb[0].mxu0
  %2943 = vmatprep.mubr.f32.mxu0 0.0
  %2944 = vmatmul.mubr.f32.gmra.mrb[0].mxu0 %v2736
  %v2945 = vpop.f32.mrb[0].mxu0
  %v2946 = vadd.f32 0.0, %v2945
  %v2947 = vpop.f32.mrb[0].mxu0
  %2948 = vmatprep.mubr.f32.mxu0 0.0
  %2949 = vmatmul.mubr.f32.gmra.mrb[0].mxu0 %v2739
  %v2950 = vpop.f32.mrb[0].mxu0
  %v2951 = vadd.f32 0.0, %v2950
  %v2952 = vpop.f32.mrb[0].mxu0
  %2953 = vmatprep.mubr.f32.mxu0 0.0
  %2954 = vmatmul.mubr.f32.gmra.mrb[0].mxu0 %v2742
  %v2955 = vpop.f32.mrb[0].mxu0
  %v2956 = vadd.f32 0.0, %v2955
  %v2957 = vpop.f32.mrb[0].mxu0
  %2958 = vmatprep.mubr.f32.mxu0 0.0
  %2959 = vmatmul.mubr.f32.gmra.mrb[0].mxu0 %v2745
  %v2960 = vpop.f32.mrb[0].mxu0
  %v2961 = vadd.f32 0.0, %v2960
  %v2962 = vpop.f32.mrb[0].mxu0
  %2963 = vmatprep.mubr.f32.mxu0 0.0
  %2964 = vmatmul.mubr.f32.gmra.mrb[0].mxu0 %v2748
  %v2965 = vpop.f32.mrb[0].mxu0
  %v2966 = vadd.f32 0.0, %v2965
  %v2967 = vpop.f32.mrb[0].mxu0
  %2968 = vmatprep.mubr.f32.mxu0 0.0
  %2969 = vmatmul.mubr.f32.gmra.mrb[0].mxu0 %v2751
  %v2970 = vpop.f32.mrb[0].mxu0
  %v2971 = vadd.f32 0.0, %v2970
  %v2972 = vpop.f32.mrb[0].mxu0
  %2973 = vmatprep.mubr.f32.mxu0 0.0
  %2974 = vmatmul.mubr.f32.gmra.mrb[0].mxu0 %v2754
  %v2975 = vpop.f32.mrb[0].mxu0
  %v2976 = vadd.f32 0.0, %v2975
  %v2977 = vpop.f32.mrb[0].mxu0
  %2978 = vmatprep.mubr.f32.mxu0 0.0
  %2979 = vmatmul.mubr.f32.gmra.mrb[0].mxu0 %v2757
  %v2980 = vpop.f32.mrb[0].mxu0
  %v2981 = vadd.f32 0.0, %v2980
  %v2982 = vpop.f32.mrb[0].mxu0
  %2983 = vdwg.mxu0
  %2984 = vst.msk [vmem:[%s24] sm:$0xff] %vm375, %v2826
  %2985 = vst.msk [vmem:[%s24 + $0x8] sm:$0xff] %vm375, %v2831
  %2986 = vst.msk [vmem:[%s24 + $0x10] sm:$0xff] %vm375, %v2836
  %2987 = vst.msk [vmem:[%s24 + $0x18] sm:$0xff] %vm375, %v2841
  %2988 = vst.msk [vmem:[%s24 + $0x20] sm:$0xff] %vm375, %v2846
  %2989 = vst.msk [vmem:[%s24 + $0x28] sm:$0xff] %vm375, %v2851
  %2990 = vst.msk [vmem:[%s24 + $0x30] sm:$0xff] %vm375, %v2856
  %2991 = vst.msk [vmem:[%s24 + $0x38] sm:$0xff] %vm375, %v2861
  %2992 = vst.msk [vmem:[%s24 + $0x40] sm:$0xff] %vm375, %v2866
  %2993 = vst.msk [vmem:[%s24 + $0x48] sm:$0xff] %vm375, %v2871
  %2994 = vst.msk [vmem:[%s24 + $0x50] sm:$0xff] %vm375, %v2876
  %2995 = vst.msk [vmem:[%s24 + $0x58] sm:$0xff] %vm375, %v2881
  %2996 = vst.msk [vmem:[%s24 + $0x60] sm:$0xff] %vm375, %v2886
  %2997 = vst.msk [vmem:[%s24 + $0x68] sm:$0xff] %vm375, %v2891
  %2998 = vst.msk [vmem:[%s24 + $0x70] sm:$0xff] %vm375, %v2896
  %2999 = vst.msk [vmem:[%s24 + $0x78] sm:$0xff] %vm375, %v2901
  %3000 = vst.msk [vmem:[%s24 + $0x80] sm:$0xff] %vm375, %v2906
  %3001 = vst.msk [vmem:[%s24 + $0x88] sm:$0xff] %vm375, %v2911
  %3002 = vst.msk [vmem:[%s24 + $0x90] sm:$0xff] %vm375, %v2916
  %3003 = vst.msk [vmem:[%s24 + $0x98] sm:$0xff] %vm375, %v2921
  %3004 = vst.msk [vmem:[%s24 + $0xa0] sm:$0xff] %vm375, %v2926
  %3005 = vst.msk [vmem:[%s24 + $0xa8] sm:$0xff] %vm375, %v2931
  %3006 = vst.msk [vmem:[%s24 + $0xb0] sm:$0xff] %vm375, %v2936
  %3007 = vst.msk [vmem:[%s24 + $0xb8] sm:$0xff] %vm375, %v2941
  %3008 = vst.msk [vmem:[%s24 + $0xc0] sm:$0xff] %vm375, %v2946
  %3009 = vst.msk [vmem:[%s24 + $0xc8] sm:$0xff] %vm375, %v2951
  %3010 = vst.msk [vmem:[%s24 + $0xd0] sm:$0xff] %vm375, %v2956
  %3011 = vst.msk [vmem:[%s24 + $0xd8] sm:$0xff] %vm375, %v2961
  %3012 = vst.msk [vmem:[%s24 + $0xe0] sm:$0xff] %vm375, %v2966
  %3013 = vst.msk [vmem:[%s24 + $0xe8] sm:$0xff] %vm375, %v2971
  %3014 = vst.msk [vmem:[%s24 + $0xf0] sm:$0xff] %vm375, %v2976
  %3015 = vst.msk [vmem:[%s24 + $0xf8] sm:$0xff] %vm375, %v2981
  // Predicated region
  $region98: #{af2gnn1_forward.1} parent=0 // pred_check
    _
  $region99: #{af2gnn1_forward.1} parent=0 // pred_check_branch
    %3017 = sbr.rel (0) target = $region101
  $region100: #{af2gnn1_forward.1} parent=0 // pred_region
    _
  $region101: #{af2gnn1_forward.1} parent=0 // pred_fallthru
    _
  // Predicated region
  $region102: #{af2gnn1_forward.1} parent=0 // pred_check
    _
  $region103: #{af2gnn1_forward.1} parent=0 // pred_check_branch
    %3019 = sbr.rel (0) target = $region105
  $region104: #{af2gnn1_forward.1} parent=0 // pred_region
    _
  $region105: #{af2gnn1_forward.1} parent=0 // pred_fallthru
    _

</llo_original>
